<compile_context>
chip_gen: v7x
topology: tpu7x:2x2x1
jax: 0.10.0
libtpu: 0.0.40
codegen_flags: <defaults>
</compile_context>

<pallas_src>
import functools

import jax
import jax.numpy as jnp
from jax import lax
from jax.experimental import pallas as pl
from jax.experimental.pallas import tpu as pltpu

EPS = 1e-5  # nn.BatchNorm1d default eps

# Row layout of the packed (VEC_ROWS, 512) f32 parameter-vector slab.
G1, BT1, G2, BT2, G3, BT3, G4, BT4, G6, BT6, G7, BT7, B8D = range(13)
VEC_ROWS = 16


def filternet_kernel(o_ref, a_ref,
                     w1_ref, w2_ref, w3_ref, w4_ref,
                     w56_ref, w6a_ref, w7_ref, w8d_ref,
                     vec_ref, out_ref, *, group_batch):
    m = o_ref.shape[0]               # rows in this grid step
    g = m // group_batch             # independent BN groups in this step

    def lin(x, w_ref):
        # bf16 x bf16 -> f32 accumulation on the MXU.  Linear biases are
        # omitted: every Linear feeding a training-mode BatchNorm has its
        # constant bias exactly cancelled by the batch-mean subtraction.
        return jnp.dot(x.astype(jnp.bfloat16), w_ref[...],
                       preferred_element_type=jnp.float32)

    def bn_relu(y, grow, brow):
        # Training-mode BatchNorm1d per *group*, folded to scale/shift:
        #   s = gamma * rsqrt(var + eps), t = beta - mean * s
        n = y.shape[-1]
        gamma = vec_ref[grow:grow + 1, 0:n]      # (1, n) static slab slice
        beta = vec_ref[brow:brow + 1, 0:n]
        yg = y.reshape(g, group_batch, n)
        mean = jnp.mean(yg, axis=1, keepdims=True)
        var = jnp.mean(yg * yg, axis=1, keepdims=True) - mean * mean
        var = jnp.maximum(var, 0.0)              # guard cancellation -> NaN
        s = gamma * lax.rsqrt(var + EPS)         # rsqrt on the EUP
        t = beta - mean * s
        return jnp.maximum(yg * s + t, 0.0).reshape(m, n)

    # ---- net_obs(o) ----
    h = bn_relu(lin(o_ref[...], w1_ref), G1, BT1)          # (m, 512)
    h = bn_relu(lin(h, w2_ref), G2, BT2)                    # (m, 512)
    h = bn_relu(lin(h, w3_ref), G3, BT3)                    # (m, 256)
    h = bn_relu(lin(h, w4_ref), G4, BT4)                    # (m, 128)

    # ---- cat((o_feat, a), 1); net[0] ----
    # net_obs's final Linear is fused into net[0]'s o-block: W56 = W5 @ W6o,
    # so the concat becomes two dots; their constant biases feed BN -> dropped.
    y6 = lin(h, w56_ref) + lin(a_ref[...], w6a_ref)          # (m, 128)
    h = bn_relu(y6, G6, BT6)
    h = bn_relu(lin(h, w7_ref), G7, BT7)                     # (m, 128)

    # ---- Softmax(dim=1) over 2 classes ----
    # Only the logit difference matters:
    #   d = h @ (W8[:,0]-W8[:,1]) + (b8[0]-b8[1]);  p0 = sigmoid(d).
    d = lin(h, w8d_ref) + vec_ref[B8D:B8D + 1, 0:1]          # (m, 1)
    p0 = 1.0 / (1.0 + jnp.exp(-d))                           # exp on the EUP
    out_ref[...] = jnp.concatenate([p0, 1.0 - p0], axis=1).astype(out_ref.dtype)


def init_params(key, obs_dim, action_dim):
    """Synthetic FilterNet parameters (shapes follow FilterNet.__init__).

    Returns (kernel_params, raw): kernel_params is the tuple fed to the Pallas
    kernel (bf16 weights in (in, out) layout, W5/W6o fused, final layer
    reduced to its difference column, small vectors packed into one slab);
    raw holds the plain f32 parameters for the pure-JAX reference.
    """
    lin_shapes = [
        ("1", obs_dim, 512), ("2", 512, 512), ("3", 512, 256), ("4", 256, 128),
        ("5", 128, 2 * action_dim),                               # net_obs tail
        ("6", 3 * action_dim, 128), ("7", 128, 128), ("8", 128, 2),  # net
    ]
    raw = {}
    keys = jax.random.split(key, 2 * len(lin_shapes))
    for i, (name, din, dout) in enumerate(lin_shapes):
        s = 1.0 / jnp.sqrt(jnp.float32(din))
        raw["w" + name] = jax.random.uniform(keys[2 * i], (din, dout),
                                             jnp.float32, -s, s)
        raw["b" + name] = jax.random.uniform(keys[2 * i + 1], (dout,),
                                             jnp.float32, -s, s)
    for name, n in (("1", 512), ("2", 512), ("3", 256),
                    ("4", 128), ("6", 128), ("7", 128)):
        raw["g" + name] = jnp.ones((n,), jnp.float32)    # BatchNorm1d init
        raw["bt" + name] = jnp.zeros((n,), jnp.float32)

    two_a = 2 * action_dim
    w6o = raw["w6"][:two_a]            # (2A, 128): acts on o_feat
    w6a = raw["w6"][two_a:]            # (A, 128):  acts on a
    # Fuse net_obs[-1] into net[0] (no nonlinearity in between); compose in
    # f32, cast to bf16 once to avoid double rounding.
    w56 = (raw["w5"] @ w6o).astype(jnp.bfloat16)                         # (128, 128)
    w8d = (raw["w8"][:, 0:1] - raw["w8"][:, 1:2]).astype(jnp.bfloat16)   # (128, 1)
    b8d = raw["b8"][0] - raw["b8"][1]

    vecs = jnp.zeros((VEC_ROWS, 512), jnp.float32)
    for row, val in ((G1, raw["g1"]), (BT1, raw["bt1"]),
                     (G2, raw["g2"]), (BT2, raw["bt2"]),
                     (G3, raw["g3"]), (BT3, raw["bt3"]),
                     (G4, raw["g4"]), (BT4, raw["bt4"]),
                     (G6, raw["g6"]), (BT6, raw["bt6"]),
                     (G7, raw["g7"]), (BT7, raw["bt7"])):
        vecs = vecs.at[row, : val.shape[0]].set(val)
    vecs = vecs.at[B8D, 0].set(b8d)

    bf16 = jnp.bfloat16
    kernel_params = (raw["w1"].astype(bf16), raw["w2"].astype(bf16),
                     raw["w3"].astype(bf16), raw["w4"].astype(bf16),
                     w56, w6a.astype(bf16), raw["w7"].astype(bf16), w8d, vecs)
    # TODO(synk): optional int8 (v5e/v6e) / fp8-e4m3 (v7x) quantization of the
    # 512x512 / 512x256 weights with per-channel scales folded into gamma.
    return kernel_params, raw


def filternet_forward(o, a, params, *, group_batch, groups_per_step):
    """o: (num_groups*group_batch, obs_dim), a: (same rows, action_dim).

    Each `group_batch`-row group is one independent FilterNet forward call
    (BatchNorm statistics computed per group).  `groups_per_step` groups are
    processed per grid step; raise it (e.g. 16 on v5e, 32 on v6e/v7x) to fill
    the MXU M dimension when running many groups.
    """
    total_rows, obs_dim = o.shape
    action_dim = a.shape[1]
    num_groups = total_rows // group_batch
    assert total_rows == num_groups * group_batch
    assert num_groups % groups_per_step == 0
    m = groups_per_step * group_batch
    grid = (num_groups // groups_per_step,)

    def rows(ncols):
        return pl.BlockSpec((m, ncols), lambda i: (i, 0))

    def pinned(x):
        # Whole array, same block index at every grid step -> DMA'd once and
        # kept VMEM-resident across the grid.
        return pl.BlockSpec(x.shape, lambda i: (0, 0))

    kernel = functools.partial(filternet_kernel, group_batch=group_batch)
    return pl.pallas_call(
        kernel,
        out_shape=jax.ShapeDtypeStruct((total_rows, 2), jnp.float32),
        grid=grid,
        in_specs=[rows(obs_dim), rows(action_dim)] + [pinned(p) for p in params],
        out_specs=rows(2),
        compiler_params=pltpu.CompilerParams(
            # "parallel": shards batch-group steps across v7x's 2 TensorCores;
            # on v5e/v6e (1 TC) it is simply a sequential loop.
            dimension_semantics=("parallel",),
            # ~0.95 MiB bf16 weights (+ double buffering) + activation tiles;
            # comfortably under v7x's 64 MiB/TC.
            vmem_limit_bytes=16 << 20,
        ),
    )(o, a, *params)


def filternet_reference(o, a, raw):
    """Pure-JAX f32 FilterNet forward (training-mode BN) for ONE group."""
    def bn_relu(y, name):
        mean = jnp.mean(y, axis=0, keepdims=True)
        var = jnp.mean((y - mean) ** 2, axis=0, keepdims=True)
        yn = (y - mean) * lax.rsqrt(var + EPS)
        return jnp.maximum(yn * raw["g" + name] + raw["bt" + name], 0.0)

    h = bn_relu(o @ raw["w1"] + raw["b1"], "1")
    h = bn_relu(h @ raw["w2"] + raw["b2"], "2")
    h = bn_relu(h @ raw["w3"] + raw["b3"], "3")
    h = bn_relu(h @ raw["w4"] + raw["b4"], "4")
    o_feat = h @ raw["w5"] + raw["b5"]
    x = jnp.concatenate([o_feat, a], axis=1)
    h = bn_relu(x @ raw["w6"] + raw["b6"], "6")
    h = bn_relu(h @ raw["w7"] + raw["b7"], "7")
    logits = h @ raw["w8"] + raw["b8"]
    return jax.nn.softmax(logits, axis=1)


if __name__ == "__main__":
    # Small synthetic config (args.obs_dim, args.action_dim).
    obs_dim, action_dim = 24, 6
    group_batch, groups_per_step, num_groups = 8, 2, 4
    total = num_groups * group_batch

    key = jax.random.PRNGKey(0)
    k_o, k_a, k_p = jax.random.split(key, 3)
    # Feed activations to the kernel already in bf16 (halves input DMA bytes).
    o = jax.random.normal(k_o, (total, obs_dim), jnp.float32).astype(jnp.bfloat16)
    a = jax.random.normal(k_a, (total, action_dim), jnp.float32).astype(jnp.bfloat16)

    params, raw = init_params(k_p, obs_dim, action_dim)

    out = filternet_forward(o, a, params,
                            group_batch=group_batch,
                            groups_per_step=groups_per_step)
    jax.block_until_ready(out)

    # Pure-JAX f32 reference, evaluated per independent BN group.
    of, af = o.astype(jnp.float32), a.astype(jnp.float32)
    ref = jnp.concatenate(
        [filternet_reference(of[i * group_batch:(i + 1) * group_batch],
                             af[i * group_batch:(i + 1) * group_batch], raw)
         for i in range(num_groups)], axis=0)

    assert out.shape == (total, 2)
    assert bool(jnp.all(jnp.isfinite(out)))
    # softmax rows sum to 1 and probabilities lie in [0, 1]
    assert bool(jnp.all(jnp.abs(jnp.sum(out, axis=1) - 1.0) < 1e-5))
    assert bool(jnp.all((out >= 0.0) & (out <= 1.0)))
    # matches the f32 reference up to bf16 weight rounding
    err = float(jnp.max(jnp.abs(out - ref)))
    assert err < 5e-2, err
    print("KERNEL_OK")
</pallas_src>

<mosaic_0001>
module attributes {stable_mosaic.version = 11 : i64} {
  func.func @filternet_kernel(%arg0: i32, %arg1: memref<16x24xbf16, #tpu.memory_space<vmem>>, %arg2: memref<16x6xbf16, #tpu.memory_space<vmem>>, %arg3: memref<24x512xbf16, #tpu.memory_space<vmem>>, %arg4: memref<512x512xbf16, #tpu.memory_space<vmem>>, %arg5: memref<512x256xbf16, #tpu.memory_space<vmem>>, %arg6: memref<256x128xbf16, #tpu.memory_space<vmem>>, %arg7: memref<128x128xbf16, #tpu.memory_space<vmem>>, %arg8: memref<6x128xbf16, #tpu.memory_space<vmem>>, %arg9: memref<128x128xbf16, #tpu.memory_space<vmem>>, %arg10: memref<128x1xbf16, #tpu.memory_space<vmem>>, %arg11: memref<16x512xf32, #tpu.memory_space<vmem>>, %arg12: memref<16x2xf32, #tpu.memory_space<vmem>>) attributes {dimension_semantics = [#tpu.dimension_semantics<parallel>], iteration_bounds = array<i64: 2>, scalar_prefetch = 0 : i64, scratch_operands = 0 : i64, tpu.core_type = #tpu.core_type<tc>, window_params = [{transform_indices = @transform_0, window_bounds = array<i64: 16, 24>}, {transform_indices = @transform_1, window_bounds = array<i64: 16, 6>}, {pipeline_mode = #tpu.pipeline_mode<synchronous>, transform_indices = @transform_2, window_bounds = array<i64: 24, 512>}, {pipeline_mode = #tpu.pipeline_mode<synchronous>, transform_indices = @transform_3, window_bounds = array<i64: 512, 512>}, {pipeline_mode = #tpu.pipeline_mode<synchronous>, transform_indices = @transform_4, window_bounds = array<i64: 512, 256>}, {pipeline_mode = #tpu.pipeline_mode<synchronous>, transform_indices = @transform_5, window_bounds = array<i64: 256, 128>}, {pipeline_mode = #tpu.pipeline_mode<synchronous>, transform_indices = @transform_6, window_bounds = array<i64: 128, 128>}, {pipeline_mode = #tpu.pipeline_mode<synchronous>, transform_indices = @transform_7, window_bounds = array<i64: 6, 128>}, {pipeline_mode = #tpu.pipeline_mode<synchronous>, transform_indices = @transform_8, window_bounds = array<i64: 128, 128>}, {pipeline_mode = #tpu.pipeline_mode<synchronous>, transform_indices = @transform_9, window_bounds = array<i64: 128, 1>}, {pipeline_mode = #tpu.pipeline_mode<synchronous>, transform_indices = @transform_10, window_bounds = array<i64: 16, 512>}, {transform_indices = @transform_11, window_bounds = array<i64: 16, 2>}]} {
    %c0 = arith.constant 0 : index
    %c0_0 = arith.constant 0 : index
    %0 = vector.load %arg1[%c0, %c0_0] : memref<16x24xbf16, #tpu.memory_space<vmem>>, vector<16x24xbf16>
    %c0_1 = arith.constant 0 : index
    %c0_2 = arith.constant 0 : index
    %1 = vector.load %arg3[%c0_1, %c0_2] : memref<24x512xbf16, #tpu.memory_space<vmem>>, vector<24x512xbf16>
    %cst = arith.constant dense<0.000000e+00> : vector<16x512xf32>
    %2 = tpu.matmul %0, %1, %cst {dimension_numbers = #tpu.dot_dimension_numbers<[1], [0], [0], [1], [0, 0, 1, 1], [], []>} : vector<16x24xbf16>, vector<24x512xbf16>, vector<16x512xf32> -> vector<16x512xf32>
    %c0_3 = arith.constant 0 : index
    %c0_4 = arith.constant 0 : index
    %3 = vector.load %arg11[%c0_3, %c0_4] : memref<16x512xf32, #tpu.memory_space<vmem>>, vector<1x512xf32>
    %c1 = arith.constant 1 : index
    %c0_5 = arith.constant 0 : index
    %4 = vector.load %arg11[%c1, %c0_5] : memref<16x512xf32, #tpu.memory_space<vmem>>, vector<1x512xf32>
    %5 = vector.shape_cast %2 : vector<16x512xf32> to vector<2x8x512xf32>
    %cst_6 = arith.constant dense<0.000000e+00> : vector<2x512xf32>
    %6 = vector.multi_reduction <add>, %5, %cst_6 [1] : vector<2x8x512xf32> to vector<2x512xf32>
    %7 = vector.shape_cast %6 : vector<2x512xf32> to vector<2x1x512xf32>
    %cst_7 = arith.constant 8.000000e+00 : f32
    %8 = vector.broadcast %cst_7 : f32 to vector<2x1x512xf32>
    %9 = arith.divf %7, %8 : vector<2x1x512xf32>
    %10 = arith.mulf %5, %5 : vector<2x8x512xf32>
    %cst_8 = arith.constant dense<0.000000e+00> : vector<2x512xf32>
    %11 = vector.multi_reduction <add>, %10, %cst_8 [1] : vector<2x8x512xf32> to vector<2x512xf32>
    %12 = vector.shape_cast %11 : vector<2x512xf32> to vector<2x1x512xf32>
    %cst_9 = arith.constant 8.000000e+00 : f32
    %13 = vector.broadcast %cst_9 : f32 to vector<2x1x512xf32>
    %14 = arith.divf %12, %13 : vector<2x1x512xf32>
    %15 = arith.mulf %9, %9 : vector<2x1x512xf32>
    %16 = arith.subf %14, %15 : vector<2x1x512xf32>
    %cst_10 = arith.constant 0.000000e+00 : f32
    %17 = vector.broadcast %cst_10 : f32 to vector<2x1x512xf32>
    %18 = arith.maximumf %16, %17 : vector<2x1x512xf32>
    %cst_11 = arith.constant 9.99999974E-6 : f32
    %19 = vector.broadcast %cst_11 : f32 to vector<2x1x512xf32>
    %20 = arith.addf %18, %19 : vector<2x1x512xf32>
    %21 = math.rsqrt %20 : vector<2x1x512xf32>
    %22 = vector.shape_cast %3 : vector<1x512xf32> to vector<1x1x512xf32>
    %23 = vector.broadcast %22 : vector<1x1x512xf32> to vector<2x1x512xf32>
    %24 = arith.mulf %23, %21 : vector<2x1x512xf32>
    %25 = arith.mulf %9, %24 : vector<2x1x512xf32>
    %26 = vector.shape_cast %4 : vector<1x512xf32> to vector<1x1x512xf32>
    %27 = vector.broadcast %26 : vector<1x1x512xf32> to vector<2x1x512xf32>
    %28 = arith.subf %27, %25 : vector<2x1x512xf32>
    %29 = vector.broadcast %24 : vector<2x1x512xf32> to vector<2x8x512xf32>
    %30 = arith.mulf %5, %29 : vector<2x8x512xf32>
    %31 = vector.broadcast %28 : vector<2x1x512xf32> to vector<2x8x512xf32>
    %32 = arith.addf %30, %31 : vector<2x8x512xf32>
    %cst_12 = arith.constant 0.000000e+00 : f32
    %33 = vector.broadcast %cst_12 : f32 to vector<2x8x512xf32>
    %34 = arith.maximumf %32, %33 : vector<2x8x512xf32>
    %35 = vector.shape_cast %34 : vector<2x8x512xf32> to vector<16x512xf32>
    %36 = arith.truncf %35 : vector<16x512xf32> to vector<16x512xbf16>
    %c0_13 = arith.constant 0 : index
    %c0_14 = arith.constant 0 : index
    %37 = vector.load %arg4[%c0_13, %c0_14] : memref<512x512xbf16, #tpu.memory_space<vmem>>, vector<512x512xbf16>
    %cst_15 = arith.constant dense<0.000000e+00> : vector<16x512xf32>
    %38 = tpu.matmul %36, %37, %cst_15 {dimension_numbers = #tpu.dot_dimension_numbers<[1], [0], [0], [1], [0, 0, 1, 1], [], []>} : vector<16x512xbf16>, vector<512x512xbf16>, vector<16x512xf32> -> vector<16x512xf32>
    %c2 = arith.constant 2 : index
    %c0_16 = arith.constant 0 : index
    %39 = vector.load %arg11[%c2, %c0_16] : memref<16x512xf32, #tpu.memory_space<vmem>>, vector<1x512xf32>
    %c3 = arith.constant 3 : index
    %c0_17 = arith.constant 0 : index
    %40 = vector.load %arg11[%c3, %c0_17] : memref<16x512xf32, #tpu.memory_space<vmem>>, vector<1x512xf32>
    %41 = vector.shape_cast %38 : vector<16x512xf32> to vector<2x8x512xf32>
    %cst_18 = arith.constant dense<0.000000e+00> : vector<2x512xf32>
    %42 = vector.multi_reduction <add>, %41, %cst_18 [1] : vector<2x8x512xf32> to vector<2x512xf32>
    %43 = vector.shape_cast %42 : vector<2x512xf32> to vector<2x1x512xf32>
    %cst_19 = arith.constant 8.000000e+00 : f32
    %44 = vector.broadcast %cst_19 : f32 to vector<2x1x512xf32>
    %45 = arith.divf %43, %44 : vector<2x1x512xf32>
    %46 = arith.mulf %41, %41 : vector<2x8x512xf32>
    %cst_20 = arith.constant dense<0.000000e+00> : vector<2x512xf32>
    %47 = vector.multi_reduction <add>, %46, %cst_20 [1] : vector<2x8x512xf32> to vector<2x512xf32>
    %48 = vector.shape_cast %47 : vector<2x512xf32> to vector<2x1x512xf32>
    %cst_21 = arith.constant 8.000000e+00 : f32
    %49 = vector.broadcast %cst_21 : f32 to vector<2x1x512xf32>
    %50 = arith.divf %48, %49 : vector<2x1x512xf32>
    %51 = arith.mulf %45, %45 : vector<2x1x512xf32>
    %52 = arith.subf %50, %51 : vector<2x1x512xf32>
    %cst_22 = arith.constant 0.000000e+00 : f32
    %53 = vector.broadcast %cst_22 : f32 to vector<2x1x512xf32>
    %54 = arith.maximumf %52, %53 : vector<2x1x512xf32>
    %cst_23 = arith.constant 9.99999974E-6 : f32
    %55 = vector.broadcast %cst_23 : f32 to vector<2x1x512xf32>
    %56 = arith.addf %54, %55 : vector<2x1x512xf32>
    %57 = math.rsqrt %56 : vector<2x1x512xf32>
    %58 = vector.shape_cast %39 : vector<1x512xf32> to vector<1x1x512xf32>
    %59 = vector.broadcast %58 : vector<1x1x512xf32> to vector<2x1x512xf32>
    %60 = arith.mulf %59, %57 : vector<2x1x512xf32>
    %61 = arith.mulf %45, %60 : vector<2x1x512xf32>
    %62 = vector.shape_cast %40 : vector<1x512xf32> to vector<1x1x512xf32>
    %63 = vector.broadcast %62 : vector<1x1x512xf32> to vector<2x1x512xf32>
    %64 = arith.subf %63, %61 : vector<2x1x512xf32>
    %65 = vector.broadcast %60 : vector<2x1x512xf32> to vector<2x8x512xf32>
    %66 = arith.mulf %41, %65 : vector<2x8x512xf32>
    %67 = vector.broadcast %64 : vector<2x1x512xf32> to vector<2x8x512xf32>
    %68 = arith.addf %66, %67 : vector<2x8x512xf32>
    %cst_24 = arith.constant 0.000000e+00 : f32
    %69 = vector.broadcast %cst_24 : f32 to vector<2x8x512xf32>
    %70 = arith.maximumf %68, %69 : vector<2x8x512xf32>
    %71 = vector.shape_cast %70 : vector<2x8x512xf32> to vector<16x512xf32>
    %72 = arith.truncf %71 : vector<16x512xf32> to vector<16x512xbf16>
    %c0_25 = arith.constant 0 : index
    %c0_26 = arith.constant 0 : index
    %73 = vector.load %arg5[%c0_25, %c0_26] : memref<512x256xbf16, #tpu.memory_space<vmem>>, vector<512x256xbf16>
    %cst_27 = arith.constant dense<0.000000e+00> : vector<16x256xf32>
    %74 = tpu.matmul %72, %73, %cst_27 {dimension_numbers = #tpu.dot_dimension_numbers<[1], [0], [0], [1], [0, 0, 1, 1], [], []>} : vector<16x512xbf16>, vector<512x256xbf16>, vector<16x256xf32> -> vector<16x256xf32>
    %c4 = arith.constant 4 : index
    %c0_28 = arith.constant 0 : index
    %75 = vector.load %arg11[%c4, %c0_28] : memref<16x512xf32, #tpu.memory_space<vmem>>, vector<1x256xf32>
    %c5 = arith.constant 5 : index
    %c0_29 = arith.constant 0 : index
    %76 = vector.load %arg11[%c5, %c0_29] : memref<16x512xf32, #tpu.memory_space<vmem>>, vector<1x256xf32>
    %77 = vector.shape_cast %74 : vector<16x256xf32> to vector<2x8x256xf32>
    %cst_30 = arith.constant dense<0.000000e+00> : vector<2x256xf32>
    %78 = vector.multi_reduction <add>, %77, %cst_30 [1] : vector<2x8x256xf32> to vector<2x256xf32>
    %79 = vector.shape_cast %78 : vector<2x256xf32> to vector<2x1x256xf32>
    %cst_31 = arith.constant 8.000000e+00 : f32
    %80 = vector.broadcast %cst_31 : f32 to vector<2x1x256xf32>
    %81 = arith.divf %79, %80 : vector<2x1x256xf32>
    %82 = arith.mulf %77, %77 : vector<2x8x256xf32>
    %cst_32 = arith.constant dense<0.000000e+00> : vector<2x256xf32>
    %83 = vector.multi_reduction <add>, %82, %cst_32 [1] : vector<2x8x256xf32> to vector<2x256xf32>
    %84 = vector.shape_cast %83 : vector<2x256xf32> to vector<2x1x256xf32>
    %cst_33 = arith.constant 8.000000e+00 : f32
    %85 = vector.broadcast %cst_33 : f32 to vector<2x1x256xf32>
    %86 = arith.divf %84, %85 : vector<2x1x256xf32>
    %87 = arith.mulf %81, %81 : vector<2x1x256xf32>
    %88 = arith.subf %86, %87 : vector<2x1x256xf32>
    %cst_34 = arith.constant 0.000000e+00 : f32
    %89 = vector.broadcast %cst_34 : f32 to vector<2x1x256xf32>
    %90 = arith.maximumf %88, %89 : vector<2x1x256xf32>
    %cst_35 = arith.constant 9.99999974E-6 : f32
    %91 = vector.broadcast %cst_35 : f32 to vector<2x1x256xf32>
    %92 = arith.addf %90, %91 : vector<2x1x256xf32>
    %93 = math.rsqrt %92 : vector<2x1x256xf32>
    %94 = vector.shape_cast %75 : vector<1x256xf32> to vector<1x1x256xf32>
    %95 = vector.broadcast %94 : vector<1x1x256xf32> to vector<2x1x256xf32>
    %96 = arith.mulf %95, %93 : vector<2x1x256xf32>
    %97 = arith.mulf %81, %96 : vector<2x1x256xf32>
    %98 = vector.shape_cast %76 : vector<1x256xf32> to vector<1x1x256xf32>
    %99 = vector.broadcast %98 : vector<1x1x256xf32> to vector<2x1x256xf32>
    %100 = arith.subf %99, %97 : vector<2x1x256xf32>
    %101 = vector.broadcast %96 : vector<2x1x256xf32> to vector<2x8x256xf32>
    %102 = arith.mulf %77, %101 : vector<2x8x256xf32>
    %103 = vector.broadcast %100 : vector<2x1x256xf32> to vector<2x8x256xf32>
    %104 = arith.addf %102, %103 : vector<2x8x256xf32>
    %cst_36 = arith.constant 0.000000e+00 : f32
    %105 = vector.broadcast %cst_36 : f32 to vector<2x8x256xf32>
    %106 = arith.maximumf %104, %105 : vector<2x8x256xf32>
    %107 = vector.shape_cast %106 : vector<2x8x256xf32> to vector<16x256xf32>
    %108 = arith.truncf %107 : vector<16x256xf32> to vector<16x256xbf16>
    %c0_37 = arith.constant 0 : index
    %c0_38 = arith.constant 0 : index
    %109 = vector.load %arg6[%c0_37, %c0_38] : memref<256x128xbf16, #tpu.memory_space<vmem>>, vector<256x128xbf16>
    %cst_39 = arith.constant dense<0.000000e+00> : vector<16x128xf32>
    %110 = tpu.matmul %108, %109, %cst_39 {dimension_numbers = #tpu.dot_dimension_numbers<[1], [0], [0], [1], [0, 0, 1, 1], [], []>} : vector<16x256xbf16>, vector<256x128xbf16>, vector<16x128xf32> -> vector<16x128xf32>
    %c6 = arith.constant 6 : index
    %c0_40 = arith.constant 0 : index
    %111 = vector.load %arg11[%c6, %c0_40] : memref<16x512xf32, #tpu.memory_space<vmem>>, vector<1x128xf32>
    %c7 = arith.constant 7 : index
    %c0_41 = arith.constant 0 : index
    %112 = vector.load %arg11[%c7, %c0_41] : memref<16x512xf32, #tpu.memory_space<vmem>>, vector<1x128xf32>
    %113 = vector.shape_cast %110 : vector<16x128xf32> to vector<2x8x128xf32>
    %cst_42 = arith.constant dense<0.000000e+00> : vector<2x128xf32>
    %114 = vector.multi_reduction <add>, %113, %cst_42 [1] : vector<2x8x128xf32> to vector<2x128xf32>
    %115 = vector.shape_cast %114 : vector<2x128xf32> to vector<2x1x128xf32>
    %cst_43 = arith.constant 8.000000e+00 : f32
    %116 = vector.broadcast %cst_43 : f32 to vector<2x1x128xf32>
    %117 = arith.divf %115, %116 : vector<2x1x128xf32>
    %118 = arith.mulf %113, %113 : vector<2x8x128xf32>
    %cst_44 = arith.constant dense<0.000000e+00> : vector<2x128xf32>
    %119 = vector.multi_reduction <add>, %118, %cst_44 [1] : vector<2x8x128xf32> to vector<2x128xf32>
    %120 = vector.shape_cast %119 : vector<2x128xf32> to vector<2x1x128xf32>
    %cst_45 = arith.constant 8.000000e+00 : f32
    %121 = vector.broadcast %cst_45 : f32 to vector<2x1x128xf32>
    %122 = arith.divf %120, %121 : vector<2x1x128xf32>
    %123 = arith.mulf %117, %117 : vector<2x1x128xf32>
    %124 = arith.subf %122, %123 : vector<2x1x128xf32>
    %cst_46 = arith.constant 0.000000e+00 : f32
    %125 = vector.broadcast %cst_46 : f32 to vector<2x1x128xf32>
    %126 = arith.maximumf %124, %125 : vector<2x1x128xf32>
    %cst_47 = arith.constant 9.99999974E-6 : f32
    %127 = vector.broadcast %cst_47 : f32 to vector<2x1x128xf32>
    %128 = arith.addf %126, %127 : vector<2x1x128xf32>
    %129 = math.rsqrt %128 : vector<2x1x128xf32>
    %130 = vector.shape_cast %111 : vector<1x128xf32> to vector<1x1x128xf32>
    %131 = vector.broadcast %130 : vector<1x1x128xf32> to vector<2x1x128xf32>
    %132 = arith.mulf %131, %129 : vector<2x1x128xf32>
    %133 = arith.mulf %117, %132 : vector<2x1x128xf32>
    %134 = vector.shape_cast %112 : vector<1x128xf32> to vector<1x1x128xf32>
    %135 = vector.broadcast %134 : vector<1x1x128xf32> to vector<2x1x128xf32>
    %136 = arith.subf %135, %133 : vector<2x1x128xf32>
    %137 = vector.broadcast %132 : vector<2x1x128xf32> to vector<2x8x128xf32>
    %138 = arith.mulf %113, %137 : vector<2x8x128xf32>
    %139 = vector.broadcast %136 : vector<2x1x128xf32> to vector<2x8x128xf32>
    %140 = arith.addf %138, %139 : vector<2x8x128xf32>
    %cst_48 = arith.constant 0.000000e+00 : f32
    %141 = vector.broadcast %cst_48 : f32 to vector<2x8x128xf32>
    %142 = arith.maximumf %140, %141 : vector<2x8x128xf32>
    %143 = vector.shape_cast %142 : vector<2x8x128xf32> to vector<16x128xf32>
    %144 = arith.truncf %143 : vector<16x128xf32> to vector<16x128xbf16>
    %c0_49 = arith.constant 0 : index
    %c0_50 = arith.constant 0 : index
    %145 = vector.load %arg7[%c0_49, %c0_50] : memref<128x128xbf16, #tpu.memory_space<vmem>>, vector<128x128xbf16>
    %cst_51 = arith.constant dense<0.000000e+00> : vector<16x128xf32>
    %146 = tpu.matmul %144, %145, %cst_51 {dimension_numbers = #tpu.dot_dimension_numbers<[1], [0], [0], [1], [0, 0, 1, 1], [], []>} : vector<16x128xbf16>, vector<128x128xbf16>, vector<16x128xf32> -> vector<16x128xf32>
    %c0_52 = arith.constant 0 : index
    %c0_53 = arith.constant 0 : index
    %147 = vector.load %arg2[%c0_52, %c0_53] : memref<16x6xbf16, #tpu.memory_space<vmem>>, vector<16x6xbf16>
    %c0_54 = arith.constant 0 : index
    %c0_55 = arith.constant 0 : index
    %148 = vector.load %arg8[%c0_54, %c0_55] : memref<6x128xbf16, #tpu.memory_space<vmem>>, vector<6x128xbf16>
    %cst_56 = arith.constant dense<0.000000e+00> : vector<16x128xf32>
    %149 = tpu.matmul %147, %148, %cst_56 {dimension_numbers = #tpu.dot_dimension_numbers<[1], [0], [0], [1], [0, 0, 1, 1], [], []>} : vector<16x6xbf16>, vector<6x128xbf16>, vector<16x128xf32> -> vector<16x128xf32>
    %150 = arith.addf %146, %149 : vector<16x128xf32>
    %c8 = arith.constant 8 : index
    %c0_57 = arith.constant 0 : index
    %151 = vector.load %arg11[%c8, %c0_57] : memref<16x512xf32, #tpu.memory_space<vmem>>, vector<1x128xf32>
    %c9 = arith.constant 9 : index
    %c0_58 = arith.constant 0 : index
    %152 = vector.load %arg11[%c9, %c0_58] : memref<16x512xf32, #tpu.memory_space<vmem>>, vector<1x128xf32>
    %153 = vector.shape_cast %150 : vector<16x128xf32> to vector<2x8x128xf32>
    %cst_59 = arith.constant dense<0.000000e+00> : vector<2x128xf32>
    %154 = vector.multi_reduction <add>, %153, %cst_59 [1] : vector<2x8x128xf32> to vector<2x128xf32>
    %155 = vector.shape_cast %154 : vector<2x128xf32> to vector<2x1x128xf32>
    %cst_60 = arith.constant 8.000000e+00 : f32
    %156 = vector.broadcast %cst_60 : f32 to vector<2x1x128xf32>
    %157 = arith.divf %155, %156 : vector<2x1x128xf32>
    %158 = arith.mulf %153, %153 : vector<2x8x128xf32>
    %cst_61 = arith.constant dense<0.000000e+00> : vector<2x128xf32>
    %159 = vector.multi_reduction <add>, %158, %cst_61 [1] : vector<2x8x128xf32> to vector<2x128xf32>
    %160 = vector.shape_cast %159 : vector<2x128xf32> to vector<2x1x128xf32>
    %cst_62 = arith.constant 8.000000e+00 : f32
    %161 = vector.broadcast %cst_62 : f32 to vector<2x1x128xf32>
    %162 = arith.divf %160, %161 : vector<2x1x128xf32>
    %163 = arith.mulf %157, %157 : vector<2x1x128xf32>
    %164 = arith.subf %162, %163 : vector<2x1x128xf32>
    %cst_63 = arith.constant 0.000000e+00 : f32
    %165 = vector.broadcast %cst_63 : f32 to vector<2x1x128xf32>
    %166 = arith.maximumf %164, %165 : vector<2x1x128xf32>
    %cst_64 = arith.constant 9.99999974E-6 : f32
    %167 = vector.broadcast %cst_64 : f32 to vector<2x1x128xf32>
    %168 = arith.addf %166, %167 : vector<2x1x128xf32>
    %169 = math.rsqrt %168 : vector<2x1x128xf32>
    %170 = vector.shape_cast %151 : vector<1x128xf32> to vector<1x1x128xf32>
    %171 = vector.broadcast %170 : vector<1x1x128xf32> to vector<2x1x128xf32>
    %172 = arith.mulf %171, %169 : vector<2x1x128xf32>
    %173 = arith.mulf %157, %172 : vector<2x1x128xf32>
    %174 = vector.shape_cast %152 : vector<1x128xf32> to vector<1x1x128xf32>
    %175 = vector.broadcast %174 : vector<1x1x128xf32> to vector<2x1x128xf32>
    %176 = arith.subf %175, %173 : vector<2x1x128xf32>
    %177 = vector.broadcast %172 : vector<2x1x128xf32> to vector<2x8x128xf32>
    %178 = arith.mulf %153, %177 : vector<2x8x128xf32>
    %179 = vector.broadcast %176 : vector<2x1x128xf32> to vector<2x8x128xf32>
    %180 = arith.addf %178, %179 : vector<2x8x128xf32>
    %cst_65 = arith.constant 0.000000e+00 : f32
    %181 = vector.broadcast %cst_65 : f32 to vector<2x8x128xf32>
    %182 = arith.maximumf %180, %181 : vector<2x8x128xf32>
    %183 = vector.shape_cast %182 : vector<2x8x128xf32> to vector<16x128xf32>
    %184 = arith.truncf %183 : vector<16x128xf32> to vector<16x128xbf16>
    %c0_66 = arith.constant 0 : index
    %c0_67 = arith.constant 0 : index
    %185 = vector.load %arg9[%c0_66, %c0_67] : memref<128x128xbf16, #tpu.memory_space<vmem>>, vector<128x128xbf16>
    %cst_68 = arith.constant dense<0.000000e+00> : vector<16x128xf32>
    %186 = tpu.matmul %184, %185, %cst_68 {dimension_numbers = #tpu.dot_dimension_numbers<[1], [0], [0], [1], [0, 0, 1, 1], [], []>} : vector<16x128xbf16>, vector<128x128xbf16>, vector<16x128xf32> -> vector<16x128xf32>
    %c10 = arith.constant 10 : index
    %c0_69 = arith.constant 0 : index
    %187 = vector.load %arg11[%c10, %c0_69] : memref<16x512xf32, #tpu.memory_space<vmem>>, vector<1x128xf32>
    %c11 = arith.constant 11 : index
    %c0_70 = arith.constant 0 : index
    %188 = vector.load %arg11[%c11, %c0_70] : memref<16x512xf32, #tpu.memory_space<vmem>>, vector<1x128xf32>
    %189 = vector.shape_cast %186 : vector<16x128xf32> to vector<2x8x128xf32>
    %cst_71 = arith.constant dense<0.000000e+00> : vector<2x128xf32>
    %190 = vector.multi_reduction <add>, %189, %cst_71 [1] : vector<2x8x128xf32> to vector<2x128xf32>
    %191 = vector.shape_cast %190 : vector<2x128xf32> to vector<2x1x128xf32>
    %cst_72 = arith.constant 8.000000e+00 : f32
    %192 = vector.broadcast %cst_72 : f32 to vector<2x1x128xf32>
    %193 = arith.divf %191, %192 : vector<2x1x128xf32>
    %194 = arith.mulf %189, %189 : vector<2x8x128xf32>
    %cst_73 = arith.constant dense<0.000000e+00> : vector<2x128xf32>
    %195 = vector.multi_reduction <add>, %194, %cst_73 [1] : vector<2x8x128xf32> to vector<2x128xf32>
    %196 = vector.shape_cast %195 : vector<2x128xf32> to vector<2x1x128xf32>
    %cst_74 = arith.constant 8.000000e+00 : f32
    %197 = vector.broadcast %cst_74 : f32 to vector<2x1x128xf32>
    %198 = arith.divf %196, %197 : vector<2x1x128xf32>
    %199 = arith.mulf %193, %193 : vector<2x1x128xf32>
    %200 = arith.subf %198, %199 : vector<2x1x128xf32>
    %cst_75 = arith.constant 0.000000e+00 : f32
    %201 = vector.broadcast %cst_75 : f32 to vector<2x1x128xf32>
    %202 = arith.maximumf %200, %201 : vector<2x1x128xf32>
    %cst_76 = arith.constant 9.99999974E-6 : f32
    %203 = vector.broadcast %cst_76 : f32 to vector<2x1x128xf32>
    %204 = arith.addf %202, %203 : vector<2x1x128xf32>
    %205 = math.rsqrt %204 : vector<2x1x128xf32>
    %206 = vector.shape_cast %187 : vector<1x128xf32> to vector<1x1x128xf32>
    %207 = vector.broadcast %206 : vector<1x1x128xf32> to vector<2x1x128xf32>
    %208 = arith.mulf %207, %205 : vector<2x1x128xf32>
    %209 = arith.mulf %193, %208 : vector<2x1x128xf32>
    %210 = vector.shape_cast %188 : vector<1x128xf32> to vector<1x1x128xf32>
    %211 = vector.broadcast %210 : vector<1x1x128xf32> to vector<2x1x128xf32>
    %212 = arith.subf %211, %209 : vector<2x1x128xf32>
    %213 = vector.broadcast %208 : vector<2x1x128xf32> to vector<2x8x128xf32>
    %214 = arith.mulf %189, %213 : vector<2x8x128xf32>
    %215 = vector.broadcast %212 : vector<2x1x128xf32> to vector<2x8x128xf32>
    %216 = arith.addf %214, %215 : vector<2x8x128xf32>
    %cst_77 = arith.constant 0.000000e+00 : f32
    %217 = vector.broadcast %cst_77 : f32 to vector<2x8x128xf32>
    %218 = arith.maximumf %216, %217 : vector<2x8x128xf32>
    %219 = vector.shape_cast %218 : vector<2x8x128xf32> to vector<16x128xf32>
    %220 = arith.truncf %219 : vector<16x128xf32> to vector<16x128xbf16>
    %c0_78 = arith.constant 0 : index
    %c0_79 = arith.constant 0 : index
    %221 = vector.load %arg10[%c0_78, %c0_79] : memref<128x1xbf16, #tpu.memory_space<vmem>>, vector<128x1xbf16>
    %cst_80 = arith.constant dense<0.000000e+00> : vector<16x1xf32>
    %222 = tpu.matmul %220, %221, %cst_80 {dimension_numbers = #tpu.dot_dimension_numbers<[1], [0], [0], [1], [0, 0, 1, 1], [], []>} : vector<16x128xbf16>, vector<128x1xbf16>, vector<16x1xf32> -> vector<16x1xf32>
    %c12 = arith.constant 12 : index
    %c0_81 = arith.constant 0 : index
    %223 = vector.load %arg11[%c12, %c0_81] : memref<16x512xf32, #tpu.memory_space<vmem>>, vector<1x1xf32>
    %224 = vector.broadcast %223 : vector<1x1xf32> to vector<16x1xf32>
    %225 = arith.addf %222, %224 : vector<16x1xf32>
    %cst_82 = arith.constant 0.000000e+00 : f32
    %226 = vector.broadcast %cst_82 : f32 to vector<16x1xf32>
    %227 = arith.subf %226, %225 : vector<16x1xf32>
    %228 = math.exp %227 : vector<16x1xf32>
    %cst_83 = arith.constant 1.000000e+00 : f32
    %229 = vector.broadcast %cst_83 : f32 to vector<16x1xf32>
    %230 = arith.addf %229, %228 : vector<16x1xf32>
    %cst_84 = arith.constant 1.000000e+00 : f32
    %231 = vector.broadcast %cst_84 : f32 to vector<16x1xf32>
    %232 = arith.divf %231, %230 : vector<16x1xf32>
    %cst_85 = arith.constant 1.000000e+00 : f32
    %233 = vector.broadcast %cst_85 : f32 to vector<16x1xf32>
    %234 = arith.subf %233, %232 : vector<16x1xf32>
    %235 = tpu.concatenate %232, %234 in 1 : vector<16x1xf32>, vector<16x1xf32> -> vector<16x2xf32>
    %c0_86 = arith.constant 0 : index
    %c0_87 = arith.constant 0 : index
    %236 = vector.load %arg12[%c0_86, %c0_87] : memref<16x2xf32, #tpu.memory_space<vmem>>, vector<16x2xf32>
    tpu.vector_store %arg12[%c0_86, %c0_87], %235 {strides = array<i32>} : memref<16x2xf32, #tpu.memory_space<vmem>>, vector<16x2xf32>,
    return
  }
  func.func @transform_0(%arg0: i32) -> (i32, i32) {
    %c0_i32 = arith.constant 0 : i32
    %c0_i32_0 = arith.constant 0 : i32
    return %arg0, %c0_i32 : i32, i32
  }
  func.func @transform_1(%arg0: i32) -> (i32, i32) {
    %c0_i32 = arith.constant 0 : i32
    %c0_i32_0 = arith.constant 0 : i32
    return %arg0, %c0_i32 : i32, i32
  }
  func.func @transform_2(%arg0: i32) -> (i32, i32) {
    %c0_i32 = arith.constant 0 : i32
    %c0_i32_0 = arith.constant 0 : i32
    %c0_i32_1 = arith.constant 0 : i32
    return %c0_i32, %c0_i32_0 : i32, i32
  }
  func.func @transform_3(%arg0: i32) -> (i32, i32) {
    %c0_i32 = arith.constant 0 : i32
    %c0_i32_0 = arith.constant 0 : i32
    %c0_i32_1 = arith.constant 0 : i32
    return %c0_i32, %c0_i32_0 : i32, i32
  }
  func.func @transform_4(%arg0: i32) -> (i32, i32) {
    %c0_i32 = arith.constant 0 : i32
    %c0_i32_0 = arith.constant 0 : i32
    %c0_i32_1 = arith.constant 0 : i32
    return %c0_i32, %c0_i32_0 : i32, i32
  }
  func.func @transform_5(%arg0: i32) -> (i32, i32) {
    %c0_i32 = arith.constant 0 : i32
    %c0_i32_0 = arith.constant 0 : i32
    %c0_i32_1 = arith.constant 0 : i32
    return %c0_i32, %c0_i32_0 : i32, i32
  }
  func.func @transform_6(%arg0: i32) -> (i32, i32) {
    %c0_i32 = arith.constant 0 : i32
    %c0_i32_0 = arith.constant 0 : i32
    %c0_i32_1 = arith.constant 0 : i32
    return %c0_i32, %c0_i32_0 : i32, i32
  }
  func.func @transform_7(%arg0: i32) -> (i32, i32) {
    %c0_i32 = arith.constant 0 : i32
    %c0_i32_0 = arith.constant 0 : i32
    %c0_i32_1 = arith.constant 0 : i32
    return %c0_i32, %c0_i32_0 : i32, i32
  }
  func.func @transform_8(%arg0: i32) -> (i32, i32) {
    %c0_i32 = arith.constant 0 : i32
    %c0_i32_0 = arith.constant 0 : i32
    %c0_i32_1 = arith.constant 0 : i32
    return %c0_i32, %c0_i32_0 : i32, i32
  }
  func.func @transform_9(%arg0: i32) -> (i32, i32) {
    %c0_i32 = arith.constant 0 : i32
    %c0_i32_0 = arith.constant 0 : i32
    %c0_i32_1 = arith.constant 0 : i32
    return %c0_i32, %c0_i32_0 : i32, i32
  }
  func.func @transform_10(%arg0: i32) -> (i32, i32) {
    %c0_i32 = arith.constant 0 : i32
    %c0_i32_0 = arith.constant 0 : i32
    %c0_i32_1 = arith.constant 0 : i32
    return %c0_i32, %c0_i32_0 : i32, i32
  }
  func.func @transform_11(%arg0: i32) -> (i32, i32) {
    %c0_i32 = arith.constant 0 : i32
    %c0_i32_0 = arith.constant 0 : i32
    return %arg0, %c0_i32 : i32, i32
  }
}

</mosaic_0001>

<llo_original>
// kernel: tpu_custom_call.1
$region0: #{tpu_custom_call.1}
  #allocation0 [shape = 'u32[]', space=smem, size = 0x4, offset = 0x4, fixed_abs, tag = 'smem constant byte address 0x4 - core index']
  #allocation1 [shape = 'u32[144,128]{1,0:T(1,128)}', space=vmem, size = 0x12000, scoped, tag = 'internal scratch']
  %s0 = inlined_call_operand.vmem [shape: bf16[32,24], index: 0, kind: input, shape index: {}]
  %s1 = inlined_call_operand.vmem [shape: bf16[32,6], index: 1, kind: input, shape index: {}]
  %s2 = inlined_call_operand.hbm [shape: bf16[24,512], index: 2, kind: input, shape index: {}]
  %s3 = inlined_call_operand.hbm [shape: bf16[512,512], index: 3, kind: input, shape index: {}]
  %s4 = inlined_call_operand.hbm [shape: bf16[512,256], index: 4, kind: input, shape index: {}]
  %s5 = inlined_call_operand.vmem [shape: bf16[256,128], index: 5, kind: input, shape index: {}]
  %s6 = inlined_call_operand.hbm [shape: bf16[128,128], index: 6, kind: input, shape index: {}]
  %s7 = inlined_call_operand.vmem [shape: bf16[6,128], index: 7, kind: input, shape index: {}]
  %s8 = inlined_call_operand.hbm [shape: bf16[128,128], index: 8, kind: input, shape index: {}]
  %s9 = inlined_call_operand.vmem [shape: bf16[128,1], index: 9, kind: input, shape index: {}]
  %s10 = inlined_call_operand.hbm [shape: f32[16,512], index: 10, kind: input, shape index: {}]
  %s11 = inlined_call_operand.vmem [shape: f32[32,2], index: 11, kind: output, shape index: {}]
  %s12 = sld [smem:[#allocation0]]
  $region101: #{tpu_custom_call.1} parent=0
    _
  %s14 = ssub.s32 1, %s12
  %s15 = scalar_select 0, %s14, %s12
  $region1: #{tpu_custom_call.1} parent=0
    #allocation2 [shape = 'u8[24576]{0}', space=vmem, size = 0x6000, scoped, tag = 'input window, operand 2, single buffered']
    #allocation3 [shape = 's32[2]{0}', space=sflag, size = 0x8, scoped, tag = 'scoped memory for tpu_custom_call.1']
    #allocation4 [shape = 'u8[524288]{0}', space=vmem, size = 0x80000, scoped, tag = 'input window, operand 3, single buffered']
    #allocation5 [shape = 's32[1]{0}', space=sflag, size = 0x4, scoped, tag = 'scoped memory for tpu_custom_call.1']
    #allocation6 [shape = 'u8[262144]{0}', space=vmem, size = 0x40000, scoped, tag = 'input window, operand 4, single buffered']
    #allocation7 [shape = 'u8[32768]{0}', space=vmem, size = 0x8000, scoped, tag = 'input window, operand 6, single buffered']
    #allocation8 [shape = 's32[1]{0}', space=sflag, size = 0x4, scoped, tag = 'scoped memory for tpu_custom_call.1']
    #allocation9 [shape = 'u8[32768]{0}', space=vmem, size = 0x8000, scoped, tag = 'input window, operand 8, single buffered']
    #allocation10 [shape = 'u8[32768]{0}', space=vmem, size = 0x8000, scoped, tag = 'input window, operand 10, single buffered']
    #allocation11 [shape = 's32[1]{0}', space=sflag, size = 0x4, scoped, tag = 'scoped memory for tpu_custom_call.1']
    %16 = vsyncpa [#allocation3], 0
    %17 = vsyncpa [#allocation5], 0
    %18 = vsyncpa [#allocation8], 0
    %19 = vsyncpa [#allocation11], 0
    loop: start=0, step=1, limit=4
    $region2: #{tpu_custom_call.1} parent=1 // loop_pre_header
      _
    $region3: #{tpu_custom_call.1} parent=1 // loop_header
      %s21 = sphi 0, %s25
      %p22 = scmp.ge.s32.totalorder %s21, 4
      %s31 = sphi 0, %s33
      %s34 = sphi 0, %s31
      %s35 = sphi 0, %s34
      %s51 = sphi 0, %s35
      %s57 = sphi 0, %s59
      %s60 = sphi 0, %s57
      %s61 = sphi 0, %s60
      %s77 = sphi 0, %s61
      %s81 = sphi 0, %s81
      %s83 = sphi 0, %s81
      %s84 = sphi 0, %s83
      %s98 = sphi 0, %s84
      %s102 = sphi 0, %s102
      %s104 = sphi 0, %s102
      %s105 = sphi 0, %s104
      %s119 = sphi 0, %s105
      %s123 = sphi 0, %s123
      %s125 = sphi 0, %s123
      %s126 = sphi 0, %s125
      %s140 = sphi 0, %s126
      %s144 = sphi 0, %s144
      %s146 = sphi 0, %s144
      %s147 = sphi 0, %s146
      %s161 = sphi 0, %s147
      %s165 = sphi 0, %s165
      %s167 = sphi 0, %s165
      %s168 = sphi 0, %s167
      %s182 = sphi 0, %s168
      %s186 = sphi 0, %s186
      %s188 = sphi 0, %s186
      %s189 = sphi 0, %s188
      %s203 = sphi 0, %s189
      %s207 = sphi 0, %s207
      %s209 = sphi 0, %s207
      %s210 = sphi 0, %s209
      %s224 = sphi 0, %s210
      %s228 = sphi 0, %s228
      %s230 = sphi 0, %s228
      %s231 = sphi 0, %s230
      %s245 = sphi 0, %s231
      %s249 = sphi 0, %s249
      %s251 = sphi 0, %s249
      %s252 = sphi 0, %s251
      %s266 = sphi 0, %s252
      %s272 = sphi 0, %s274
      %s275 = sphi 0, %s272
      %s276 = sphi 0, %s275
      %s292 = sphi 0, %s276
    $region4: #{tpu_custom_call.1} parent=1 // loop_header_branch
      %24 = sbr.rel (%p22) target = $region8
    $region5: #{tpu_custom_call.1} parent=1 // loop_body
      %s26 = ssub.s32 %s21, 1
      %s27 = ssub.s32 %s21, 2
      %s28 = sadd.s32 %s21, 1
      %s29 = ssub.s32 %s21, %s28
      %p30 = scmp.eq.s32.totalorder %s29, 0
      %s32 = sadd.s32 %s31, 1
      %s33 = scalar_select %p30, %s31, %s32
      %p36 = pneg %p30
      %p37 = scmp.eq.s32.totalorder %s21, 1
      %p38 = por %p36, %p37
      %p39 = scmp.ne.s32.totalorder %s31, %s34
      %p40 = scmp.eq.s32.totalorder %s21, 0
      %p41 = por %p39, %p40
      %p42 = scmp.ne.s32.totalorder %s31, %s34
      %p43 = scmp.eq.s32.totalorder %s26, 1
      %p44 = por %p42, %p43
      %p45 = scmp.ne.s32.totalorder %s34, %s35
      %p46 = scmp.eq.s32.totalorder %s26, 0
      %p47 = por %p45, %p46
      %p48 = scmp.ne.s32.totalorder %s34, %s35
      %p49 = scmp.eq.s32.totalorder %s27, 1
      %p50 = por %p48, %p49
      %p52 = scmp.ne.s32.totalorder %s35, %s51
      %p53 = scmp.eq.s32.totalorder %s27, 0
      %p54 = por %p52, %p53
      %s55 = ssub.s32 %s21, %s28
      %p56 = scmp.eq.s32.totalorder %s55, 0
      %s58 = sadd.s32 %s57, 1
      %s59 = scalar_select %p56, %s57, %s58
      %p62 = pneg %p56
      %p63 = scmp.eq.s32.totalorder %s21, 1
      %p64 = por %p62, %p63
      %p65 = scmp.ne.s32.totalorder %s57, %s60
      %p66 = scmp.eq.s32.totalorder %s21, 0
      %p67 = por %p65, %p66
      %p68 = scmp.ne.s32.totalorder %s57, %s60
      %p69 = scmp.eq.s32.totalorder %s26, 1
      %p70 = por %p68, %p69
      %p71 = scmp.ne.s32.totalorder %s60, %s61
      %p72 = scmp.eq.s32.totalorder %s26, 0
      %p73 = por %p71, %p72
      %p74 = scmp.ne.s32.totalorder %s60, %s61
      %p75 = scmp.eq.s32.totalorder %s27, 1
      %p76 = por %p74, %p75
      %p78 = scmp.ne.s32.totalorder %s61, %s77
      %p79 = scmp.eq.s32.totalorder %s27, 0
      %p80 = por %p78, %p79
      %s82 = sadd.s32 %s81, 1
      %p85 = scmp.eq.s32.totalorder %s21, 1
      %p86 = scmp.ne.s32.totalorder %s81, %s83
      %p87 = scmp.eq.s32.totalorder %s21, 0
      %p88 = por %p86, %p87
      %p89 = scmp.ne.s32.totalorder %s81, %s83
      %p90 = scmp.eq.s32.totalorder %s26, 1
      %p91 = por %p89, %p90
      %p92 = scmp.ne.s32.totalorder %s83, %s84
      %p93 = scmp.eq.s32.totalorder %s26, 0
      %p94 = por %p92, %p93
      %p95 = scmp.ne.s32.totalorder %s83, %s84
      %p96 = scmp.eq.s32.totalorder %s27, 1
      %p97 = por %p95, %p96
      %p99 = scmp.ne.s32.totalorder %s84, %s98
      %p100 = scmp.eq.s32.totalorder %s27, 0
      %p101 = por %p99, %p100
      %s103 = sadd.s32 %s102, 1
      %p106 = scmp.eq.s32.totalorder %s21, 1
      %p107 = scmp.ne.s32.totalorder %s102, %s104
      %p108 = scmp.eq.s32.totalorder %s21, 0
      %p109 = por %p107, %p108
      %p110 = scmp.ne.s32.totalorder %s102, %s104
      %p111 = scmp.eq.s32.totalorder %s26, 1
      %p112 = por %p110, %p111
      %p113 = scmp.ne.s32.totalorder %s104, %s105
      %p114 = scmp.eq.s32.totalorder %s26, 0
      %p115 = por %p113, %p114
      %p116 = scmp.ne.s32.totalorder %s104, %s105
      %p117 = scmp.eq.s32.totalorder %s27, 1
      %p118 = por %p116, %p117
      %p120 = scmp.ne.s32.totalorder %s105, %s119
      %p121 = scmp.eq.s32.totalorder %s27, 0
      %p122 = por %p120, %p121
      %s124 = sadd.s32 %s123, 1
      %p127 = scmp.eq.s32.totalorder %s21, 1
      %p128 = scmp.ne.s32.totalorder %s123, %s125
      %p129 = scmp.eq.s32.totalorder %s21, 0
      %p130 = por %p128, %p129
      %p131 = scmp.ne.s32.totalorder %s123, %s125
      %p132 = scmp.eq.s32.totalorder %s26, 1
      %p133 = por %p131, %p132
      %p134 = scmp.ne.s32.totalorder %s125, %s126
      %p135 = scmp.eq.s32.totalorder %s26, 0
      %p136 = por %p134, %p135
      %p137 = scmp.ne.s32.totalorder %s125, %s126
      %p138 = scmp.eq.s32.totalorder %s27, 1
      %p139 = por %p137, %p138
      %p141 = scmp.ne.s32.totalorder %s126, %s140
      %p142 = scmp.eq.s32.totalorder %s27, 0
      %p143 = por %p141, %p142
      %s145 = sadd.s32 %s144, 1
      %p148 = scmp.eq.s32.totalorder %s21, 1
      %p149 = scmp.ne.s32.totalorder %s144, %s146
      %p150 = scmp.eq.s32.totalorder %s21, 0
      %p151 = por %p149, %p150
      %p152 = scmp.ne.s32.totalorder %s144, %s146
      %p153 = scmp.eq.s32.totalorder %s26, 1
      %p154 = por %p152, %p153
      %p155 = scmp.ne.s32.totalorder %s146, %s147
      %p156 = scmp.eq.s32.totalorder %s26, 0
      %p157 = por %p155, %p156
      %p158 = scmp.ne.s32.totalorder %s146, %s147
      %p159 = scmp.eq.s32.totalorder %s27, 1
      %p160 = por %p158, %p159
      %p162 = scmp.ne.s32.totalorder %s147, %s161
      %p163 = scmp.eq.s32.totalorder %s27, 0
      %p164 = por %p162, %p163
      %s166 = sadd.s32 %s165, 1
      %p169 = scmp.eq.s32.totalorder %s21, 1
      %p170 = scmp.ne.s32.totalorder %s165, %s167
      %p171 = scmp.eq.s32.totalorder %s21, 0
      %p172 = por %p170, %p171
      %p173 = scmp.ne.s32.totalorder %s165, %s167
      %p174 = scmp.eq.s32.totalorder %s26, 1
      %p175 = por %p173, %p174
      %p176 = scmp.ne.s32.totalorder %s167, %s168
      %p177 = scmp.eq.s32.totalorder %s26, 0
      %p178 = por %p176, %p177
      %p179 = scmp.ne.s32.totalorder %s167, %s168
      %p180 = scmp.eq.s32.totalorder %s27, 1
      %p181 = por %p179, %p180
      %p183 = scmp.ne.s32.totalorder %s168, %s182
      %p184 = scmp.eq.s32.totalorder %s27, 0
      %p185 = por %p183, %p184
      %s187 = sadd.s32 %s186, 1
      %p190 = scmp.eq.s32.totalorder %s21, 1
      %p191 = scmp.ne.s32.totalorder %s186, %s188
      %p192 = scmp.eq.s32.totalorder %s21, 0
      %p193 = por %p191, %p192
      %p194 = scmp.ne.s32.totalorder %s186, %s188
      %p195 = scmp.eq.s32.totalorder %s26, 1
      %p196 = por %p194, %p195
      %p197 = scmp.ne.s32.totalorder %s188, %s189
      %p198 = scmp.eq.s32.totalorder %s26, 0
      %p199 = por %p197, %p198
      %p200 = scmp.ne.s32.totalorder %s188, %s189
      %p201 = scmp.eq.s32.totalorder %s27, 1
      %p202 = por %p200, %p201
      %p204 = scmp.ne.s32.totalorder %s189, %s203
      %p205 = scmp.eq.s32.totalorder %s27, 0
      %p206 = por %p204, %p205
      %s208 = sadd.s32 %s207, 1
      %p211 = scmp.eq.s32.totalorder %s21, 1
      %p212 = scmp.ne.s32.totalorder %s207, %s209
      %p213 = scmp.eq.s32.totalorder %s21, 0
      %p214 = por %p212, %p213
      %p215 = scmp.ne.s32.totalorder %s207, %s209
      %p216 = scmp.eq.s32.totalorder %s26, 1
      %p217 = por %p215, %p216
      %p218 = scmp.ne.s32.totalorder %s209, %s210
      %p219 = scmp.eq.s32.totalorder %s26, 0
      %p220 = por %p218, %p219
      %p221 = scmp.ne.s32.totalorder %s209, %s210
      %p222 = scmp.eq.s32.totalorder %s27, 1
      %p223 = por %p221, %p222
      %p225 = scmp.ne.s32.totalorder %s210, %s224
      %p226 = scmp.eq.s32.totalorder %s27, 0
      %p227 = por %p225, %p226
      %s229 = sadd.s32 %s228, 1
      %p232 = scmp.eq.s32.totalorder %s21, 1
      %p233 = scmp.ne.s32.totalorder %s228, %s230
      %p234 = scmp.eq.s32.totalorder %s21, 0
      %p235 = por %p233, %p234
      %p236 = scmp.ne.s32.totalorder %s228, %s230
      %p237 = scmp.eq.s32.totalorder %s26, 1
      %p238 = por %p236, %p237
      %p239 = scmp.ne.s32.totalorder %s230, %s231
      %p240 = scmp.eq.s32.totalorder %s26, 0
      %p241 = por %p239, %p240
      %p242 = scmp.ne.s32.totalorder %s230, %s231
      %p243 = scmp.eq.s32.totalorder %s27, 1
      %p244 = por %p242, %p243
      %p246 = scmp.ne.s32.totalorder %s231, %s245
      %p247 = scmp.eq.s32.totalorder %s27, 0
      %p248 = por %p246, %p247
      %s250 = sadd.s32 %s249, 1
      %p253 = scmp.eq.s32.totalorder %s21, 1
      %p254 = scmp.ne.s32.totalorder %s249, %s251
      %p255 = scmp.eq.s32.totalorder %s21, 0
      %p256 = por %p254, %p255
      %p257 = scmp.ne.s32.totalorder %s249, %s251
      %p258 = scmp.eq.s32.totalorder %s26, 1
      %p259 = por %p257, %p258
      %p260 = scmp.ne.s32.totalorder %s251, %s252
      %p261 = scmp.eq.s32.totalorder %s26, 0
      %p262 = por %p260, %p261
      %p263 = scmp.ne.s32.totalorder %s251, %s252
      %p264 = scmp.eq.s32.totalorder %s27, 1
      %p265 = por %p263, %p264
      %p267 = scmp.ne.s32.totalorder %s252, %s266
      %p268 = scmp.eq.s32.totalorder %s27, 0
      %p269 = por %p267, %p268
      %s270 = ssub.s32 %s21, %s28
      %p271 = scmp.eq.s32.totalorder %s270, 0
      %s273 = sadd.s32 %s272, 1
      %s274 = scalar_select %p271, %s272, %s273
      %p277 = pneg %p271
      %p278 = scmp.eq.s32.totalorder %s21, 1
      %p279 = por %p277, %p278
      %p280 = scmp.ne.s32.totalorder %s272, %s275
      %p281 = scmp.eq.s32.totalorder %s21, 0
      %p282 = por %p280, %p281
      %p283 = scmp.ne.s32.totalorder %s272, %s275
      %p284 = scmp.eq.s32.totalorder %s26, 1
      %p285 = por %p283, %p284
      %p286 = scmp.ne.s32.totalorder %s275, %s276
      %p287 = scmp.eq.s32.totalorder %s26, 0
      %p288 = por %p286, %p287
      %p289 = scmp.ne.s32.totalorder %s275, %s276
      %p290 = scmp.eq.s32.totalorder %s27, 1
      %p291 = por %p289, %p290
      %p293 = scmp.ne.s32.totalorder %s276, %s292
      %p294 = scmp.eq.s32.totalorder %s27, 0
      %p295 = por %p293, %p294
      %p296 = scmp.le.s32.totalorder 1, %s21
      %p297 = scmp.lt.s32.totalorder %s21, 3
      %p298 = pnand %p296, %p297
      %p299 = pneg %p298
      // Predicated region
      $region9: #{tpu_custom_call.1} parent=5 // pred_check
        _
      $region10: #{tpu_custom_call.1} parent=5 // pred_check_branch
        %301 = sbr.rel (%p298) target = $region12
      $region11: #{tpu_custom_call.1} parent=5 // pred_region
        %s302 = ssub.s32 %s21, 1
        // Predicated region
        $region13: #{tpu_custom_call.1} parent=11 // pred_check
          %p303 = pneg %p94
        $region14: #{tpu_custom_call.1} parent=11 // pred_check_branch
          %305 = sbr.rel (%p303) target = $region16
        $region15: #{tpu_custom_call.1} parent=11 // pred_region
          %s307 = ssub.s32 768, 768
          %308 = vsyncadd [#allocation3], %s307
          %s309 = sshll.u32 [#allocation2], 4
          %s310 = int_to_ptr.vmem [resolvable:$true] %s309
          %315 = dma.hbm_to_vmem [thread:$0]  %s2, 768, %s310, [#allocation3], 256, 256, 16
        $region16: #{tpu_custom_call.1} parent=11 // pred_fallthru
          _
        // Predicated region
        $region17: #{tpu_custom_call.1} parent=11 // pred_check
          %p316 = pneg %p115
        $region18: #{tpu_custom_call.1} parent=11 // pred_check_branch
          %318 = sbr.rel (%p316) target = $region20
        $region19: #{tpu_custom_call.1} parent=11 // pred_region
          %s320 = ssub.s32 16384, 16384
          %321 = vsyncadd [#allocation5], %s320
          %s322 = sshll.u32 [#allocation4], 4
          %s323 = int_to_ptr.vmem [resolvable:$true] %s322
          %328 = dma.hbm_to_vmem [thread:$0]  %s3, 16384, %s323, [#allocation5], 256, 256, 16
        $region20: #{tpu_custom_call.1} parent=11 // pred_fallthru
          _
        // Predicated region
        $region21: #{tpu_custom_call.1} parent=11 // pred_check
          %p329 = pneg %p136
        $region22: #{tpu_custom_call.1} parent=11 // pred_check_branch
          %331 = sbr.rel (%p329) target = $region24
        $region23: #{tpu_custom_call.1} parent=11 // pred_region
          %s333 = ssub.s32 8192, 8192
          %334 = vsyncadd [#allocation5], %s333
          %s335 = sshll.u32 [#allocation6], 4
          %s336 = int_to_ptr.vmem [resolvable:$true] %s335
          %341 = dma.hbm_to_vmem [thread:$0]  %s4, 8192, %s336, [#allocation5], 128, 128, 8
        $region24: #{tpu_custom_call.1} parent=11 // pred_fallthru
          _
        // Predicated region
        $region25: #{tpu_custom_call.1} parent=11 // pred_check
          %p342 = pneg %p157
        $region26: #{tpu_custom_call.1} parent=11 // pred_check_branch
          %344 = sbr.rel (%p342) target = $region28
        $region27: #{tpu_custom_call.1} parent=11 // pred_region
          _
        $region28: #{tpu_custom_call.1} parent=11 // pred_fallthru
          _
        // Predicated region
        $region29: #{tpu_custom_call.1} parent=11 // pred_check
          %p345 = pneg %p178
        $region30: #{tpu_custom_call.1} parent=11 // pred_check_branch
          %347 = sbr.rel (%p345) target = $region32
        $region31: #{tpu_custom_call.1} parent=11 // pred_region
          %s349 = ssub.s32 1024, 1024
          %350 = vsyncadd [#allocation8], %s349
          %s351 = sshll.u32 [#allocation7], 4
          %s352 = int_to_ptr.vmem [resolvable:$true] %s351
          %357 = dma.hbm_to_vmem [thread:$0]  %s6, 1024, %s352, [#allocation8], 64, 64, 4
        $region32: #{tpu_custom_call.1} parent=11 // pred_fallthru
          _
        // Predicated region
        $region33: #{tpu_custom_call.1} parent=11 // pred_check
          %p358 = pneg %p199
        $region34: #{tpu_custom_call.1} parent=11 // pred_check_branch
          %360 = sbr.rel (%p358) target = $region36
        $region35: #{tpu_custom_call.1} parent=11 // pred_region
          _
        $region36: #{tpu_custom_call.1} parent=11 // pred_fallthru
          _
        // Predicated region
        $region37: #{tpu_custom_call.1} parent=11 // pred_check
          %p361 = pneg %p220
        $region38: #{tpu_custom_call.1} parent=11 // pred_check_branch
          %363 = sbr.rel (%p361) target = $region40
        $region39: #{tpu_custom_call.1} parent=11 // pred_region
          %s365 = ssub.s32 1024, 1024
          %366 = vsyncadd [#allocation8], %s365
          %s367 = sshll.u32 [#allocation9], 4
          %s368 = int_to_ptr.vmem [resolvable:$true] %s367
          %373 = dma.hbm_to_vmem [thread:$0]  %s8, 1024, %s368, [#allocation8], 64, 64, 4
        $region40: #{tpu_custom_call.1} parent=11 // pred_fallthru
          _
        // Predicated region
        $region41: #{tpu_custom_call.1} parent=11 // pred_check
          %p374 = pneg %p241
        $region42: #{tpu_custom_call.1} parent=11 // pred_check_branch
          %376 = sbr.rel (%p374) target = $region44
        $region43: #{tpu_custom_call.1} parent=11 // pred_region
          _
        $region44: #{tpu_custom_call.1} parent=11 // pred_fallthru
          _
        // Predicated region
        $region45: #{tpu_custom_call.1} parent=11 // pred_check
          %p377 = pneg %p262
        $region46: #{tpu_custom_call.1} parent=11 // pred_check_branch
          %379 = sbr.rel (%p377) target = $region48
        $region47: #{tpu_custom_call.1} parent=11 // pred_region
          %s381 = ssub.s32 1024, 1024
          %382 = vsyncadd [#allocation11], %s381
          %s383 = sshll.u32 [#allocation10], 4
          %s384 = int_to_ptr.vmem [resolvable:$true] %s383
          %389 = dma.hbm_to_vmem [thread:$0]  %s10, 1024, %s384, [#allocation11], 512, 512, 32
        $region48: #{tpu_custom_call.1} parent=11 // pred_fallthru
          _
      $region12: #{tpu_custom_call.1} parent=5 // pred_fallthru
        _
      %p390 = scmp.lt.s32.totalorder %s21, 2
      // Predicated region
      $region49: #{tpu_custom_call.1} parent=5 // pred_check
        %p391 = pneg %p390
      $region50: #{tpu_custom_call.1} parent=5 // pred_check_branch
        %393 = sbr.rel (%p391) target = $region52
      $region51: #{tpu_custom_call.1} parent=5 // pred_region
        // Predicated region
        $region53: #{tpu_custom_call.1} parent=51 // pred_check
          %p394 = pneg %p41
        $region54: #{tpu_custom_call.1} parent=51 // pred_check_branch
          %396 = sbr.rel (%p394) target = $region56
        $region55: #{tpu_custom_call.1} parent=51 // pred_region
          %s397 = smul.u32 2, %s21
          %p398 = scmp.lt.s32.totalorder %s397, 3
          %s399 = scalar_select %p398, %s397, 3
          %s400 = smul.addr %s399, 4
          %s401 = scalar_lea.vmem %s0, %s400
          %s402 = smul.u32 2, %s21
        $region56: #{tpu_custom_call.1} parent=51 // pred_fallthru
          _
        // Predicated region
        $region57: #{tpu_custom_call.1} parent=51 // pred_check
          %p403 = pneg %p67
        $region58: #{tpu_custom_call.1} parent=51 // pred_check_branch
          %405 = sbr.rel (%p403) target = $region60
        $region59: #{tpu_custom_call.1} parent=51 // pred_region
          %s406 = smul.u32 2, %s21
          %p407 = scmp.lt.s32.totalorder %s406, 3
          %s408 = scalar_select %p407, %s406, 3
          %s409 = smul.addr %s408, 4
          %s410 = scalar_lea.vmem %s1, %s409
          %s411 = smul.u32 2, %s21
        $region60: #{tpu_custom_call.1} parent=51 // pred_fallthru
          _
      $region52: #{tpu_custom_call.1} parent=5 // pred_fallthru
        _
      %p412 = scmp.le.s32.totalorder 1, %s21
      %p413 = scmp.lt.s32.totalorder %s21, 3
      %p414 = pnand %p412, %p413
      %p415 = pneg %p414
      // Predicated region
      $region61: #{tpu_custom_call.1} parent=5 // pred_check
        _
      $region62: #{tpu_custom_call.1} parent=5 // pred_check_branch
        %417 = sbr.rel (%p414) target = $region64
      $region63: #{tpu_custom_call.1} parent=5 // pred_region
        %s418 = ssub.s32 %s21, 1
        // Predicated region
        $region65: #{tpu_custom_call.1} parent=63 // pred_check
          %p419 = pneg %p94
        $region66: #{tpu_custom_call.1} parent=63 // pred_check_branch
          %421 = sbr.rel (%p419) target = $region68
        $region67: #{tpu_custom_call.1} parent=63 // pred_region
          %422 = dma.done [#allocation3], 768
        $region68: #{tpu_custom_call.1} parent=63 // pred_fallthru
          _
        // Predicated region
        $region69: #{tpu_custom_call.1} parent=63 // pred_check
          %p423 = pneg %p115
        $region70: #{tpu_custom_call.1} parent=63 // pred_check_branch
          %425 = sbr.rel (%p423) target = $region72
        $region71: #{tpu_custom_call.1} parent=63 // pred_region
          %426 = dma.done [#allocation5], 16384
        $region72: #{tpu_custom_call.1} parent=63 // pred_fallthru
          _
        // Predicated region
        $region73: #{tpu_custom_call.1} parent=63 // pred_check
          %p427 = pneg %p136
        $region74: #{tpu_custom_call.1} parent=63 // pred_check_branch
          %429 = sbr.rel (%p427) target = $region76
        $region75: #{tpu_custom_call.1} parent=63 // pred_region
          %430 = dma.done [#allocation5], 8192
        $region76: #{tpu_custom_call.1} parent=63 // pred_fallthru
          _
        // Predicated region
        $region77: #{tpu_custom_call.1} parent=63 // pred_check
          %p431 = pneg %p178
        $region78: #{tpu_custom_call.1} parent=63 // pred_check_branch
          %433 = sbr.rel (%p431) target = $region80
        $region79: #{tpu_custom_call.1} parent=63 // pred_region
          %434 = dma.done [#allocation8], 1024
        $region80: #{tpu_custom_call.1} parent=63 // pred_fallthru
          _
        // Predicated region
        $region81: #{tpu_custom_call.1} parent=63 // pred_check
          %p435 = pneg %p220
        $region82: #{tpu_custom_call.1} parent=63 // pred_check_branch
          %437 = sbr.rel (%p435) target = $region84
        $region83: #{tpu_custom_call.1} parent=63 // pred_region
          %438 = dma.done [#allocation8], 1024
        $region84: #{tpu_custom_call.1} parent=63 // pred_fallthru
          _
        // Predicated region
        $region85: #{tpu_custom_call.1} parent=63 // pred_check
          %p439 = pneg %p262
        $region86: #{tpu_custom_call.1} parent=63 // pred_check_branch
          %441 = sbr.rel (%p439) target = $region88
        $region87: #{tpu_custom_call.1} parent=63 // pred_region
          %442 = dma.done [#allocation11], 1024
        $region88: #{tpu_custom_call.1} parent=63 // pred_fallthru
          _
        %s443 = smul.u32 2, %s26
        %p444 = scmp.lt.s32.totalorder %s443, 3
        %s445 = scalar_select %p444, %s443, 3
        %s446 = smul.addr %s445, 4
        %s447 = scalar_lea.vmem %s0, %s446
        %p448 = pneg %p47
        %p449 = pneg %p44
        %s450 = smul.u32 2, %s26
        %p451 = scmp.lt.s32.totalorder %s450, 3
        %s452 = scalar_select %p451, %s450, 3
        %s453 = smul.addr %s452, 4
        %s454 = scalar_lea.vmem %s1, %s453
        %p455 = pneg %p73
        %p456 = pneg %p70
        %p457 = pneg %p94
        %p458 = pneg %p91
        %p459 = pneg %p115
        %p460 = pneg %p112
        %p461 = pneg %p136
        %p462 = pneg %p133
        %p463 = pneg %p157
        %p464 = pneg %p154
        %p465 = pneg %p178
        %p466 = pneg %p175
        %p467 = pneg %p199
        %p468 = pneg %p196
        %p469 = pneg %p220
        %p470 = pneg %p217
        %p471 = pneg %p241
        %p472 = pneg %p238
        %p473 = pneg %p262
        %p474 = pneg %p259
        %p475 = pneg %p288
        %p476 = pneg %p285
        %s477 = smul.u32 2, %s26
        %p478 = scmp.lt.s32.totalorder %s477, 3
        %s479 = scalar_select %p478, %s477, 3
        %s480 = smul.addr %s479, 8
        %s481 = scalar_lea.vmem %s11, %s480
        %s482 = smul.u32 2, %s26
        %p483 = scmp.lt.s32.totalorder %s482, 3
        %s484 = scalar_select %p483, %s482, 3
        %s485 = smul.addr %s484, 4
        %s486 = scalar_lea.vmem %s0, %s485
        %s487 = smul.u32 2, %s26
        %s488 = smul.u32 2, %s26
        %p489 = scmp.lt.s32.totalorder %s488, 3
        %s490 = scalar_select %p489, %s488, 3
        %s491 = smul.addr %s490, 4
        %s492 = scalar_lea.vmem %s1, %s491
        %s493 = smul.u32 2, %s26
        %s494 = smul.u32 2, %s26
        %p495 = scmp.lt.s32.totalorder %s494, 3
        %s496 = scalar_select %p495, %s494, 3
        %s497 = smul.addr %s496, 8
        %s498 = scalar_lea.vmem %s11, %s497
        %s499 = smul.u32 2, %s26
        %v501 = vld [vmem:[%s486] sm:$0xf]
        %v502 = vld [vmem:[%s486 + $0x4] sm:$0xf]
        %v503 = vld [vmem:[#allocation2] sm:$0xff]
        %v504 = vld [vmem:[#allocation2 + $0x8] sm:$0xff]
        %v505 = vld [vmem:[#allocation2 + $0x10] sm:$0xff]
        %v506 = vld [vmem:[#allocation2 + $0x18] sm:$0xff]
        %v507 = vld [vmem:[#allocation2 + $0x20] sm:$0xff]
        %v508 = vld [vmem:[#allocation2 + $0x28] sm:$0xff]
        %v511 = vunpack.c.l.b16 %v501
        %v512 = vunpack.c.l.b16 %v502
        %v513 = vpack.c.b16 %v512, %v511
        %v520 = vunpack.c.l.b16 %v503
        %v521 = vunpack.c.h.b16 %v503
        %v522 = vunpack.c.l.b16 %v504
        %v523 = vunpack.c.h.b16 %v504
        %v524 = vunpack.c.l.b16 %v505
        %v525 = vunpack.c.h.b16 %v505
        %v526 = vunpack.c.l.b16 %v506
        %v527 = vunpack.c.h.b16 %v506
        %v528 = vunpack.c.l.b16 %v507
        %v529 = vunpack.c.h.b16 %v507
        %v530 = vunpack.c.l.b16 %v508
        %v531 = vunpack.c.h.b16 %v508
        %v532 = vpack.c.b16 %v524, %v520
        %v533 = vpack.c.b16 %v525, %v521
        %v534 = vpack.c.b16 %v526, %v522
        %v535 = vpack.c.b16 %v527, %v523
        %v536 = vpack.c.b16 %v528, %v528
        %v537 = vpack.c.b16 %v529, %v529
        %v538 = vpack.c.b16 %v530, %v530
        %v539 = vpack.c.b16 %v531, %v531
        %vm544 = vcmask 195584
        %v546 = vsel %vm544, %v513, 0
        %vm548 = vcmask 1043456
        %v550 = vsel %vm548, %v536, 0
        %v553 = vsel %vm548, %v537, 0
        %v556 = vsel %vm548, %v538, 0
        %v559 = vsel %vm548, %v539, 0
        %561 = vmatprep.subr.bf16.mxu0 %v533
        %562 = vmatpush1.bf16.msra.mxu0 %v532
        %563 = vmatprep.subr.bf16.mxu0 %v553
        %564 = vmatpush1.bf16.msra.mxu0 %v550
        %565 = vmatprep.subr.bf16.mxu0 0
        %566 = vmatpush1.bf16.msra.mxu0 0
        %567 = vmatprep.subr.bf16.mxu0 0
        %568 = vmatpush1.bf16.msra.mxu0 0
        %569 = vmatprep.subr.bf16.mxu0 0
        %570 = vmatpush1.bf16.msra.mxu0 0
        %571 = vmatprep.subr.bf16.mxu0 0
        %572 = vmatpush1.bf16.msra.mxu0 0
        %573 = vmatprep.subr.bf16.mxu0 0
        %574 = vmatpush1.bf16.msra.mxu0 0
        %575 = vmatprep.subr.bf16.mxu0 0
        %576 = vmatpush1.bf16.msra.mxu0 0
        %577 = vmatprep.subr.bf16.mxu0 0
        %578 = vmatpush1.bf16.msra.mxu0 0
        %579 = vmatprep.subr.bf16.mxu0 0
        %580 = vmatpush1.bf16.msra.mxu0 0
        %581 = vmatprep.subr.bf16.mxu0 0
        %582 = vmatpush1.bf16.msra.mxu0 0
        %583 = vmatprep.subr.bf16.mxu0 0
        %584 = vmatpush1.bf16.msra.mxu0 0
        %585 = vmatprep.subr.bf16.mxu0 0
        %586 = vmatpush1.bf16.msra.mxu0 0
        %587 = vmatprep.subr.bf16.mxu0 0
        %588 = vmatpush1.bf16.msra.mxu0 0
        %589 = vmatprep.subr.bf16.mxu0 0
        %590 = vmatpush1.bf16.msra.mxu0 0
        %591 = vmatprep.subr.bf16.mxu0 0
        %592 = vmatpush1.bf16.msra.mxu0 0
        %593 = vmatprep.mubr.bf16.mxu0 0
        %594 = vmatmul.mubr.bf16.gmra.mrb[0].mxu0 %v546
        %v595 = vpop.f32.mrb[0].mxu0
        %v596 = vadd.f32 0.0, %v595
        %v597 = vpop.f32.mrb[0].mxu0
        %v598 = vadd.f32 0.0, %v597
        %v599 = vpop.f32.mrb[0].mxu0
        %v600 = vadd.f32 0.0, %v599
        %v601 = vpop.f32.mrb[0].mxu0
        %v602 = vadd.f32 0.0, %v601
        %603 = vdwg.mxu0
        %604 = vmatprep.subr.bf16.mxu0 %v535
        %605 = vmatpush1.bf16.msra.mxu0 %v534
        %606 = vmatprep.subr.bf16.mxu0 %v559
        %607 = vmatpush1.bf16.msra.mxu0 %v556
        %608 = vmatprep.subr.bf16.mxu0 0
        %609 = vmatpush1.bf16.msra.mxu0 0
        %610 = vmatprep.subr.bf16.mxu0 0
        %611 = vmatpush1.bf16.msra.mxu0 0
        %612 = vmatprep.subr.bf16.mxu0 0
        %613 = vmatpush1.bf16.msra.mxu0 0
        %614 = vmatprep.subr.bf16.mxu0 0
        %615 = vmatpush1.bf16.msra.mxu0 0
        %616 = vmatprep.subr.bf16.mxu0 0
        %617 = vmatpush1.bf16.msra.mxu0 0
        %618 = vmatprep.subr.bf16.mxu0 0
        %619 = vmatpush1.bf16.msra.mxu0 0
        %620 = vmatprep.subr.bf16.mxu0 0
        %621 = vmatpush1.bf16.msra.mxu0 0
        %622 = vmatprep.subr.bf16.mxu0 0
        %623 = vmatpush1.bf16.msra.mxu0 0
        %624 = vmatprep.subr.bf16.mxu0 0
        %625 = vmatpush1.bf16.msra.mxu0 0
        %626 = vmatprep.subr.bf16.mxu0 0
        %627 = vmatpush1.bf16.msra.mxu0 0
        %628 = vmatprep.subr.bf16.mxu0 0
        %629 = vmatpush1.bf16.msra.mxu0 0
        %630 = vmatprep.subr.bf16.mxu0 0
        %631 = vmatpush1.bf16.msra.mxu0 0
        %632 = vmatprep.subr.bf16.mxu0 0
        %633 = vmatpush1.bf16.msra.mxu0 0
        %634 = vmatprep.subr.bf16.mxu0 0
        %635 = vmatpush1.bf16.msra.mxu0 0
        %636 = vmatprep.mubr.bf16.mxu0 0
        %637 = vmatmul.mubr.bf16.gmra.mrb[0].mxu0 %v546
        %v638 = vpop.f32.mrb[0].mxu0
        %v639 = vadd.f32 0.0, %v638
        %v640 = vpop.f32.mrb[0].mxu0
        %v641 = vadd.f32 0.0, %v640
        %v642 = vpop.f32.mrb[0].mxu0
        %v643 = vadd.f32 0.0, %v642
        %v644 = vpop.f32.mrb[0].mxu0
        %v645 = vadd.f32 0.0, %v644
        %646 = vdwg.mxu0
        %v647 = vld [vmem:[#allocation10] ss:$8 sm:$0xf]
        %s648 = scalar_lea.vmem [#allocation10], 1
        %v649 = vld [vmem:[%s648] ss:$8 sm:$0xf]
        %v650 = vrot.slane %v596, 4
        %v651 = vadd.f32 %v596, %v650
        %v652 = vrot.slane %v651, 2
        %v653 = vadd.f32 %v651, %v652
        %v654 = vrot.slane %v653, 1
        %v655 = vadd.f32 %v653, %v654
        %v656 = vrot.slane %v598, 4
        %v657 = vadd.f32 %v598, %v656
        %v658 = vrot.slane %v657, 2
        %v659 = vadd.f32 %v657, %v658
        %v660 = vrot.slane %v659, 1
        %v661 = vadd.f32 %v659, %v660
        %v662 = vrot.slane %v639, 4
        %v663 = vadd.f32 %v639, %v662
        %v664 = vrot.slane %v663, 2
        %v665 = vadd.f32 %v663, %v664
        %v666 = vrot.slane %v665, 1
        %v667 = vadd.f32 %v665, %v666
        %v668 = vrot.slane %v641, 4
        %v669 = vadd.f32 %v641, %v668
        %v670 = vrot.slane %v669, 2
        %v671 = vadd.f32 %v669, %v670
        %v672 = vrot.slane %v671, 1
        %v673 = vadd.f32 %v671, %v672
        %v674 = vrot.slane %v600, 4
        %v675 = vadd.f32 %v600, %v674
        %v676 = vrot.slane %v675, 2
        %v677 = vadd.f32 %v675, %v676
        %v678 = vrot.slane %v677, 1
        %v679 = vadd.f32 %v677, %v678
        %v680 = vrot.slane %v602, 4
        %v681 = vadd.f32 %v602, %v680
        %v682 = vrot.slane %v681, 2
        %v683 = vadd.f32 %v681, %v682
        %v684 = vrot.slane %v683, 1
        %v685 = vadd.f32 %v683, %v684
        %v686 = vrot.slane %v643, 4
        %v687 = vadd.f32 %v643, %v686
        %v688 = vrot.slane %v687, 2
        %v689 = vadd.f32 %v687, %v688
        %v690 = vrot.slane %v689, 1
        %v691 = vadd.f32 %v689, %v690
        %v692 = vrot.slane %v645, 4
        %v693 = vadd.f32 %v645, %v692
        %v694 = vrot.slane %v693, 2
        %v695 = vadd.f32 %v693, %v694
        %v696 = vrot.slane %v695, 1
        %v697 = vadd.f32 %v695, %v696
        %v698 = vrcp.pop 8.0
        %v699 = vmul.f32 %v655, %v698
        %v700 = vmul.f32 %v661, %v698
        %v701 = vmul.f32 %v667, %v698
        %v702 = vmul.f32 %v673, %v698
        %v703 = vmul.f32 %v679, %v698
        %v704 = vmul.f32 %v685, %v698
        %v705 = vmul.f32 %v691, %v698
        %v706 = vmul.f32 %v697, %v698
        %v707 = vmul.f32 %v596, %v596
        %v708 = vmul.f32 %v598, %v598
        %v709 = vmul.f32 %v639, %v639
        %v710 = vmul.f32 %v641, %v641
        %v711 = vmul.f32 %v600, %v600
        %v712 = vmul.f32 %v602, %v602
        %v713 = vmul.f32 %v643, %v643
        %v714 = vmul.f32 %v645, %v645
        %v715 = vrot.slane %v707, 4
        %v716 = vadd.f32 %v707, %v715
        %v717 = vrot.slane %v716, 2
        %v718 = vadd.f32 %v716, %v717
        %v719 = vrot.slane %v718, 1
        %v720 = vadd.f32 %v718, %v719
        %v721 = vrot.slane %v708, 4
        %v722 = vadd.f32 %v708, %v721
        %v723 = vrot.slane %v722, 2
        %v724 = vadd.f32 %v722, %v723
        %v725 = vrot.slane %v724, 1
        %v726 = vadd.f32 %v724, %v725
        %v727 = vrot.slane %v709, 4
        %v728 = vadd.f32 %v709, %v727
        %v729 = vrot.slane %v728, 2
        %v730 = vadd.f32 %v728, %v729
        %v731 = vrot.slane %v730, 1
        %v732 = vadd.f32 %v730, %v731
        %v733 = vrot.slane %v710, 4
        %v734 = vadd.f32 %v710, %v733
        %v735 = vrot.slane %v734, 2
        %v736 = vadd.f32 %v734, %v735
        %v737 = vrot.slane %v736, 1
        %v738 = vadd.f32 %v736, %v737
        %v739 = vrot.slane %v711, 4
        %v740 = vadd.f32 %v711, %v739
        %v741 = vrot.slane %v740, 2
        %v742 = vadd.f32 %v740, %v741
        %v743 = vrot.slane %v742, 1
        %v744 = vadd.f32 %v742, %v743
        %v745 = vrot.slane %v712, 4
        %v746 = vadd.f32 %v712, %v745
        %v747 = vrot.slane %v746, 2
        %v748 = vadd.f32 %v746, %v747
        %v749 = vrot.slane %v748, 1
        %v750 = vadd.f32 %v748, %v749
        %v751 = vrot.slane %v713, 4
        %v752 = vadd.f32 %v713, %v751
        %v753 = vrot.slane %v752, 2
        %v754 = vadd.f32 %v752, %v753
        %v755 = vrot.slane %v754, 1
        %v756 = vadd.f32 %v754, %v755
        %v757 = vrot.slane %v714, 4
        %v758 = vadd.f32 %v714, %v757
        %v759 = vrot.slane %v758, 2
        %v760 = vadd.f32 %v758, %v759
        %v761 = vrot.slane %v760, 1
        %v762 = vadd.f32 %v760, %v761
        %v763 = vmul.f32 %v720, %v698
        %v764 = vmul.f32 %v726, %v698
        %v765 = vmul.f32 %v732, %v698
        %v766 = vmul.f32 %v738, %v698
        %v767 = vmul.f32 %v744, %v698
        %v768 = vmul.f32 %v750, %v698
        %v769 = vmul.f32 %v756, %v698
        %v770 = vmul.f32 %v762, %v698
        %v771 = vmul.f32 %v699, %v699
        %v772 = vmul.f32 %v700, %v700
        %v773 = vmul.f32 %v701, %v701
        %v774 = vmul.f32 %v702, %v702
        %v775 = vmul.f32 %v703, %v703
        %v776 = vmul.f32 %v704, %v704
        %v777 = vmul.f32 %v705, %v705
        %v778 = vmul.f32 %v706, %v706
        %v779 = vsub.f32 %v763, %v771
        %v780 = vsub.f32 %v764, %v772
        %v781 = vsub.f32 %v765, %v773
        %v782 = vsub.f32 %v766, %v774
        %v783 = vsub.f32 %v767, %v775
        %v784 = vsub.f32 %v768, %v776
        %v785 = vsub.f32 %v769, %v777
        %v786 = vsub.f32 %v770, %v778
        %v787 = vmax.f32 %v779, 0.0
        %v788 = vmax.f32 %v780, 0.0
        %v789 = vmax.f32 %v781, 0.0
        %v790 = vmax.f32 %v782, 0.0
        %v791 = vmax.f32 %v783, 0.0
        %v792 = vmax.f32 %v784, 0.0
        %v793 = vmax.f32 %v785, 0.0
        %v794 = vmax.f32 %v786, 0.0
        %v795 = vadd.f32 %v787, 1e-05
        %v796 = vadd.f32 %v788, 1e-05
        %v797 = vadd.f32 %v789, 1e-05
        %v798 = vadd.f32 %v790, 1e-05
        %v799 = vadd.f32 %v791, 1e-05
        %v800 = vadd.f32 %v792, 1e-05
        %v801 = vadd.f32 %v793, 1e-05
        %v802 = vadd.f32 %v794, 1e-05
        %v803 = vrsqrt.pop %v795
        %v804 = vrsqrt.pop %v796
        %v805 = vrsqrt.pop %v797
        %v806 = vrsqrt.pop %v798
        %v807 = vrsqrt.pop %v799
        %v808 = vrsqrt.pop %v800
        %v809 = vrsqrt.pop %v801
        %v810 = vrsqrt.pop %v802
        %v819 = vcombine.low %v803, %v804
        %v820 = vcombine.low %v805, %v806
        %v822 = vunpack.c.l.s4 1966171168
        %v823 = vunpack.c.0.s8 %v822
        %v824 = vlaneseq
        %v825 = vshrl.u32 %v824, 7
        %v826 = vsub.s32 %v823, %v825
        %v827 = vrot.slane %v819, %v826
        %v829 = vunpack.c.l.s4 1966171168
        %v830 = vunpack.c.0.s8 %v829
        %v831 = vlaneseq
        %v832 = vshrl.u32 %v831, 7
        %v833 = vsub.s32 %v830, %v832
        %v834 = vrot.slane %v820, %v833
        %v835 = vcombine.low %v827, %v834
        %v837 = vunpack.c.l.s4 1966171168
        %v838 = vunpack.c.0.s8 %v837
        %v839 = vlaneseq
        %v840 = vshrl.u32 %v839, 7
        %v841 = vsub.s32 %v838, %v840
        %v842 = vrot.slane %v835, %v841
        %v843 = vcombine.low %v807, %v808
        %v844 = vcombine.low %v809, %v810
        %v846 = vunpack.c.l.s4 1966171168
        %v847 = vunpack.c.0.s8 %v846
        %v848 = vlaneseq
        %v849 = vshrl.u32 %v848, 7
        %v850 = vsub.s32 %v847, %v849
        %v851 = vrot.slane %v843, %v850
        %v853 = vunpack.c.l.s4 1966171168
        %v854 = vunpack.c.0.s8 %v853
        %v855 = vlaneseq
        %v856 = vshrl.u32 %v855, 7
        %v857 = vsub.s32 %v854, %v856
        %v858 = vrot.slane %v844, %v857
        %v859 = vcombine.low %v851, %v858
        %v861 = vunpack.c.l.s4 1966171168
        %v862 = vunpack.c.0.s8 %v861
        %v863 = vlaneseq
        %v864 = vshrl.u32 %v863, 7
        %v865 = vsub.s32 %v862, %v864
        %v866 = vrot.slane %v859, %v865
        %v869 = vmul.f32 %v647, %v842
        %v870 = vmul.f32 %v647, %v866
        %v873 = vlaneseq
        %v874 = vshrl.u32 %v873, 7
        %v875 = vsub.s32 0, %v874
        %v876 = vrot.slane %v869, %v875
        %v877 = vlaneseq
        %v878 = vshrl.u32 %v877, 7
        %v879 = vsub.s32 1, %v878
        %v880 = vrot.slane %v869, %v879
        %v881 = vlaneseq
        %v882 = vshrl.u32 %v881, 7
        %v883 = vsub.s32 2, %v882
        %v884 = vrot.slane %v869, %v883
        %v885 = vlaneseq
        %v886 = vshrl.u32 %v885, 7
        %v887 = vsub.s32 3, %v886
        %v888 = vrot.slane %v869, %v887
        %v889 = vlaneseq
        %v890 = vshrl.u32 %v889, 7
        %v891 = vsub.s32 0, %v890
        %v892 = vrot.slane %v870, %v891
        %v893 = vlaneseq
        %v894 = vshrl.u32 %v893, 7
        %v895 = vsub.s32 1, %v894
        %v896 = vrot.slane %v870, %v895
        %v897 = vlaneseq
        %v898 = vshrl.u32 %v897, 7
        %v899 = vsub.s32 2, %v898
        %v900 = vrot.slane %v870, %v899
        %v901 = vlaneseq
        %v902 = vshrl.u32 %v901, 7
        %v903 = vsub.s32 3, %v902
        %v904 = vrot.slane %v870, %v903
        %v913 = vmul.f32 %v699, %v876
        %v914 = vmul.f32 %v700, %v880
        %v915 = vmul.f32 %v701, %v884
        %v916 = vmul.f32 %v702, %v888
        %v917 = vmul.f32 %v703, %v892
        %v918 = vmul.f32 %v704, %v896
        %v919 = vmul.f32 %v705, %v900
        %v920 = vmul.f32 %v706, %v904
        %v929 = vcombine.low %v913, %v914
        %v930 = vcombine.low %v915, %v916
        %v932 = vunpack.c.l.s4 1966171168
        %v933 = vunpack.c.0.s8 %v932
        %v934 = vlaneseq
        %v935 = vshrl.u32 %v934, 7
        %v936 = vsub.s32 %v933, %v935
        %v937 = vrot.slane %v929, %v936
        %v939 = vunpack.c.l.s4 1966171168
        %v940 = vunpack.c.0.s8 %v939
        %v941 = vlaneseq
        %v942 = vshrl.u32 %v941, 7
        %v943 = vsub.s32 %v940, %v942
        %v944 = vrot.slane %v930, %v943
        %v945 = vcombine.low %v937, %v944
        %v947 = vunpack.c.l.s4 1966171168
        %v948 = vunpack.c.0.s8 %v947
        %v949 = vlaneseq
        %v950 = vshrl.u32 %v949, 7
        %v951 = vsub.s32 %v948, %v950
        %v952 = vrot.slane %v945, %v951
        %v953 = vcombine.low %v917, %v918
        %v954 = vcombine.low %v919, %v920
        %v956 = vunpack.c.l.s4 1966171168
        %v957 = vunpack.c.0.s8 %v956
        %v958 = vlaneseq
        %v959 = vshrl.u32 %v958, 7
        %v960 = vsub.s32 %v957, %v959
        %v961 = vrot.slane %v953, %v960
        %v963 = vunpack.c.l.s4 1966171168
        %v964 = vunpack.c.0.s8 %v963
        %v965 = vlaneseq
        %v966 = vshrl.u32 %v965, 7
        %v967 = vsub.s32 %v964, %v966
        %v968 = vrot.slane %v954, %v967
        %v969 = vcombine.low %v961, %v968
        %v971 = vunpack.c.l.s4 1966171168
        %v972 = vunpack.c.0.s8 %v971
        %v973 = vlaneseq
        %v974 = vshrl.u32 %v973, 7
        %v975 = vsub.s32 %v972, %v974
        %v976 = vrot.slane %v969, %v975
        %v979 = vsub.f32 %v649, %v952
        %v980 = vsub.f32 %v649, %v976
        %v981 = vmul.f32 %v596, %v876
        %v982 = vmul.f32 %v598, %v880
        %v983 = vmul.f32 %v639, %v884
        %v984 = vmul.f32 %v641, %v888
        %v985 = vmul.f32 %v600, %v892
        %v986 = vmul.f32 %v602, %v896
        %v987 = vmul.f32 %v643, %v900
        %v988 = vmul.f32 %v645, %v904
        %v991 = vlaneseq
        %v992 = vshrl.u32 %v991, 7
        %v993 = vsub.s32 0, %v992
        %v994 = vrot.slane %v979, %v993
        %v995 = vlaneseq
        %v996 = vshrl.u32 %v995, 7
        %v997 = vsub.s32 1, %v996
        %v998 = vrot.slane %v979, %v997
        %v999 = vlaneseq
        %v1000 = vshrl.u32 %v999, 7
        %v1001 = vsub.s32 2, %v1000
        %v1002 = vrot.slane %v979, %v1001
        %v1003 = vlaneseq
        %v1004 = vshrl.u32 %v1003, 7
        %v1005 = vsub.s32 3, %v1004
        %v1006 = vrot.slane %v979, %v1005
        %v1007 = vlaneseq
        %v1008 = vshrl.u32 %v1007, 7
        %v1009 = vsub.s32 0, %v1008
        %v1010 = vrot.slane %v980, %v1009
        %v1011 = vlaneseq
        %v1012 = vshrl.u32 %v1011, 7
        %v1013 = vsub.s32 1, %v1012
        %v1014 = vrot.slane %v980, %v1013
        %v1015 = vlaneseq
        %v1016 = vshrl.u32 %v1015, 7
        %v1017 = vsub.s32 2, %v1016
        %v1018 = vrot.slane %v980, %v1017
        %v1019 = vlaneseq
        %v1020 = vshrl.u32 %v1019, 7
        %v1021 = vsub.s32 3, %v1020
        %v1022 = vrot.slane %v980, %v1021
        %v1031 = vadd.f32 %v981, %v994
        %v1032 = vadd.f32 %v982, %v998
        %v1033 = vadd.f32 %v983, %v1002
        %v1034 = vadd.f32 %v984, %v1006
        %v1035 = vadd.f32 %v985, %v1010
        %v1036 = vadd.f32 %v986, %v1014
        %v1037 = vadd.f32 %v987, %v1018
        %v1038 = vadd.f32 %v988, %v1022
        %v1039 = vmax.f32 %v1031, 0.0
        %v1040 = vmax.f32 %v1032, 0.0
        %v1041 = vmax.f32 %v1033, 0.0
        %v1042 = vmax.f32 %v1034, 0.0
        %v1043 = vmax.f32 %v1035, 0.0
        %v1044 = vmax.f32 %v1036, 0.0
        %v1045 = vmax.f32 %v1037, 0.0
        %v1046 = vmax.f32 %v1038, 0.0
        %v1047 = vpack.c.bf16 %v1043, %v1039
        %v1048 = vpack.c.bf16 %v1044, %v1040
        %v1049 = vpack.c.bf16 %v1045, %v1041
        %v1050 = vpack.c.bf16 %v1046, %v1042
        %v1051 = vld [vmem:[#allocation4] sm:$0xff]
        %v1052 = vld [vmem:[#allocation4 + $0x8] sm:$0xff]
        %v1053 = vld [vmem:[#allocation4 + $0x10] sm:$0xff]
        %v1054 = vld [vmem:[#allocation4 + $0x18] sm:$0xff]
        %v1055 = vld [vmem:[#allocation4 + $0x20] sm:$0xff]
        %v1056 = vld [vmem:[#allocation4 + $0x28] sm:$0xff]
        %v1057 = vld [vmem:[#allocation4 + $0x30] sm:$0xff]
        %v1058 = vld [vmem:[#allocation4 + $0x38] sm:$0xff]
        %v1059 = vld [vmem:[#allocation4 + $0x40] sm:$0xff]
        %v1060 = vld [vmem:[#allocation4 + $0x48] sm:$0xff]
        %v1061 = vld [vmem:[#allocation4 + $0x50] sm:$0xff]
        %v1062 = vld [vmem:[#allocation4 + $0x58] sm:$0xff]
        %v1063 = vld [vmem:[#allocation4 + $0x60] sm:$0xff]
        %v1064 = vld [vmem:[#allocation4 + $0x68] sm:$0xff]
        %v1065 = vld [vmem:[#allocation4 + $0x70] sm:$0xff]
        %v1066 = vld [vmem:[#allocation4 + $0x78] sm:$0xff]
        %v1067 = vld [vmem:[#allocation4 + $0x80] sm:$0xff]
        %v1068 = vld [vmem:[#allocation4 + $0x88] sm:$0xff]
        %v1069 = vld [vmem:[#allocation4 + $0x90] sm:$0xff]
        %v1070 = vld [vmem:[#allocation4 + $0x98] sm:$0xff]
        %v1071 = vld [vmem:[#allocation4 + $0xa0] sm:$0xff]
        %v1072 = vld [vmem:[#allocation4 + $0xa8] sm:$0xff]
        %v1073 = vld [vmem:[#allocation4 + $0xb0] sm:$0xff]
        %v1074 = vld [vmem:[#allocation4 + $0xb8] sm:$0xff]
        %v1075 = vld [vmem:[#allocation4 + $0xc0] sm:$0xff]
        %v1076 = vld [vmem:[#allocation4 + $0xc8] sm:$0xff]
        %v1077 = vld [vmem:[#allocation4 + $0xd0] sm:$0xff]
        %v1078 = vld [vmem:[#allocation4 + $0xd8] sm:$0xff]
        %v1079 = vld [vmem:[#allocation4 + $0xe0] sm:$0xff]
        %v1080 = vld [vmem:[#allocation4 + $0xe8] sm:$0xff]
        %v1081 = vld [vmem:[#allocation4 + $0xf0] sm:$0xff]
        %v1082 = vld [vmem:[#allocation4 + $0xf8] sm:$0xff]
        %v1083 = vld [vmem:[#allocation4 + $0x100] sm:$0xff]
        %v1084 = vld [vmem:[#allocation4 + $0x108] sm:$0xff]
        %v1085 = vld [vmem:[#allocation4 + $0x110] sm:$0xff]
        %v1086 = vld [vmem:[#allocation4 + $0x118] sm:$0xff]
        %v1087 = vld [vmem:[#allocation4 + $0x120] sm:$0xff]
        %v1088 = vld [vmem:[#allocation4 + $0x128] sm:$0xff]
        %v1089 = vld [vmem:[#allocation4 + $0x130] sm:$0xff]
        %v1090 = vld [vmem:[#allocation4 + $0x138] sm:$0xff]
        %v1091 = vld [vmem:[#allocation4 + $0x140] sm:$0xff]
        %v1092 = vld [vmem:[#allocation4 + $0x148] sm:$0xff]
        %v1093 = vld [vmem:[#allocation4 + $0x150] sm:$0xff]
        %v1094 = vld [vmem:[#allocation4 + $0x158] sm:$0xff]
        %v1095 = vld [vmem:[#allocation4 + $0x160] sm:$0xff]
        %v1096 = vld [vmem:[#allocation4 + $0x168] sm:$0xff]
        %v1097 = vld [vmem:[#allocation4 + $0x170] sm:$0xff]
        %v1098 = vld [vmem:[#allocation4 + $0x178] sm:$0xff]
        %v1099 = vld [vmem:[#allocation4 + $0x180] sm:$0xff]
        %v1100 = vld [vmem:[#allocation4 + $0x188] sm:$0xff]
        %v1101 = vld [vmem:[#allocation4 + $0x190] sm:$0xff]
        %v1102 = vld [vmem:[#allocation4 + $0x198] sm:$0xff]
        %v1103 = vld [vmem:[#allocation4 + $0x1a0] sm:$0xff]
        %v1104 = vld [vmem:[#allocation4 + $0x1a8] sm:$0xff]
        %v1105 = vld [vmem:[#allocation4 + $0x1b0] sm:$0xff]
        %v1106 = vld [vmem:[#allocation4 + $0x1b8] sm:$0xff]
        %v1107 = vld [vmem:[#allocation4 + $0x1c0] sm:$0xff]
        %v1108 = vld [vmem:[#allocation4 + $0x1c8] sm:$0xff]
        %v1109 = vld [vmem:[#allocation4 + $0x1d0] sm:$0xff]
        %v1110 = vld [vmem:[#allocation4 + $0x1d8] sm:$0xff]
        %v1111 = vld [vmem:[#allocation4 + $0x1e0] sm:$0xff]
        %v1112 = vld [vmem:[#allocation4 + $0x1e8] sm:$0xff]
        %v1113 = vld [vmem:[#allocation4 + $0x1f0] sm:$0xff]
        %v1114 = vld [vmem:[#allocation4 + $0x1f8] sm:$0xff]
        %v1115 = vld [vmem:[#allocation4 + $0x200] sm:$0xff]
        %v1116 = vld [vmem:[#allocation4 + $0x208] sm:$0xff]
        %v1117 = vld [vmem:[#allocation4 + $0x210] sm:$0xff]
        %v1118 = vld [vmem:[#allocation4 + $0x218] sm:$0xff]
        %v1119 = vld [vmem:[#allocation4 + $0x220] sm:$0xff]
        %v1120 = vld [vmem:[#allocation4 + $0x228] sm:$0xff]
        %v1121 = vld [vmem:[#allocation4 + $0x230] sm:$0xff]
        %v1122 = vld [vmem:[#allocation4 + $0x238] sm:$0xff]
        %v1123 = vld [vmem:[#allocation4 + $0x240] sm:$0xff]
        %v1124 = vld [vmem:[#allocation4 + $0x248] sm:$0xff]
        %v1125 = vld [vmem:[#allocation4 + $0x250] sm:$0xff]
        %v1126 = vld [vmem:[#allocation4 + $0x258] sm:$0xff]
        %v1127 = vld [vmem:[#allocation4 + $0x260] sm:$0xff]
        %v1128 = vld [vmem:[#allocation4 + $0x268] sm:$0xff]
        %v1129 = vld [vmem:[#allocation4 + $0x270] sm:$0xff]
        %v1130 = vld [vmem:[#allocation4 + $0x278] sm:$0xff]
        %v1131 = vld [vmem:[#allocation4 + $0x280] sm:$0xff]
        %v1132 = vld [vmem:[#allocation4 + $0x288] sm:$0xff]
        %v1133 = vld [vmem:[#allocation4 + $0x290] sm:$0xff]
        %v1134 = vld [vmem:[#allocation4 + $0x298] sm:$0xff]
        %v1135 = vld [vmem:[#allocation4 + $0x2a0] sm:$0xff]
        %v1136 = vld [vmem:[#allocation4 + $0x2a8] sm:$0xff]
        %v1137 = vld [vmem:[#allocation4 + $0x2b0] sm:$0xff]
        %v1138 = vld [vmem:[#allocation4 + $0x2b8] sm:$0xff]
        %v1139 = vld [vmem:[#allocation4 + $0x2c0] sm:$0xff]
        %v1140 = vld [vmem:[#allocation4 + $0x2c8] sm:$0xff]
        %v1141 = vld [vmem:[#allocation4 + $0x2d0] sm:$0xff]
        %v1142 = vld [vmem:[#allocation4 + $0x2d8] sm:$0xff]
        %v1143 = vld [vmem:[#allocation4 + $0x2e0] sm:$0xff]
        %v1144 = vld [vmem:[#allocation4 + $0x2e8] sm:$0xff]
        %v1145 = vld [vmem:[#allocation4 + $0x2f0] sm:$0xff]
        %v1146 = vld [vmem:[#allocation4 + $0x2f8] sm:$0xff]
        %v1147 = vld [vmem:[#allocation4 + $0x300] sm:$0xff]
        %v1148 = vld [vmem:[#allocation4 + $0x308] sm:$0xff]
        %v1149 = vld [vmem:[#allocation4 + $0x310] sm:$0xff]
        %v1150 = vld [vmem:[#allocation4 + $0x318] sm:$0xff]
        %v1151 = vld [vmem:[#allocation4 + $0x320] sm:$0xff]
        %v1152 = vld [vmem:[#allocation4 + $0x328] sm:$0xff]
        %v1153 = vld [vmem:[#allocation4 + $0x330] sm:$0xff]
        %v1154 = vld [vmem:[#allocation4 + $0x338] sm:$0xff]
        %v1155 = vld [vmem:[#allocation4 + $0x340] sm:$0xff]
        %v1156 = vld [vmem:[#allocation4 + $0x348] sm:$0xff]
        %v1157 = vld [vmem:[#allocation4 + $0x350] sm:$0xff]
        %v1158 = vld [vmem:[#allocation4 + $0x358] sm:$0xff]
        %v1159 = vld [vmem:[#allocation4 + $0x360] sm:$0xff]
        %v1160 = vld [vmem:[#allocation4 + $0x368] sm:$0xff]
        %v1161 = vld [vmem:[#allocation4 + $0x370] sm:$0xff]
        %v1162 = vld [vmem:[#allocation4 + $0x378] sm:$0xff]
        %v1163 = vld [vmem:[#allocation4 + $0x380] sm:$0xff]
        %v1164 = vld [vmem:[#allocation4 + $0x388] sm:$0xff]
        %v1165 = vld [vmem:[#allocation4 + $0x390] sm:$0xff]
        %v1166 = vld [vmem:[#allocation4 + $0x398] sm:$0xff]
        %v1167 = vld [vmem:[#allocation4 + $0x3a0] sm:$0xff]
        %v1168 = vld [vmem:[#allocation4 + $0x3a8] sm:$0xff]
        %v1169 = vld [vmem:[#allocation4 + $0x3b0] sm:$0xff]
        %v1170 = vld [vmem:[#allocation4 + $0x3b8] sm:$0xff]
        %v1171 = vld [vmem:[#allocation4 + $0x3c0] sm:$0xff]
        %v1172 = vld [vmem:[#allocation4 + $0x3c8] sm:$0xff]
        %v1173 = vld [vmem:[#allocation4 + $0x3d0] sm:$0xff]
        %v1174 = vld [vmem:[#allocation4 + $0x3d8] sm:$0xff]
        %v1175 = vld [vmem:[#allocation4 + $0x3e0] sm:$0xff]
        %v1176 = vld [vmem:[#allocation4 + $0x3e8] sm:$0xff]
        %v1177 = vld [vmem:[#allocation4 + $0x3f0] sm:$0xff]
        %v1178 = vld [vmem:[#allocation4 + $0x3f8] sm:$0xff]
        %v1307 = vunpack.c.l.b16 %v1051
        %v1308 = vunpack.c.h.b16 %v1051
        %v1309 = vunpack.c.l.b16 %v1052
        %v1310 = vunpack.c.h.b16 %v1052
        %v1311 = vunpack.c.l.b16 %v1053
        %v1312 = vunpack.c.h.b16 %v1053
        %v1313 = vunpack.c.l.b16 %v1054
        %v1314 = vunpack.c.h.b16 %v1054
        %v1315 = vunpack.c.l.b16 %v1055
        %v1316 = vunpack.c.h.b16 %v1055
        %v1317 = vunpack.c.l.b16 %v1056
        %v1318 = vunpack.c.h.b16 %v1056
        %v1319 = vunpack.c.l.b16 %v1057
        %v1320 = vunpack.c.h.b16 %v1057
        %v1321 = vunpack.c.l.b16 %v1058
        %v1322 = vunpack.c.h.b16 %v1058
        %v1323 = vunpack.c.l.b16 %v1059
        %v1324 = vunpack.c.h.b16 %v1059
        %v1325 = vunpack.c.l.b16 %v1060
        %v1326 = vunpack.c.h.b16 %v1060
        %v1327 = vunpack.c.l.b16 %v1061
        %v1328 = vunpack.c.h.b16 %v1061
        %v1329 = vunpack.c.l.b16 %v1062
        %v1330 = vunpack.c.h.b16 %v1062
        %v1331 = vunpack.c.l.b16 %v1063
        %v1332 = vunpack.c.h.b16 %v1063
        %v1333 = vunpack.c.l.b16 %v1064
        %v1334 = vunpack.c.h.b16 %v1064
        %v1335 = vunpack.c.l.b16 %v1065
        %v1336 = vunpack.c.h.b16 %v1065
        %v1337 = vunpack.c.l.b16 %v1066
        %v1338 = vunpack.c.h.b16 %v1066
        %v1339 = vunpack.c.l.b16 %v1067
        %v1340 = vunpack.c.h.b16 %v1067
        %v1341 = vunpack.c.l.b16 %v1068
        %v1342 = vunpack.c.h.b16 %v1068
        %v1343 = vunpack.c.l.b16 %v1069
        %v1344 = vunpack.c.h.b16 %v1069
        %v1345 = vunpack.c.l.b16 %v1070
        %v1346 = vunpack.c.h.b16 %v1070
        %v1347 = vunpack.c.l.b16 %v1071
        %v1348 = vunpack.c.h.b16 %v1071
        %v1349 = vunpack.c.l.b16 %v1072
        %v1350 = vunpack.c.h.b16 %v1072
        %v1351 = vunpack.c.l.b16 %v1073
        %v1352 = vunpack.c.h.b16 %v1073
        %v1353 = vunpack.c.l.b16 %v1074
        %v1354 = vunpack.c.h.b16 %v1074
        %v1355 = vunpack.c.l.b16 %v1075
        %v1356 = vunpack.c.h.b16 %v1075
        %v1357 = vunpack.c.l.b16 %v1076
        %v1358 = vunpack.c.h.b16 %v1076
        %v1359 = vunpack.c.l.b16 %v1077
        %v1360 = vunpack.c.h.b16 %v1077
        %v1361 = vunpack.c.l.b16 %v1078
        %v1362 = vunpack.c.h.b16 %v1078
        %v1363 = vunpack.c.l.b16 %v1079
        %v1364 = vunpack.c.h.b16 %v1079
        %v1365 = vunpack.c.l.b16 %v1080
        %v1366 = vunpack.c.h.b16 %v1080
        %v1367 = vunpack.c.l.b16 %v1081
        %v1368 = vunpack.c.h.b16 %v1081
        %v1369 = vunpack.c.l.b16 %v1082
        %v1370 = vunpack.c.h.b16 %v1082
        %v1371 = vunpack.c.l.b16 %v1083
        %v1372 = vunpack.c.h.b16 %v1083
        %v1373 = vunpack.c.l.b16 %v1084
        %v1374 = vunpack.c.h.b16 %v1084
        %v1375 = vunpack.c.l.b16 %v1085
        %v1376 = vunpack.c.h.b16 %v1085
        %v1377 = vunpack.c.l.b16 %v1086
        %v1378 = vunpack.c.h.b16 %v1086
        %v1379 = vunpack.c.l.b16 %v1087
        %v1380 = vunpack.c.h.b16 %v1087
        %v1381 = vunpack.c.l.b16 %v1088
        %v1382 = vunpack.c.h.b16 %v1088
        %v1383 = vunpack.c.l.b16 %v1089
        %v1384 = vunpack.c.h.b16 %v1089
        %v1385 = vunpack.c.l.b16 %v1090
        %v1386 = vunpack.c.h.b16 %v1090
        %v1387 = vunpack.c.l.b16 %v1091
        %v1388 = vunpack.c.h.b16 %v1091
        %v1389 = vunpack.c.l.b16 %v1092
        %v1390 = vunpack.c.h.b16 %v1092
        %v1391 = vunpack.c.l.b16 %v1093
        %v1392 = vunpack.c.h.b16 %v1093
        %v1393 = vunpack.c.l.b16 %v1094
        %v1394 = vunpack.c.h.b16 %v1094
        %v1395 = vunpack.c.l.b16 %v1095
        %v1396 = vunpack.c.h.b16 %v1095
        %v1397 = vunpack.c.l.b16 %v1096
        %v1398 = vunpack.c.h.b16 %v1096
        %v1399 = vunpack.c.l.b16 %v1097
        %v1400 = vunpack.c.h.b16 %v1097
        %v1401 = vunpack.c.l.b16 %v1098
        %v1402 = vunpack.c.h.b16 %v1098
        %v1403 = vunpack.c.l.b16 %v1099
        %v1404 = vunpack.c.h.b16 %v1099
        %v1405 = vunpack.c.l.b16 %v1100
        %v1406 = vunpack.c.h.b16 %v1100
        %v1407 = vunpack.c.l.b16 %v1101
        %v1408 = vunpack.c.h.b16 %v1101
        %v1409 = vunpack.c.l.b16 %v1102
        %v1410 = vunpack.c.h.b16 %v1102
        %v1411 = vunpack.c.l.b16 %v1103
        %v1412 = vunpack.c.h.b16 %v1103
        %v1413 = vunpack.c.l.b16 %v1104
        %v1414 = vunpack.c.h.b16 %v1104
        %v1415 = vunpack.c.l.b16 %v1105
        %v1416 = vunpack.c.h.b16 %v1105
        %v1417 = vunpack.c.l.b16 %v1106
        %v1418 = vunpack.c.h.b16 %v1106
        %v1419 = vunpack.c.l.b16 %v1107
        %v1420 = vunpack.c.h.b16 %v1107
        %v1421 = vunpack.c.l.b16 %v1108
        %v1422 = vunpack.c.h.b16 %v1108
        %v1423 = vunpack.c.l.b16 %v1109
        %v1424 = vunpack.c.h.b16 %v1109
        %v1425 = vunpack.c.l.b16 %v1110
        %v1426 = vunpack.c.h.b16 %v1110
        %v1427 = vunpack.c.l.b16 %v1111
        %v1428 = vunpack.c.h.b16 %v1111
        %v1429 = vunpack.c.l.b16 %v1112
        %v1430 = vunpack.c.h.b16 %v1112
        %v1431 = vunpack.c.l.b16 %v1113
        %v1432 = vunpack.c.h.b16 %v1113
        %v1433 = vunpack.c.l.b16 %v1114
        %v1434 = vunpack.c.h.b16 %v1114
        %v1435 = vunpack.c.l.b16 %v1115
        %v1436 = vunpack.c.h.b16 %v1115
        %v1437 = vunpack.c.l.b16 %v1116
        %v1438 = vunpack.c.h.b16 %v1116
        %v1439 = vunpack.c.l.b16 %v1117
        %v1440 = vunpack.c.h.b16 %v1117
        %v1441 = vunpack.c.l.b16 %v1118
        %v1442 = vunpack.c.h.b16 %v1118
        %v1443 = vunpack.c.l.b16 %v1119
        %v1444 = vunpack.c.h.b16 %v1119
        %v1445 = vunpack.c.l.b16 %v1120
        %v1446 = vunpack.c.h.b16 %v1120
        %v1447 = vunpack.c.l.b16 %v1121
        %v1448 = vunpack.c.h.b16 %v1121
        %v1449 = vunpack.c.l.b16 %v1122
        %v1450 = vunpack.c.h.b16 %v1122
        %v1451 = vunpack.c.l.b16 %v1123
        %v1452 = vunpack.c.h.b16 %v1123
        %v1453 = vunpack.c.l.b16 %v1124
        %v1454 = vunpack.c.h.b16 %v1124
        %v1455 = vunpack.c.l.b16 %v1125
        %v1456 = vunpack.c.h.b16 %v1125
        %v1457 = vunpack.c.l.b16 %v1126
        %v1458 = vunpack.c.h.b16 %v1126
        %v1459 = vunpack.c.l.b16 %v1127
        %v1460 = vunpack.c.h.b16 %v1127
        %v1461 = vunpack.c.l.b16 %v1128
        %v1462 = vunpack.c.h.b16 %v1128
        %v1463 = vunpack.c.l.b16 %v1129
        %v1464 = vunpack.c.h.b16 %v1129
        %v1465 = vunpack.c.l.b16 %v1130
        %v1466 = vunpack.c.h.b16 %v1130
        %v1467 = vunpack.c.l.b16 %v1131
        %v1468 = vunpack.c.h.b16 %v1131
        %v1469 = vunpack.c.l.b16 %v1132
        %v1470 = vunpack.c.h.b16 %v1132
        %v1471 = vunpack.c.l.b16 %v1133
        %v1472 = vunpack.c.h.b16 %v1133
        %v1473 = vunpack.c.l.b16 %v1134
        %v1474 = vunpack.c.h.b16 %v1134
        %v1475 = vunpack.c.l.b16 %v1135
        %v1476 = vunpack.c.h.b16 %v1135
        %v1477 = vunpack.c.l.b16 %v1136
        %v1478 = vunpack.c.h.b16 %v1136
        %v1479 = vunpack.c.l.b16 %v1137
        %v1480 = vunpack.c.h.b16 %v1137
        %v1481 = vunpack.c.l.b16 %v1138
        %v1482 = vunpack.c.h.b16 %v1138
        %v1483 = vunpack.c.l.b16 %v1139
        %v1484 = vunpack.c.h.b16 %v1139
        %v1485 = vunpack.c.l.b16 %v1140
        %v1486 = vunpack.c.h.b16 %v1140
        %v1487 = vunpack.c.l.b16 %v1141
        %v1488 = vunpack.c.h.b16 %v1141
        %v1489 = vunpack.c.l.b16 %v1142
        %v1490 = vunpack.c.h.b16 %v1142
        %v1491 = vunpack.c.l.b16 %v1143
        %v1492 = vunpack.c.h.b16 %v1143
        %v1493 = vunpack.c.l.b16 %v1144
        %v1494 = vunpack.c.h.b16 %v1144
        %v1495 = vunpack.c.l.b16 %v1145
        %v1496 = vunpack.c.h.b16 %v1145
        %v1497 = vunpack.c.l.b16 %v1146
        %v1498 = vunpack.c.h.b16 %v1146
        %v1499 = vunpack.c.l.b16 %v1147
        %v1500 = vunpack.c.h.b16 %v1147
        %v1501 = vunpack.c.l.b16 %v1148
        %v1502 = vunpack.c.h.b16 %v1148
        %v1503 = vunpack.c.l.b16 %v1149
        %v1504 = vunpack.c.h.b16 %v1149
        %v1505 = vunpack.c.l.b16 %v1150
        %v1506 = vunpack.c.h.b16 %v1150
        %v1507 = vunpack.c.l.b16 %v1151
        %v1508 = vunpack.c.h.b16 %v1151
        %v1509 = vunpack.c.l.b16 %v1152
        %v1510 = vunpack.c.h.b16 %v1152
        %v1511 = vunpack.c.l.b16 %v1153
        %v1512 = vunpack.c.h.b16 %v1153
        %v1513 = vunpack.c.l.b16 %v1154
        %v1514 = vunpack.c.h.b16 %v1154
        %v1515 = vunpack.c.l.b16 %v1155
        %v1516 = vunpack.c.h.b16 %v1155
        %v1517 = vunpack.c.l.b16 %v1156
        %v1518 = vunpack.c.h.b16 %v1156
        %v1519 = vunpack.c.l.b16 %v1157
        %v1520 = vunpack.c.h.b16 %v1157
        %v1521 = vunpack.c.l.b16 %v1158
        %v1522 = vunpack.c.h.b16 %v1158
        %v1523 = vunpack.c.l.b16 %v1159
        %v1524 = vunpack.c.h.b16 %v1159
        %v1525 = vunpack.c.l.b16 %v1160
        %v1526 = vunpack.c.h.b16 %v1160
        %v1527 = vunpack.c.l.b16 %v1161
        %v1528 = vunpack.c.h.b16 %v1161
        %v1529 = vunpack.c.l.b16 %v1162
        %v1530 = vunpack.c.h.b16 %v1162
        %v1531 = vunpack.c.l.b16 %v1163
        %v1532 = vunpack.c.h.b16 %v1163
        %v1533 = vunpack.c.l.b16 %v1164
        %v1534 = vunpack.c.h.b16 %v1164
        %v1535 = vunpack.c.l.b16 %v1165
        %v1536 = vunpack.c.h.b16 %v1165
        %v1537 = vunpack.c.l.b16 %v1166
        %v1538 = vunpack.c.h.b16 %v1166
        %v1539 = vunpack.c.l.b16 %v1167
        %v1540 = vunpack.c.h.b16 %v1167
        %v1541 = vunpack.c.l.b16 %v1168
        %v1542 = vunpack.c.h.b16 %v1168
        %v1543 = vunpack.c.l.b16 %v1169
        %v1544 = vunpack.c.h.b16 %v1169
        %v1545 = vunpack.c.l.b16 %v1170
        %v1546 = vunpack.c.h.b16 %v1170
        %v1547 = vunpack.c.l.b16 %v1171
        %v1548 = vunpack.c.h.b16 %v1171
        %v1549 = vunpack.c.l.b16 %v1172
        %v1550 = vunpack.c.h.b16 %v1172
        %v1551 = vunpack.c.l.b16 %v1173
        %v1552 = vunpack.c.h.b16 %v1173
        %v1553 = vunpack.c.l.b16 %v1174
        %v1554 = vunpack.c.h.b16 %v1174
        %v1555 = vunpack.c.l.b16 %v1175
        %v1556 = vunpack.c.h.b16 %v1175
        %v1557 = vunpack.c.l.b16 %v1176
        %v1558 = vunpack.c.h.b16 %v1176
        %v1559 = vunpack.c.l.b16 %v1177
        %v1560 = vunpack.c.h.b16 %v1177
        %v1561 = vunpack.c.l.b16 %v1178
        %v1562 = vunpack.c.h.b16 %v1178
        %v1563 = vpack.c.b16 %v1311, %v1307
        %v1564 = vpack.c.b16 %v1312, %v1308
        %v1565 = vpack.c.b16 %v1313, %v1309
        %v1566 = vpack.c.b16 %v1314, %v1310
        %v1567 = vpack.c.b16 %v1319, %v1315
        %v1568 = vpack.c.b16 %v1320, %v1316
        %v1569 = vpack.c.b16 %v1321, %v1317
        %v1570 = vpack.c.b16 %v1322, %v1318
        %v1571 = vpack.c.b16 %v1327, %v1323
        %v1572 = vpack.c.b16 %v1328, %v1324
        %v1573 = vpack.c.b16 %v1329, %v1325
        %v1574 = vpack.c.b16 %v1330, %v1326
        %v1575 = vpack.c.b16 %v1335, %v1331
        %v1576 = vpack.c.b16 %v1336, %v1332
        %v1577 = vpack.c.b16 %v1337, %v1333
        %v1578 = vpack.c.b16 %v1338, %v1334
        %v1579 = vpack.c.b16 %v1343, %v1339
        %v1580 = vpack.c.b16 %v1344, %v1340
        %v1581 = vpack.c.b16 %v1345, %v1341
        %v1582 = vpack.c.b16 %v1346, %v1342
        %v1583 = vpack.c.b16 %v1351, %v1347
        %v1584 = vpack.c.b16 %v1352, %v1348
        %v1585 = vpack.c.b16 %v1353, %v1349
        %v1586 = vpack.c.b16 %v1354, %v1350
        %v1587 = vpack.c.b16 %v1359, %v1355
        %v1588 = vpack.c.b16 %v1360, %v1356
        %v1589 = vpack.c.b16 %v1361, %v1357
        %v1590 = vpack.c.b16 %v1362, %v1358
        %v1591 = vpack.c.b16 %v1367, %v1363
        %v1592 = vpack.c.b16 %v1368, %v1364
        %v1593 = vpack.c.b16 %v1369, %v1365
        %v1594 = vpack.c.b16 %v1370, %v1366
        %v1595 = vpack.c.b16 %v1375, %v1371
        %v1596 = vpack.c.b16 %v1376, %v1372
        %v1597 = vpack.c.b16 %v1377, %v1373
        %v1598 = vpack.c.b16 %v1378, %v1374
        %v1599 = vpack.c.b16 %v1383, %v1379
        %v1600 = vpack.c.b16 %v1384, %v1380
        %v1601 = vpack.c.b16 %v1385, %v1381
        %v1602 = vpack.c.b16 %v1386, %v1382
        %v1603 = vpack.c.b16 %v1391, %v1387
        %v1604 = vpack.c.b16 %v1392, %v1388
        %v1605 = vpack.c.b16 %v1393, %v1389
        %v1606 = vpack.c.b16 %v1394, %v1390
        %v1607 = vpack.c.b16 %v1399, %v1395
        %v1608 = vpack.c.b16 %v1400, %v1396
        %v1609 = vpack.c.b16 %v1401, %v1397
        %v1610 = vpack.c.b16 %v1402, %v1398
        %v1611 = vpack.c.b16 %v1407, %v1403
        %v1612 = vpack.c.b16 %v1408, %v1404
        %v1613 = vpack.c.b16 %v1409, %v1405
        %v1614 = vpack.c.b16 %v1410, %v1406
        %v1615 = vpack.c.b16 %v1415, %v1411
        %v1616 = vpack.c.b16 %v1416, %v1412
        %v1617 = vpack.c.b16 %v1417, %v1413
        %v1618 = vpack.c.b16 %v1418, %v1414
        %v1619 = vpack.c.b16 %v1423, %v1419
        %v1620 = vpack.c.b16 %v1424, %v1420
        %v1621 = vpack.c.b16 %v1425, %v1421
        %v1622 = vpack.c.b16 %v1426, %v1422
        %v1623 = vpack.c.b16 %v1431, %v1427
        %v1624 = vpack.c.b16 %v1432, %v1428
        %v1625 = vpack.c.b16 %v1433, %v1429
        %v1626 = vpack.c.b16 %v1434, %v1430
        %v1627 = vpack.c.b16 %v1439, %v1435
        %v1628 = vpack.c.b16 %v1440, %v1436
        %v1629 = vpack.c.b16 %v1441, %v1437
        %v1630 = vpack.c.b16 %v1442, %v1438
        %v1631 = vpack.c.b16 %v1447, %v1443
        %v1632 = vpack.c.b16 %v1448, %v1444
        %v1633 = vpack.c.b16 %v1449, %v1445
        %v1634 = vpack.c.b16 %v1450, %v1446
        %v1635 = vpack.c.b16 %v1455, %v1451
        %v1636 = vpack.c.b16 %v1456, %v1452
        %v1637 = vpack.c.b16 %v1457, %v1453
        %v1638 = vpack.c.b16 %v1458, %v1454
        %v1639 = vpack.c.b16 %v1463, %v1459
        %v1640 = vpack.c.b16 %v1464, %v1460
        %v1641 = vpack.c.b16 %v1465, %v1461
        %v1642 = vpack.c.b16 %v1466, %v1462
        %v1643 = vpack.c.b16 %v1471, %v1467
        %v1644 = vpack.c.b16 %v1472, %v1468
        %v1645 = vpack.c.b16 %v1473, %v1469
        %v1646 = vpack.c.b16 %v1474, %v1470
        %v1647 = vpack.c.b16 %v1479, %v1475
        %v1648 = vpack.c.b16 %v1480, %v1476
        %v1649 = vpack.c.b16 %v1481, %v1477
        %v1650 = vpack.c.b16 %v1482, %v1478
        %v1651 = vpack.c.b16 %v1487, %v1483
        %v1652 = vpack.c.b16 %v1488, %v1484
        %v1653 = vpack.c.b16 %v1489, %v1485
        %v1654 = vpack.c.b16 %v1490, %v1486
        %v1655 = vpack.c.b16 %v1495, %v1491
        %v1656 = vpack.c.b16 %v1496, %v1492
        %v1657 = vpack.c.b16 %v1497, %v1493
        %v1658 = vpack.c.b16 %v1498, %v1494
        %v1659 = vpack.c.b16 %v1503, %v1499
        %v1660 = vpack.c.b16 %v1504, %v1500
        %v1661 = vpack.c.b16 %v1505, %v1501
        %v1662 = vpack.c.b16 %v1506, %v1502
        %v1663 = vpack.c.b16 %v1511, %v1507
        %v1664 = vpack.c.b16 %v1512, %v1508
        %v1665 = vpack.c.b16 %v1513, %v1509
        %v1666 = vpack.c.b16 %v1514, %v1510
        %v1667 = vpack.c.b16 %v1519, %v1515
        %v1668 = vpack.c.b16 %v1520, %v1516
        %v1669 = vpack.c.b16 %v1521, %v1517
        %v1670 = vpack.c.b16 %v1522, %v1518
        %v1671 = vpack.c.b16 %v1527, %v1523
        %v1672 = vpack.c.b16 %v1528, %v1524
        %v1673 = vpack.c.b16 %v1529, %v1525
        %v1674 = vpack.c.b16 %v1530, %v1526
        %v1675 = vpack.c.b16 %v1535, %v1531
        %v1676 = vpack.c.b16 %v1536, %v1532
        %v1677 = vpack.c.b16 %v1537, %v1533
        %v1678 = vpack.c.b16 %v1538, %v1534
        %v1679 = vpack.c.b16 %v1543, %v1539
        %v1680 = vpack.c.b16 %v1544, %v1540
        %v1681 = vpack.c.b16 %v1545, %v1541
        %v1682 = vpack.c.b16 %v1546, %v1542
        %v1683 = vpack.c.b16 %v1551, %v1547
        %v1684 = vpack.c.b16 %v1552, %v1548
        %v1685 = vpack.c.b16 %v1553, %v1549
        %v1686 = vpack.c.b16 %v1554, %v1550
        %v1687 = vpack.c.b16 %v1559, %v1555
        %v1688 = vpack.c.b16 %v1560, %v1556
        %v1689 = vpack.c.b16 %v1561, %v1557
        %v1690 = vpack.c.b16 %v1562, %v1558
        %1819 = vmatprep.subr.bf16.mxu0 %v1564
        %1820 = vmatpush1.bf16.msra.mxu0 %v1563
        %1821 = vmatprep.subr.bf16.mxu0 %v1568
        %1822 = vmatpush1.bf16.msra.mxu0 %v1567
        %1823 = vmatprep.subr.bf16.mxu0 %v1572
        %1824 = vmatpush1.bf16.msra.mxu0 %v1571
        %1825 = vmatprep.subr.bf16.mxu0 %v1576
        %1826 = vmatpush1.bf16.msra.mxu0 %v1575
        %1827 = vmatprep.subr.bf16.mxu0 %v1580
        %1828 = vmatpush1.bf16.msra.mxu0 %v1579
        %1829 = vmatprep.subr.bf16.mxu0 %v1584
        %1830 = vmatpush1.bf16.msra.mxu0 %v1583
        %1831 = vmatprep.subr.bf16.mxu0 %v1588
        %1832 = vmatpush1.bf16.msra.mxu0 %v1587
        %1833 = vmatprep.subr.bf16.mxu0 %v1592
        %1834 = vmatpush1.bf16.msra.mxu0 %v1591
        %1835 = vmatprep.subr.bf16.mxu0 %v1596
        %1836 = vmatpush1.bf16.msra.mxu0 %v1595
        %1837 = vmatprep.subr.bf16.mxu0 %v1600
        %1838 = vmatpush1.bf16.msra.mxu0 %v1599
        %1839 = vmatprep.subr.bf16.mxu0 %v1604
        %1840 = vmatpush1.bf16.msra.mxu0 %v1603
        %1841 = vmatprep.subr.bf16.mxu0 %v1608
        %1842 = vmatpush1.bf16.msra.mxu0 %v1607
        %1843 = vmatprep.subr.bf16.mxu0 %v1612
        %1844 = vmatpush1.bf16.msra.mxu0 %v1611
        %1845 = vmatprep.subr.bf16.mxu0 %v1616
        %1846 = vmatpush1.bf16.msra.mxu0 %v1615
        %1847 = vmatprep.subr.bf16.mxu0 %v1620
        %1848 = vmatpush1.bf16.msra.mxu0 %v1619
        %1849 = vmatprep.subr.bf16.mxu0 %v1624
        %1850 = vmatpush1.bf16.msra.mxu0 %v1623
        %1851 = vmatprep.mubr.bf16.mxu0 %v1048
        %1852 = vmatmul.mubr.bf16.gmra.mrb[0].mxu0 %v1047
        %v1853 = vpop.f32.mrb[0].mxu0
        %v1854 = vadd.f32 0.0, %v1853
        %v1855 = vpop.f32.mrb[0].mxu0
        %v1856 = vadd.f32 0.0, %v1855
        %v1857 = vpop.f32.mrb[0].mxu0
        %v1858 = vadd.f32 0.0, %v1857
        %v1859 = vpop.f32.mrb[0].mxu0
        %v1860 = vadd.f32 0.0, %v1859
        %1861 = vdwg.mxu0
        %1862 = vmatprep.subr.bf16.mxu0 %v1628
        %1863 = vmatpush1.bf16.msra.mxu0 %v1627
        %1864 = vmatprep.subr.bf16.mxu0 %v1632
        %1865 = vmatpush1.bf16.msra.mxu0 %v1631
        %1866 = vmatprep.subr.bf16.mxu0 %v1636
        %1867 = vmatpush1.bf16.msra.mxu0 %v1635
        %1868 = vmatprep.subr.bf16.mxu0 %v1640
        %1869 = vmatpush1.bf16.msra.mxu0 %v1639
        %1870 = vmatprep.subr.bf16.mxu0 %v1644
        %1871 = vmatpush1.bf16.msra.mxu0 %v1643
        %1872 = vmatprep.subr.bf16.mxu0 %v1648
        %1873 = vmatpush1.bf16.msra.mxu0 %v1647
        %1874 = vmatprep.subr.bf16.mxu0 %v1652
        %1875 = vmatpush1.bf16.msra.mxu0 %v1651
        %1876 = vmatprep.subr.bf16.mxu0 %v1656
        %1877 = vmatpush1.bf16.msra.mxu0 %v1655
        %1878 = vmatprep.subr.bf16.mxu0 %v1660
        %1879 = vmatpush1.bf16.msra.mxu0 %v1659
        %1880 = vmatprep.subr.bf16.mxu0 %v1664
        %1881 = vmatpush1.bf16.msra.mxu0 %v1663
        %1882 = vmatprep.subr.bf16.mxu0 %v1668
        %1883 = vmatpush1.bf16.msra.mxu0 %v1667
        %1884 = vmatprep.subr.bf16.mxu0 %v1672
        %1885 = vmatpush1.bf16.msra.mxu0 %v1671
        %1886 = vmatprep.subr.bf16.mxu0 %v1676
        %1887 = vmatpush1.bf16.msra.mxu0 %v1675
        %1888 = vmatprep.subr.bf16.mxu0 %v1680
        %1889 = vmatpush1.bf16.msra.mxu0 %v1679
        %1890 = vmatprep.subr.bf16.mxu0 %v1684
        %1891 = vmatpush1.bf16.msra.mxu0 %v1683
        %1892 = vmatprep.subr.bf16.mxu0 %v1688
        %1893 = vmatpush1.bf16.msra.mxu0 %v1687
        %1894 = vmatprep.mubr.bf16.mxu0 %v1050
        %1895 = vmatmul.mubr.bf16.gmra.mrb[0].mxu0 %v1049
        %v1896 = vpop.f32.mrb[0].mxu0
        %v1897 = vadd.f32 %v1854, %v1896
        %v1898 = vpop.f32.mrb[0].mxu0
        %v1899 = vadd.f32 %v1856, %v1898
        %v1900 = vpop.f32.mrb[0].mxu0
        %v1901 = vadd.f32 %v1858, %v1900
        %v1902 = vpop.f32.mrb[0].mxu0
        %v1903 = vadd.f32 %v1860, %v1902
        %1904 = vdwg.mxu0
        %1905 = vmatprep.subr.bf16.mxu0 %v1566
        %1906 = vmatpush1.bf16.msra.mxu0 %v1565
        %1907 = vmatprep.subr.bf16.mxu0 %v1570
        %1908 = vmatpush1.bf16.msra.mxu0 %v1569
        %1909 = vmatprep.subr.bf16.mxu0 %v1574
        %1910 = vmatpush1.bf16.msra.mxu0 %v1573
        %1911 = vmatprep.subr.bf16.mxu0 %v1578
        %1912 = vmatpush1.bf16.msra.mxu0 %v1577
        %1913 = vmatprep.subr.bf16.mxu0 %v1582
        %1914 = vmatpush1.bf16.msra.mxu0 %v1581
        %1915 = vmatprep.subr.bf16.mxu0 %v1586
        %1916 = vmatpush1.bf16.msra.mxu0 %v1585
        %1917 = vmatprep.subr.bf16.mxu0 %v1590
        %1918 = vmatpush1.bf16.msra.mxu0 %v1589
        %1919 = vmatprep.subr.bf16.mxu0 %v1594
        %1920 = vmatpush1.bf16.msra.mxu0 %v1593
        %1921 = vmatprep.subr.bf16.mxu0 %v1598
        %1922 = vmatpush1.bf16.msra.mxu0 %v1597
        %1923 = vmatprep.subr.bf16.mxu0 %v1602
        %1924 = vmatpush1.bf16.msra.mxu0 %v1601
        %1925 = vmatprep.subr.bf16.mxu0 %v1606
        %1926 = vmatpush1.bf16.msra.mxu0 %v1605
        %1927 = vmatprep.subr.bf16.mxu0 %v1610
        %1928 = vmatpush1.bf16.msra.mxu0 %v1609
        %1929 = vmatprep.subr.bf16.mxu0 %v1614
        %1930 = vmatpush1.bf16.msra.mxu0 %v1613
        %1931 = vmatprep.subr.bf16.mxu0 %v1618
        %1932 = vmatpush1.bf16.msra.mxu0 %v1617
        %1933 = vmatprep.subr.bf16.mxu0 %v1622
        %1934 = vmatpush1.bf16.msra.mxu0 %v1621
        %1935 = vmatprep.subr.bf16.mxu0 %v1626
        %1936 = vmatpush1.bf16.msra.mxu0 %v1625
        %1937 = vmatprep.mubr.bf16.mxu0 %v1048
        %1938 = vmatmul.mubr.bf16.gmra.mrb[0].mxu0 %v1047
        %v1939 = vpop.f32.mrb[0].mxu0
        %v1940 = vadd.f32 0.0, %v1939
        %v1941 = vpop.f32.mrb[0].mxu0
        %v1942 = vadd.f32 0.0, %v1941
        %v1943 = vpop.f32.mrb[0].mxu0
        %v1944 = vadd.f32 0.0, %v1943
        %v1945 = vpop.f32.mrb[0].mxu0
        %v1946 = vadd.f32 0.0, %v1945
        %1947 = vdwg.mxu0
        %1948 = vmatprep.subr.bf16.mxu0 %v1630
        %1949 = vmatpush1.bf16.msra.mxu0 %v1629
        %1950 = vmatprep.subr.bf16.mxu0 %v1634
        %1951 = vmatpush1.bf16.msra.mxu0 %v1633
        %1952 = vmatprep.subr.bf16.mxu0 %v1638
        %1953 = vmatpush1.bf16.msra.mxu0 %v1637
        %1954 = vmatprep.subr.bf16.mxu0 %v1642
        %1955 = vmatpush1.bf16.msra.mxu0 %v1641
        %1956 = vmatprep.subr.bf16.mxu0 %v1646
        %1957 = vmatpush1.bf16.msra.mxu0 %v1645
        %1958 = vmatprep.subr.bf16.mxu0 %v1650
        %1959 = vmatpush1.bf16.msra.mxu0 %v1649
        %1960 = vmatprep.subr.bf16.mxu0 %v1654
        %1961 = vmatpush1.bf16.msra.mxu0 %v1653
        %1962 = vmatprep.subr.bf16.mxu0 %v1658
        %1963 = vmatpush1.bf16.msra.mxu0 %v1657
        %1964 = vmatprep.subr.bf16.mxu0 %v1662
        %1965 = vmatpush1.bf16.msra.mxu0 %v1661
        %1966 = vmatprep.subr.bf16.mxu0 %v1666
        %1967 = vmatpush1.bf16.msra.mxu0 %v1665
        %1968 = vmatprep.subr.bf16.mxu0 %v1670
        %1969 = vmatpush1.bf16.msra.mxu0 %v1669
        %1970 = vmatprep.subr.bf16.mxu0 %v1674
        %1971 = vmatpush1.bf16.msra.mxu0 %v1673
        %1972 = vmatprep.subr.bf16.mxu0 %v1678
        %1973 = vmatpush1.bf16.msra.mxu0 %v1677
        %1974 = vmatprep.subr.bf16.mxu0 %v1682
        %1975 = vmatpush1.bf16.msra.mxu0 %v1681
        %1976 = vmatprep.subr.bf16.mxu0 %v1686
        %1977 = vmatpush1.bf16.msra.mxu0 %v1685
        %1978 = vmatprep.subr.bf16.mxu0 %v1690
        %1979 = vmatpush1.bf16.msra.mxu0 %v1689
        %1980 = vmatprep.mubr.bf16.mxu0 %v1050
        %1981 = vmatmul.mubr.bf16.gmra.mrb[0].mxu0 %v1049
        %v1982 = vpop.f32.mrb[0].mxu0
        %v1983 = vadd.f32 %v1940, %v1982
        %v1984 = vpop.f32.mrb[0].mxu0
        %v1985 = vadd.f32 %v1942, %v1984
        %v1986 = vpop.f32.mrb[0].mxu0
        %v1987 = vadd.f32 %v1944, %v1986
        %v1988 = vpop.f32.mrb[0].mxu0
        %v1989 = vadd.f32 %v1946, %v1988
        %1990 = vdwg.mxu0
        %s1991 = scalar_lea.vmem [#allocation10], 2
        %v1992 = vld [vmem:[%s1991] ss:$8 sm:$0xf]
        %s1993 = scalar_lea.vmem [#allocation10], 3
        %v1994 = vld [vmem:[%s1993] ss:$8 sm:$0xf]
        %v1995 = vrot.slane %v1897, 4
        %v1996 = vadd.f32 %v1897, %v1995
        %v1997 = vrot.slane %v1996, 2
        %v1998 = vadd.f32 %v1996, %v1997
        %v1999 = vrot.slane %v1998, 1
        %v2000 = vadd.f32 %v1998, %v1999
        %v2001 = vrot.slane %v1899, 4
        %v2002 = vadd.f32 %v1899, %v2001
        %v2003 = vrot.slane %v2002, 2
        %v2004 = vadd.f32 %v2002, %v2003
        %v2005 = vrot.slane %v2004, 1
        %v2006 = vadd.f32 %v2004, %v2005
        %v2007 = vrot.slane %v1983, 4
        %v2008 = vadd.f32 %v1983, %v2007
        %v2009 = vrot.slane %v2008, 2
        %v2010 = vadd.f32 %v2008, %v2009
        %v2011 = vrot.slane %v2010, 1
        %v2012 = vadd.f32 %v2010, %v2011
        %v2013 = vrot.slane %v1985, 4
        %v2014 = vadd.f32 %v1985, %v2013
        %v2015 = vrot.slane %v2014, 2
        %v2016 = vadd.f32 %v2014, %v2015
        %v2017 = vrot.slane %v2016, 1
        %v2018 = vadd.f32 %v2016, %v2017
        %v2019 = vrot.slane %v1901, 4
        %v2020 = vadd.f32 %v1901, %v2019
        %v2021 = vrot.slane %v2020, 2
        %v2022 = vadd.f32 %v2020, %v2021
        %v2023 = vrot.slane %v2022, 1
        %v2024 = vadd.f32 %v2022, %v2023
        %v2025 = vrot.slane %v1903, 4
        %v2026 = vadd.f32 %v1903, %v2025
        %v2027 = vrot.slane %v2026, 2
        %v2028 = vadd.f32 %v2026, %v2027
        %v2029 = vrot.slane %v2028, 1
        %v2030 = vadd.f32 %v2028, %v2029
        %v2031 = vrot.slane %v1987, 4
        %v2032 = vadd.f32 %v1987, %v2031
        %v2033 = vrot.slane %v2032, 2
        %v2034 = vadd.f32 %v2032, %v2033
        %v2035 = vrot.slane %v2034, 1
        %v2036 = vadd.f32 %v2034, %v2035
        %v2037 = vrot.slane %v1989, 4
        %v2038 = vadd.f32 %v1989, %v2037
        %v2039 = vrot.slane %v2038, 2
        %v2040 = vadd.f32 %v2038, %v2039
        %v2041 = vrot.slane %v2040, 1
        %v2042 = vadd.f32 %v2040, %v2041
        %v2043 = vmul.f32 %v2000, %v698
        %v2044 = vmul.f32 %v2006, %v698
        %v2045 = vmul.f32 %v2012, %v698
        %v2046 = vmul.f32 %v2018, %v698
        %v2047 = vmul.f32 %v2024, %v698
        %v2048 = vmul.f32 %v2030, %v698
        %v2049 = vmul.f32 %v2036, %v698
        %v2050 = vmul.f32 %v2042, %v698
        %v2051 = vmul.f32 %v1897, %v1897
        %v2052 = vmul.f32 %v1899, %v1899
        %v2053 = vmul.f32 %v1983, %v1983
        %v2054 = vmul.f32 %v1985, %v1985
        %v2055 = vmul.f32 %v1901, %v1901
        %v2056 = vmul.f32 %v1903, %v1903
        %v2057 = vmul.f32 %v1987, %v1987
        %v2058 = vmul.f32 %v1989, %v1989
        %v2059 = vrot.slane %v2051, 4
        %v2060 = vadd.f32 %v2051, %v2059
        %v2061 = vrot.slane %v2060, 2
        %v2062 = vadd.f32 %v2060, %v2061
        %v2063 = vrot.slane %v2062, 1
        %v2064 = vadd.f32 %v2062, %v2063
        %v2065 = vrot.slane %v2052, 4
        %v2066 = vadd.f32 %v2052, %v2065
        %v2067 = vrot.slane %v2066, 2
        %v2068 = vadd.f32 %v2066, %v2067
        %v2069 = vrot.slane %v2068, 1
        %v2070 = vadd.f32 %v2068, %v2069
        %v2071 = vrot.slane %v2053, 4
        %v2072 = vadd.f32 %v2053, %v2071
        %v2073 = vrot.slane %v2072, 2
        %v2074 = vadd.f32 %v2072, %v2073
        %v2075 = vrot.slane %v2074, 1
        %v2076 = vadd.f32 %v2074, %v2075
        %v2077 = vrot.slane %v2054, 4
        %v2078 = vadd.f32 %v2054, %v2077
        %v2079 = vrot.slane %v2078, 2
        %v2080 = vadd.f32 %v2078, %v2079
        %v2081 = vrot.slane %v2080, 1
        %v2082 = vadd.f32 %v2080, %v2081
        %v2083 = vrot.slane %v2055, 4
        %v2084 = vadd.f32 %v2055, %v2083
        %v2085 = vrot.slane %v2084, 2
        %v2086 = vadd.f32 %v2084, %v2085
        %v2087 = vrot.slane %v2086, 1
        %v2088 = vadd.f32 %v2086, %v2087
        %v2089 = vrot.slane %v2056, 4
        %v2090 = vadd.f32 %v2056, %v2089
        %v2091 = vrot.slane %v2090, 2
        %v2092 = vadd.f32 %v2090, %v2091
        %v2093 = vrot.slane %v2092, 1
        %v2094 = vadd.f32 %v2092, %v2093
        %v2095 = vrot.slane %v2057, 4
        %v2096 = vadd.f32 %v2057, %v2095
        %v2097 = vrot.slane %v2096, 2
        %v2098 = vadd.f32 %v2096, %v2097
        %v2099 = vrot.slane %v2098, 1
        %v2100 = vadd.f32 %v2098, %v2099
        %v2101 = vrot.slane %v2058, 4
        %v2102 = vadd.f32 %v2058, %v2101
        %v2103 = vrot.slane %v2102, 2
        %v2104 = vadd.f32 %v2102, %v2103
        %v2105 = vrot.slane %v2104, 1
        %v2106 = vadd.f32 %v2104, %v2105
        %v2107 = vmul.f32 %v2064, %v698
        %v2108 = vmul.f32 %v2070, %v698
        %v2109 = vmul.f32 %v2076, %v698
        %v2110 = vmul.f32 %v2082, %v698
        %v2111 = vmul.f32 %v2088, %v698
        %v2112 = vmul.f32 %v2094, %v698
        %v2113 = vmul.f32 %v2100, %v698
        %v2114 = vmul.f32 %v2106, %v698
        %v2115 = vmul.f32 %v2043, %v2043
        %v2116 = vmul.f32 %v2044, %v2044
        %v2117 = vmul.f32 %v2045, %v2045
        %v2118 = vmul.f32 %v2046, %v2046
        %v2119 = vmul.f32 %v2047, %v2047
        %v2120 = vmul.f32 %v2048, %v2048
        %v2121 = vmul.f32 %v2049, %v2049
        %v2122 = vmul.f32 %v2050, %v2050
        %v2123 = vsub.f32 %v2107, %v2115
        %v2124 = vsub.f32 %v2108, %v2116
        %v2125 = vsub.f32 %v2109, %v2117
        %v2126 = vsub.f32 %v2110, %v2118
        %v2127 = vsub.f32 %v2111, %v2119
        %v2128 = vsub.f32 %v2112, %v2120
        %v2129 = vsub.f32 %v2113, %v2121
        %v2130 = vsub.f32 %v2114, %v2122
        %v2131 = vmax.f32 %v2123, 0.0
        %v2132 = vmax.f32 %v2124, 0.0
        %v2133 = vmax.f32 %v2125, 0.0
        %v2134 = vmax.f32 %v2126, 0.0
        %v2135 = vmax.f32 %v2127, 0.0
        %v2136 = vmax.f32 %v2128, 0.0
        %v2137 = vmax.f32 %v2129, 0.0
        %v2138 = vmax.f32 %v2130, 0.0
        %v2139 = vadd.f32 %v2131, 1e-05
        %v2140 = vadd.f32 %v2132, 1e-05
        %v2141 = vadd.f32 %v2133, 1e-05
        %v2142 = vadd.f32 %v2134, 1e-05
        %v2143 = vadd.f32 %v2135, 1e-05
        %v2144 = vadd.f32 %v2136, 1e-05
        %v2145 = vadd.f32 %v2137, 1e-05
        %v2146 = vadd.f32 %v2138, 1e-05
        %v2147 = vrsqrt.pop %v2139
        %v2148 = vrsqrt.pop %v2140
        %v2149 = vrsqrt.pop %v2141
        %v2150 = vrsqrt.pop %v2142
        %v2151 = vrsqrt.pop %v2143
        %v2152 = vrsqrt.pop %v2144
        %v2153 = vrsqrt.pop %v2145
        %v2154 = vrsqrt.pop %v2146
        %v2163 = vcombine.low %v2147, %v2148
        %v2164 = vcombine.low %v2149, %v2150
        %v2166 = vunpack.c.l.s4 1966171168
        %v2167 = vunpack.c.0.s8 %v2166
        %v2168 = vlaneseq
        %v2169 = vshrl.u32 %v2168, 7
        %v2170 = vsub.s32 %v2167, %v2169
        %v2171 = vrot.slane %v2163, %v2170
        %v2173 = vunpack.c.l.s4 1966171168
        %v2174 = vunpack.c.0.s8 %v2173
        %v2175 = vlaneseq
        %v2176 = vshrl.u32 %v2175, 7
        %v2177 = vsub.s32 %v2174, %v2176
        %v2178 = vrot.slane %v2164, %v2177
        %v2179 = vcombine.low %v2171, %v2178
        %v2181 = vunpack.c.l.s4 1966171168
        %v2182 = vunpack.c.0.s8 %v2181
        %v2183 = vlaneseq
        %v2184 = vshrl.u32 %v2183, 7
        %v2185 = vsub.s32 %v2182, %v2184
        %v2186 = vrot.slane %v2179, %v2185
        %v2187 = vcombine.low %v2151, %v2152
        %v2188 = vcombine.low %v2153, %v2154
        %v2190 = vunpack.c.l.s4 1966171168
        %v2191 = vunpack.c.0.s8 %v2190
        %v2192 = vlaneseq
        %v2193 = vshrl.u32 %v2192, 7
        %v2194 = vsub.s32 %v2191, %v2193
        %v2195 = vrot.slane %v2187, %v2194
        %v2197 = vunpack.c.l.s4 1966171168
        %v2198 = vunpack.c.0.s8 %v2197
        %v2199 = vlaneseq
        %v2200 = vshrl.u32 %v2199, 7
        %v2201 = vsub.s32 %v2198, %v2200
        %v2202 = vrot.slane %v2188, %v2201
        %v2203 = vcombine.low %v2195, %v2202
        %v2205 = vunpack.c.l.s4 1966171168
        %v2206 = vunpack.c.0.s8 %v2205
        %v2207 = vlaneseq
        %v2208 = vshrl.u32 %v2207, 7
        %v2209 = vsub.s32 %v2206, %v2208
        %v2210 = vrot.slane %v2203, %v2209
        %v2213 = vmul.f32 %v1992, %v2186
        %v2214 = vmul.f32 %v1992, %v2210
        %v2217 = vlaneseq
        %v2218 = vshrl.u32 %v2217, 7
        %v2219 = vsub.s32 0, %v2218
        %v2220 = vrot.slane %v2213, %v2219
        %v2221 = vlaneseq
        %v2222 = vshrl.u32 %v2221, 7
        %v2223 = vsub.s32 1, %v2222
        %v2224 = vrot.slane %v2213, %v2223
        %v2225 = vlaneseq
        %v2226 = vshrl.u32 %v2225, 7
        %v2227 = vsub.s32 2, %v2226
        %v2228 = vrot.slane %v2213, %v2227
        %v2229 = vlaneseq
        %v2230 = vshrl.u32 %v2229, 7
        %v2231 = vsub.s32 3, %v2230
        %v2232 = vrot.slane %v2213, %v2231
        %v2233 = vlaneseq
        %v2234 = vshrl.u32 %v2233, 7
        %v2235 = vsub.s32 0, %v2234
        %v2236 = vrot.slane %v2214, %v2235
        %v2237 = vlaneseq
        %v2238 = vshrl.u32 %v2237, 7
        %v2239 = vsub.s32 1, %v2238
        %v2240 = vrot.slane %v2214, %v2239
        %v2241 = vlaneseq
        %v2242 = vshrl.u32 %v2241, 7
        %v2243 = vsub.s32 2, %v2242
        %v2244 = vrot.slane %v2214, %v2243
        %v2245 = vlaneseq
        %v2246 = vshrl.u32 %v2245, 7
        %v2247 = vsub.s32 3, %v2246
        %v2248 = vrot.slane %v2214, %v2247
        %v2257 = vmul.f32 %v2043, %v2220
        %v2258 = vmul.f32 %v2044, %v2224
        %v2259 = vmul.f32 %v2045, %v2228
        %v2260 = vmul.f32 %v2046, %v2232
        %v2261 = vmul.f32 %v2047, %v2236
        %v2262 = vmul.f32 %v2048, %v2240
        %v2263 = vmul.f32 %v2049, %v2244
        %v2264 = vmul.f32 %v2050, %v2248
        %v2273 = vcombine.low %v2257, %v2258
        %v2274 = vcombine.low %v2259, %v2260
        %v2276 = vunpack.c.l.s4 1966171168
        %v2277 = vunpack.c.0.s8 %v2276
        %v2278 = vlaneseq
        %v2279 = vshrl.u32 %v2278, 7
        %v2280 = vsub.s32 %v2277, %v2279
        %v2281 = vrot.slane %v2273, %v2280
        %v2283 = vunpack.c.l.s4 1966171168
        %v2284 = vunpack.c.0.s8 %v2283
        %v2285 = vlaneseq
        %v2286 = vshrl.u32 %v2285, 7
        %v2287 = vsub.s32 %v2284, %v2286
        %v2288 = vrot.slane %v2274, %v2287
        %v2289 = vcombine.low %v2281, %v2288
        %v2291 = vunpack.c.l.s4 1966171168
        %v2292 = vunpack.c.0.s8 %v2291
        %v2293 = vlaneseq
        %v2294 = vshrl.u32 %v2293, 7
        %v2295 = vsub.s32 %v2292, %v2294
        %v2296 = vrot.slane %v2289, %v2295
        %v2297 = vcombine.low %v2261, %v2262
        %v2298 = vcombine.low %v2263, %v2264
        %v2300 = vunpack.c.l.s4 1966171168
        %v2301 = vunpack.c.0.s8 %v2300
        %v2302 = vlaneseq
        %v2303 = vshrl.u32 %v2302, 7
        %v2304 = vsub.s32 %v2301, %v2303
        %v2305 = vrot.slane %v2297, %v2304
        %v2307 = vunpack.c.l.s4 1966171168
        %v2308 = vunpack.c.0.s8 %v2307
        %v2309 = vlaneseq
        %v2310 = vshrl.u32 %v2309, 7
        %v2311 = vsub.s32 %v2308, %v2310
        %v2312 = vrot.slane %v2298, %v2311
        %v2313 = vcombine.low %v2305, %v2312
        %v2315 = vunpack.c.l.s4 1966171168
        %v2316 = vunpack.c.0.s8 %v2315
        %v2317 = vlaneseq
        %v2318 = vshrl.u32 %v2317, 7
        %v2319 = vsub.s32 %v2316, %v2318
        %v2320 = vrot.slane %v2313, %v2319
        %v2323 = vsub.f32 %v1994, %v2296
        %v2324 = vsub.f32 %v1994, %v2320
        %v2325 = vmul.f32 %v1897, %v2220
        %v2326 = vmul.f32 %v1899, %v2224
        %v2327 = vmul.f32 %v1983, %v2228
        %v2328 = vmul.f32 %v1985, %v2232
        %v2329 = vmul.f32 %v1901, %v2236
        %v2330 = vmul.f32 %v1903, %v2240
        %v2331 = vmul.f32 %v1987, %v2244
        %v2332 = vmul.f32 %v1989, %v2248
        %v2335 = vlaneseq
        %v2336 = vshrl.u32 %v2335, 7
        %v2337 = vsub.s32 0, %v2336
        %v2338 = vrot.slane %v2323, %v2337
        %v2339 = vlaneseq
        %v2340 = vshrl.u32 %v2339, 7
        %v2341 = vsub.s32 1, %v2340
        %v2342 = vrot.slane %v2323, %v2341
        %v2343 = vlaneseq
        %v2344 = vshrl.u32 %v2343, 7
        %v2345 = vsub.s32 2, %v2344
        %v2346 = vrot.slane %v2323, %v2345
        %v2347 = vlaneseq
        %v2348 = vshrl.u32 %v2347, 7
        %v2349 = vsub.s32 3, %v2348
        %v2350 = vrot.slane %v2323, %v2349
        %v2351 = vlaneseq
        %v2352 = vshrl.u32 %v2351, 7
        %v2353 = vsub.s32 0, %v2352
        %v2354 = vrot.slane %v2324, %v2353
        %v2355 = vlaneseq
        %v2356 = vshrl.u32 %v2355, 7
        %v2357 = vsub.s32 1, %v2356
        %v2358 = vrot.slane %v2324, %v2357
        %v2359 = vlaneseq
        %v2360 = vshrl.u32 %v2359, 7
        %v2361 = vsub.s32 2, %v2360
        %v2362 = vrot.slane %v2324, %v2361
        %v2363 = vlaneseq
        %v2364 = vshrl.u32 %v2363, 7
        %v2365 = vsub.s32 3, %v2364
        %v2366 = vrot.slane %v2324, %v2365
        %v2375 = vadd.f32 %v2325, %v2338
        %v2376 = vadd.f32 %v2326, %v2342
        %v2377 = vadd.f32 %v2327, %v2346
        %v2378 = vadd.f32 %v2328, %v2350
        %v2379 = vadd.f32 %v2329, %v2354
        %v2380 = vadd.f32 %v2330, %v2358
        %v2381 = vadd.f32 %v2331, %v2362
        %v2382 = vadd.f32 %v2332, %v2366
        %v2383 = vmax.f32 %v2375, 0.0
        %v2384 = vmax.f32 %v2376, 0.0
        %v2385 = vmax.f32 %v2377, 0.0
        %v2386 = vmax.f32 %v2378, 0.0
        %v2387 = vmax.f32 %v2379, 0.0
        %v2388 = vmax.f32 %v2380, 0.0
        %v2389 = vmax.f32 %v2381, 0.0
        %v2390 = vmax.f32 %v2382, 0.0
        %v2391 = vpack.c.bf16 %v2387, %v2383
        %v2392 = vpack.c.bf16 %v2388, %v2384
        %v2393 = vpack.c.bf16 %v2389, %v2385
        %v2394 = vpack.c.bf16 %v2390, %v2386
        %v2395 = vld [vmem:[#allocation6] sm:$0xff]
        %v2396 = vld [vmem:[#allocation6 + $0x8] sm:$0xff]
        %v2397 = vld [vmem:[#allocation6 + $0x10] sm:$0xff]
        %v2398 = vld [vmem:[#allocation6 + $0x18] sm:$0xff]
        %v2399 = vld [vmem:[#allocation6 + $0x20] sm:$0xff]
        %v2400 = vld [vmem:[#allocation6 + $0x28] sm:$0xff]
        %v2401 = vld [vmem:[#allocation6 + $0x30] sm:$0xff]
        %v2402 = vld [vmem:[#allocation6 + $0x38] sm:$0xff]
        %v2403 = vld [vmem:[#allocation6 + $0x40] sm:$0xff]
        %v2404 = vld [vmem:[#allocation6 + $0x48] sm:$0xff]
        %v2405 = vld [vmem:[#allocation6 + $0x50] sm:$0xff]
        %v2406 = vld [vmem:[#allocation6 + $0x58] sm:$0xff]
        %v2407 = vld [vmem:[#allocation6 + $0x60] sm:$0xff]
        %v2408 = vld [vmem:[#allocation6 + $0x68] sm:$0xff]
        %v2409 = vld [vmem:[#allocation6 + $0x70] sm:$0xff]
        %v2410 = vld [vmem:[#allocation6 + $0x78] sm:$0xff]
        %v2411 = vld [vmem:[#allocation6 + $0x80] sm:$0xff]
        %v2412 = vld [vmem:[#allocation6 + $0x88] sm:$0xff]
        %v2413 = vld [vmem:[#allocation6 + $0x90] sm:$0xff]
        %v2414 = vld [vmem:[#allocation6 + $0x98] sm:$0xff]
        %v2415 = vld [vmem:[#allocation6 + $0xa0] sm:$0xff]
        %v2416 = vld [vmem:[#allocation6 + $0xa8] sm:$0xff]
        %v2417 = vld [vmem:[#allocation6 + $0xb0] sm:$0xff]
        %v2418 = vld [vmem:[#allocation6 + $0xb8] sm:$0xff]
        %v2419 = vld [vmem:[#allocation6 + $0xc0] sm:$0xff]
        %v2420 = vld [vmem:[#allocation6 + $0xc8] sm:$0xff]
        %v2421 = vld [vmem:[#allocation6 + $0xd0] sm:$0xff]
        %v2422 = vld [vmem:[#allocation6 + $0xd8] sm:$0xff]
        %v2423 = vld [vmem:[#allocation6 + $0xe0] sm:$0xff]
        %v2424 = vld [vmem:[#allocation6 + $0xe8] sm:$0xff]
        %v2425 = vld [vmem:[#allocation6 + $0xf0] sm:$0xff]
        %v2426 = vld [vmem:[#allocation6 + $0xf8] sm:$0xff]
        %v2427 = vld [vmem:[#allocation6 + $0x100] sm:$0xff]
        %v2428 = vld [vmem:[#allocation6 + $0x108] sm:$0xff]
        %v2429 = vld [vmem:[#allocation6 + $0x110] sm:$0xff]
        %v2430 = vld [vmem:[#allocation6 + $0x118] sm:$0xff]
        %v2431 = vld [vmem:[#allocation6 + $0x120] sm:$0xff]
        %v2432 = vld [vmem:[#allocation6 + $0x128] sm:$0xff]
        %v2433 = vld [vmem:[#allocation6 + $0x130] sm:$0xff]
        %v2434 = vld [vmem:[#allocation6 + $0x138] sm:$0xff]
        %v2435 = vld [vmem:[#allocation6 + $0x140] sm:$0xff]
        %v2436 = vld [vmem:[#allocation6 + $0x148] sm:$0xff]
        %v2437 = vld [vmem:[#allocation6 + $0x150] sm:$0xff]
        %v2438 = vld [vmem:[#allocation6 + $0x158] sm:$0xff]
        %v2439 = vld [vmem:[#allocation6 + $0x160] sm:$0xff]
        %v2440 = vld [vmem:[#allocation6 + $0x168] sm:$0xff]
        %v2441 = vld [vmem:[#allocation6 + $0x170] sm:$0xff]
        %v2442 = vld [vmem:[#allocation6 + $0x178] sm:$0xff]
        %v2443 = vld [vmem:[#allocation6 + $0x180] sm:$0xff]
        %v2444 = vld [vmem:[#allocation6 + $0x188] sm:$0xff]
        %v2445 = vld [vmem:[#allocation6 + $0x190] sm:$0xff]
        %v2446 = vld [vmem:[#allocation6 + $0x198] sm:$0xff]
        %v2447 = vld [vmem:[#allocation6 + $0x1a0] sm:$0xff]
        %v2448 = vld [vmem:[#allocation6 + $0x1a8] sm:$0xff]
        %v2449 = vld [vmem:[#allocation6 + $0x1b0] sm:$0xff]
        %v2450 = vld [vmem:[#allocation6 + $0x1b8] sm:$0xff]
        %v2451 = vld [vmem:[#allocation6 + $0x1c0] sm:$0xff]
        %v2452 = vld [vmem:[#allocation6 + $0x1c8] sm:$0xff]
        %v2453 = vld [vmem:[#allocation6 + $0x1d0] sm:$0xff]
        %v2454 = vld [vmem:[#allocation6 + $0x1d8] sm:$0xff]
        %v2455 = vld [vmem:[#allocation6 + $0x1e0] sm:$0xff]
        %v2456 = vld [vmem:[#allocation6 + $0x1e8] sm:$0xff]
        %v2457 = vld [vmem:[#allocation6 + $0x1f0] sm:$0xff]
        %v2458 = vld [vmem:[#allocation6 + $0x1f8] sm:$0xff]
        %v2523 = vunpack.c.l.b16 %v2395
        %v2524 = vunpack.c.h.b16 %v2395
        %v2525 = vunpack.c.l.b16 %v2396
        %v2526 = vunpack.c.h.b16 %v2396
        %v2527 = vunpack.c.l.b16 %v2397
        %v2528 = vunpack.c.h.b16 %v2397
        %v2529 = vunpack.c.l.b16 %v2398
        %v2530 = vunpack.c.h.b16 %v2398
        %v2531 = vunpack.c.l.b16 %v2399
        %v2532 = vunpack.c.h.b16 %v2399
        %v2533 = vunpack.c.l.b16 %v2400
        %v2534 = vunpack.c.h.b16 %v2400
        %v2535 = vunpack.c.l.b16 %v2401
        %v2536 = vunpack.c.h.b16 %v2401
        %v2537 = vunpack.c.l.b16 %v2402
        %v2538 = vunpack.c.h.b16 %v2402
        %v2539 = vunpack.c.l.b16 %v2403
        %v2540 = vunpack.c.h.b16 %v2403
        %v2541 = vunpack.c.l.b16 %v2404
        %v2542 = vunpack.c.h.b16 %v2404
        %v2543 = vunpack.c.l.b16 %v2405
        %v2544 = vunpack.c.h.b16 %v2405
        %v2545 = vunpack.c.l.b16 %v2406
        %v2546 = vunpack.c.h.b16 %v2406
        %v2547 = vunpack.c.l.b16 %v2407
        %v2548 = vunpack.c.h.b16 %v2407
        %v2549 = vunpack.c.l.b16 %v2408
        %v2550 = vunpack.c.h.b16 %v2408
        %v2551 = vunpack.c.l.b16 %v2409
        %v2552 = vunpack.c.h.b16 %v2409
        %v2553 = vunpack.c.l.b16 %v2410
        %v2554 = vunpack.c.h.b16 %v2410
        %v2555 = vunpack.c.l.b16 %v2411
        %v2556 = vunpack.c.h.b16 %v2411
        %v2557 = vunpack.c.l.b16 %v2412
        %v2558 = vunpack.c.h.b16 %v2412
        %v2559 = vunpack.c.l.b16 %v2413
        %v2560 = vunpack.c.h.b16 %v2413
        %v2561 = vunpack.c.l.b16 %v2414
        %v2562 = vunpack.c.h.b16 %v2414
        %v2563 = vunpack.c.l.b16 %v2415
        %v2564 = vunpack.c.h.b16 %v2415
        %v2565 = vunpack.c.l.b16 %v2416
        %v2566 = vunpack.c.h.b16 %v2416
        %v2567 = vunpack.c.l.b16 %v2417
        %v2568 = vunpack.c.h.b16 %v2417
        %v2569 = vunpack.c.l.b16 %v2418
        %v2570 = vunpack.c.h.b16 %v2418
        %v2571 = vunpack.c.l.b16 %v2419
        %v2572 = vunpack.c.h.b16 %v2419
        %v2573 = vunpack.c.l.b16 %v2420
        %v2574 = vunpack.c.h.b16 %v2420
        %v2575 = vunpack.c.l.b16 %v2421
        %v2576 = vunpack.c.h.b16 %v2421
        %v2577 = vunpack.c.l.b16 %v2422
        %v2578 = vunpack.c.h.b16 %v2422
        %v2579 = vunpack.c.l.b16 %v2423
        %v2580 = vunpack.c.h.b16 %v2423
        %v2581 = vunpack.c.l.b16 %v2424
        %v2582 = vunpack.c.h.b16 %v2424
        %v2583 = vunpack.c.l.b16 %v2425
        %v2584 = vunpack.c.h.b16 %v2425
        %v2585 = vunpack.c.l.b16 %v2426
        %v2586 = vunpack.c.h.b16 %v2426
        %v2587 = vunpack.c.l.b16 %v2427
        %v2588 = vunpack.c.h.b16 %v2427
        %v2589 = vunpack.c.l.b16 %v2428
        %v2590 = vunpack.c.h.b16 %v2428
        %v2591 = vunpack.c.l.b16 %v2429
        %v2592 = vunpack.c.h.b16 %v2429
        %v2593 = vunpack.c.l.b16 %v2430
        %v2594 = vunpack.c.h.b16 %v2430
        %v2595 = vunpack.c.l.b16 %v2431
        %v2596 = vunpack.c.h.b16 %v2431
        %v2597 = vunpack.c.l.b16 %v2432
        %v2598 = vunpack.c.h.b16 %v2432
        %v2599 = vunpack.c.l.b16 %v2433
        %v2600 = vunpack.c.h.b16 %v2433
        %v2601 = vunpack.c.l.b16 %v2434
        %v2602 = vunpack.c.h.b16 %v2434
        %v2603 = vunpack.c.l.b16 %v2435
        %v2604 = vunpack.c.h.b16 %v2435
        %v2605 = vunpack.c.l.b16 %v2436
        %v2606 = vunpack.c.h.b16 %v2436
        %v2607 = vunpack.c.l.b16 %v2437
        %v2608 = vunpack.c.h.b16 %v2437
        %v2609 = vunpack.c.l.b16 %v2438
        %v2610 = vunpack.c.h.b16 %v2438
        %v2611 = vunpack.c.l.b16 %v2439
        %v2612 = vunpack.c.h.b16 %v2439
        %v2613 = vunpack.c.l.b16 %v2440
        %v2614 = vunpack.c.h.b16 %v2440
        %v2615 = vunpack.c.l.b16 %v2441
        %v2616 = vunpack.c.h.b16 %v2441
        %v2617 = vunpack.c.l.b16 %v2442
        %v2618 = vunpack.c.h.b16 %v2442
        %v2619 = vunpack.c.l.b16 %v2443
        %v2620 = vunpack.c.h.b16 %v2443
        %v2621 = vunpack.c.l.b16 %v2444
        %v2622 = vunpack.c.h.b16 %v2444
        %v2623 = vunpack.c.l.b16 %v2445
        %v2624 = vunpack.c.h.b16 %v2445
        %v2625 = vunpack.c.l.b16 %v2446
        %v2626 = vunpack.c.h.b16 %v2446
        %v2627 = vunpack.c.l.b16 %v2447
        %v2628 = vunpack.c.h.b16 %v2447
        %v2629 = vunpack.c.l.b16 %v2448
        %v2630 = vunpack.c.h.b16 %v2448
        %v2631 = vunpack.c.l.b16 %v2449
        %v2632 = vunpack.c.h.b16 %v2449
        %v2633 = vunpack.c.l.b16 %v2450
        %v2634 = vunpack.c.h.b16 %v2450
        %v2635 = vunpack.c.l.b16 %v2451
        %v2636 = vunpack.c.h.b16 %v2451
        %v2637 = vunpack.c.l.b16 %v2452
        %v2638 = vunpack.c.h.b16 %v2452
        %v2639 = vunpack.c.l.b16 %v2453
        %v2640 = vunpack.c.h.b16 %v2453
        %v2641 = vunpack.c.l.b16 %v2454
        %v2642 = vunpack.c.h.b16 %v2454
        %v2643 = vunpack.c.l.b16 %v2455
        %v2644 = vunpack.c.h.b16 %v2455
        %v2645 = vunpack.c.l.b16 %v2456
        %v2646 = vunpack.c.h.b16 %v2456
        %v2647 = vunpack.c.l.b16 %v2457
        %v2648 = vunpack.c.h.b16 %v2457
        %v2649 = vunpack.c.l.b16 %v2458
        %v2650 = vunpack.c.h.b16 %v2458
        %v2651 = vpack.c.b16 %v2525, %v2523
        %v2652 = vpack.c.b16 %v2526, %v2524
        %v2653 = vpack.c.b16 %v2529, %v2527
        %v2654 = vpack.c.b16 %v2530, %v2528
        %v2655 = vpack.c.b16 %v2533, %v2531
        %v2656 = vpack.c.b16 %v2534, %v2532
        %v2657 = vpack.c.b16 %v2537, %v2535
        %v2658 = vpack.c.b16 %v2538, %v2536
        %v2659 = vpack.c.b16 %v2541, %v2539
        %v2660 = vpack.c.b16 %v2542, %v2540
        %v2661 = vpack.c.b16 %v2545, %v2543
        %v2662 = vpack.c.b16 %v2546, %v2544
        %v2663 = vpack.c.b16 %v2549, %v2547
        %v2664 = vpack.c.b16 %v2550, %v2548
        %v2665 = vpack.c.b16 %v2553, %v2551
        %v2666 = vpack.c.b16 %v2554, %v2552
        %v2667 = vpack.c.b16 %v2557, %v2555
        %v2668 = vpack.c.b16 %v2558, %v2556
        %v2669 = vpack.c.b16 %v2561, %v2559
        %v2670 = vpack.c.b16 %v2562, %v2560
        %v2671 = vpack.c.b16 %v2565, %v2563
        %v2672 = vpack.c.b16 %v2566, %v2564
        %v2673 = vpack.c.b16 %v2569, %v2567
        %v2674 = vpack.c.b16 %v2570, %v2568
        %v2675 = vpack.c.b16 %v2573, %v2571
        %v2676 = vpack.c.b16 %v2574, %v2572
        %v2677 = vpack.c.b16 %v2577, %v2575
        %v2678 = vpack.c.b16 %v2578, %v2576
        %v2679 = vpack.c.b16 %v2581, %v2579
        %v2680 = vpack.c.b16 %v2582, %v2580
        %v2681 = vpack.c.b16 %v2585, %v2583
        %v2682 = vpack.c.b16 %v2586, %v2584
        %v2683 = vpack.c.b16 %v2589, %v2587
        %v2684 = vpack.c.b16 %v2590, %v2588
        %v2685 = vpack.c.b16 %v2593, %v2591
        %v2686 = vpack.c.b16 %v2594, %v2592
        %v2687 = vpack.c.b16 %v2597, %v2595
        %v2688 = vpack.c.b16 %v2598, %v2596
        %v2689 = vpack.c.b16 %v2601, %v2599
        %v2690 = vpack.c.b16 %v2602, %v2600
        %v2691 = vpack.c.b16 %v2605, %v2603
        %v2692 = vpack.c.b16 %v2606, %v2604
        %v2693 = vpack.c.b16 %v2609, %v2607
        %v2694 = vpack.c.b16 %v2610, %v2608
        %v2695 = vpack.c.b16 %v2613, %v2611
        %v2696 = vpack.c.b16 %v2614, %v2612
        %v2697 = vpack.c.b16 %v2617, %v2615
        %v2698 = vpack.c.b16 %v2618, %v2616
        %v2699 = vpack.c.b16 %v2621, %v2619
        %v2700 = vpack.c.b16 %v2622, %v2620
        %v2701 = vpack.c.b16 %v2625, %v2623
        %v2702 = vpack.c.b16 %v2626, %v2624
        %v2703 = vpack.c.b16 %v2629, %v2627
        %v2704 = vpack.c.b16 %v2630, %v2628
        %v2705 = vpack.c.b16 %v2633, %v2631
        %v2706 = vpack.c.b16 %v2634, %v2632
        %v2707 = vpack.c.b16 %v2637, %v2635
        %v2708 = vpack.c.b16 %v2638, %v2636
        %v2709 = vpack.c.b16 %v2641, %v2639
        %v2710 = vpack.c.b16 %v2642, %v2640
        %v2711 = vpack.c.b16 %v2645, %v2643
        %v2712 = vpack.c.b16 %v2646, %v2644
        %v2713 = vpack.c.b16 %v2649, %v2647
        %v2714 = vpack.c.b16 %v2650, %v2648
        %2779 = vmatprep.subr.bf16.mxu0 %v2652
        %2780 = vmatpush1.bf16.msra.mxu0 %v2651
        %2781 = vmatprep.subr.bf16.mxu0 %v2654
        %2782 = vmatpush1.bf16.msra.mxu0 %v2653
        %2783 = vmatprep.subr.bf16.mxu0 %v2656
        %2784 = vmatpush1.bf16.msra.mxu0 %v2655
        %2785 = vmatprep.subr.bf16.mxu0 %v2658
        %2786 = vmatpush1.bf16.msra.mxu0 %v2657
        %2787 = vmatprep.subr.bf16.mxu0 %v2660
        %2788 = vmatpush1.bf16.msra.mxu0 %v2659
        %2789 = vmatprep.subr.bf16.mxu0 %v2662
        %2790 = vmatpush1.bf16.msra.mxu0 %v2661
        %2791 = vmatprep.subr.bf16.mxu0 %v2664
        %2792 = vmatpush1.bf16.msra.mxu0 %v2663
        %2793 = vmatprep.subr.bf16.mxu0 %v2666
        %2794 = vmatpush1.bf16.msra.mxu0 %v2665
        %2795 = vmatprep.subr.bf16.mxu0 %v2668
        %2796 = vmatpush1.bf16.msra.mxu0 %v2667
        %2797 = vmatprep.subr.bf16.mxu0 %v2670
        %2798 = vmatpush1.bf16.msra.mxu0 %v2669
        %2799 = vmatprep.subr.bf16.mxu0 %v2672
        %2800 = vmatpush1.bf16.msra.mxu0 %v2671
        %2801 = vmatprep.subr.bf16.mxu0 %v2674
        %2802 = vmatpush1.bf16.msra.mxu0 %v2673
        %2803 = vmatprep.subr.bf16.mxu0 %v2676
        %2804 = vmatpush1.bf16.msra.mxu0 %v2675
        %2805 = vmatprep.subr.bf16.mxu0 %v2678
        %2806 = vmatpush1.bf16.msra.mxu0 %v2677
        %2807 = vmatprep.subr.bf16.mxu0 %v2680
        %2808 = vmatpush1.bf16.msra.mxu0 %v2679
        %2809 = vmatprep.subr.bf16.mxu0 %v2682
        %2810 = vmatpush1.bf16.msra.mxu0 %v2681
        %2811 = vmatprep.mubr.bf16.mxu0 %v2392
        %2812 = vmatmul.mubr.bf16.gmra.mrb[0].mxu0 %v2391
        %v2813 = vpop.f32.mrb[0].mxu0
        %v2814 = vadd.f32 0.0, %v2813
        %v2815 = vpop.f32.mrb[0].mxu0
        %v2816 = vadd.f32 0.0, %v2815
        %v2817 = vpop.f32.mrb[0].mxu0
        %v2818 = vadd.f32 0.0, %v2817
        %v2819 = vpop.f32.mrb[0].mxu0
        %v2820 = vadd.f32 0.0, %v2819
        %2821 = vdwg.mxu0
        %2822 = vmatprep.subr.bf16.mxu0 %v2684
        %2823 = vmatpush1.bf16.msra.mxu0 %v2683
        %2824 = vmatprep.subr.bf16.mxu0 %v2686
        %2825 = vmatpush1.bf16.msra.mxu0 %v2685
        %2826 = vmatprep.subr.bf16.mxu0 %v2688
        %2827 = vmatpush1.bf16.msra.mxu0 %v2687
        %2828 = vmatprep.subr.bf16.mxu0 %v2690
        %2829 = vmatpush1.bf16.msra.mxu0 %v2689
        %2830 = vmatprep.subr.bf16.mxu0 %v2692
        %2831 = vmatpush1.bf16.msra.mxu0 %v2691
        %2832 = vmatprep.subr.bf16.mxu0 %v2694
        %2833 = vmatpush1.bf16.msra.mxu0 %v2693
        %2834 = vmatprep.subr.bf16.mxu0 %v2696
        %2835 = vmatpush1.bf16.msra.mxu0 %v2695
        %2836 = vmatprep.subr.bf16.mxu0 %v2698
        %2837 = vmatpush1.bf16.msra.mxu0 %v2697
        %2838 = vmatprep.subr.bf16.mxu0 %v2700
        %2839 = vmatpush1.bf16.msra.mxu0 %v2699
        %2840 = vmatprep.subr.bf16.mxu0 %v2702
        %2841 = vmatpush1.bf16.msra.mxu0 %v2701
        %2842 = vmatprep.subr.bf16.mxu0 %v2704
        %2843 = vmatpush1.bf16.msra.mxu0 %v2703
        %2844 = vmatprep.subr.bf16.mxu0 %v2706
        %2845 = vmatpush1.bf16.msra.mxu0 %v2705
        %2846 = vmatprep.subr.bf16.mxu0 %v2708
        %2847 = vmatpush1.bf16.msra.mxu0 %v2707
        %2848 = vmatprep.subr.bf16.mxu0 %v2710
        %2849 = vmatpush1.bf16.msra.mxu0 %v2709
        %2850 = vmatprep.subr.bf16.mxu0 %v2712
        %2851 = vmatpush1.bf16.msra.mxu0 %v2711
        %2852 = vmatprep.subr.bf16.mxu0 %v2714
        %2853 = vmatpush1.bf16.msra.mxu0 %v2713
        %2854 = vmatprep.mubr.bf16.mxu0 %v2394
        %2855 = vmatmul.mubr.bf16.gmra.mrb[0].mxu0 %v2393
        %v2856 = vpop.f32.mrb[0].mxu0
        %v2857 = vadd.f32 %v2814, %v2856
        %v2858 = vpop.f32.mrb[0].mxu0
        %v2859 = vadd.f32 %v2816, %v2858
        %v2860 = vpop.f32.mrb[0].mxu0
        %v2861 = vadd.f32 %v2818, %v2860
        %v2862 = vpop.f32.mrb[0].mxu0
        %v2863 = vadd.f32 %v2820, %v2862
        %2864 = vdwg.mxu0
        %s2865 = scalar_lea.vmem [#allocation10], 4
        %v2866 = vld [vmem:[%s2865] ss:$8 sm:$0x3]
        %s2867 = scalar_lea.vmem [#allocation10], 5
        %v2868 = vld [vmem:[%s2867] ss:$8 sm:$0x3]
        %v2869 = vrot.slane %v2857, 4
        %v2870 = vadd.f32 %v2857, %v2869
        %v2871 = vrot.slane %v2870, 2
        %v2872 = vadd.f32 %v2870, %v2871
        %v2873 = vrot.slane %v2872, 1
        %v2874 = vadd.f32 %v2872, %v2873
        %v2875 = vrot.slane %v2859, 4
        %v2876 = vadd.f32 %v2859, %v2875
        %v2877 = vrot.slane %v2876, 2
        %v2878 = vadd.f32 %v2876, %v2877
        %v2879 = vrot.slane %v2878, 1
        %v2880 = vadd.f32 %v2878, %v2879
        %v2881 = vrot.slane %v2861, 4
        %v2882 = vadd.f32 %v2861, %v2881
        %v2883 = vrot.slane %v2882, 2
        %v2884 = vadd.f32 %v2882, %v2883
        %v2885 = vrot.slane %v2884, 1
        %v2886 = vadd.f32 %v2884, %v2885
        %v2887 = vrot.slane %v2863, 4
        %v2888 = vadd.f32 %v2863, %v2887
        %v2889 = vrot.slane %v2888, 2
        %v2890 = vadd.f32 %v2888, %v2889
        %v2891 = vrot.slane %v2890, 1
        %v2892 = vadd.f32 %v2890, %v2891
        %v2893 = vmul.f32 %v2874, %v698
        %v2894 = vmul.f32 %v2880, %v698
        %v2895 = vmul.f32 %v2886, %v698
        %v2896 = vmul.f32 %v2892, %v698
        %v2897 = vmul.f32 %v2857, %v2857
        %v2898 = vmul.f32 %v2859, %v2859
        %v2899 = vmul.f32 %v2861, %v2861
        %v2900 = vmul.f32 %v2863, %v2863
        %v2901 = vrot.slane %v2897, 4
        %v2902 = vadd.f32 %v2897, %v2901
        %v2903 = vrot.slane %v2902, 2
        %v2904 = vadd.f32 %v2902, %v2903
        %v2905 = vrot.slane %v2904, 1
        %v2906 = vadd.f32 %v2904, %v2905
        %v2907 = vrot.slane %v2898, 4
        %v2908 = vadd.f32 %v2898, %v2907
        %v2909 = vrot.slane %v2908, 2
        %v2910 = vadd.f32 %v2908, %v2909
        %v2911 = vrot.slane %v2910, 1
        %v2912 = vadd.f32 %v2910, %v2911
        %v2913 = vrot.slane %v2899, 4
        %v2914 = vadd.f32 %v2899, %v2913
        %v2915 = vrot.slane %v2914, 2
        %v2916 = vadd.f32 %v2914, %v2915
        %v2917 = vrot.slane %v2916, 1
        %v2918 = vadd.f32 %v2916, %v2917
        %v2919 = vrot.slane %v2900, 4
        %v2920 = vadd.f32 %v2900, %v2919
        %v2921 = vrot.slane %v2920, 2
        %v2922 = vadd.f32 %v2920, %v2921
        %v2923 = vrot.slane %v2922, 1
        %v2924 = vadd.f32 %v2922, %v2923
        %v2925 = vmul.f32 %v2906, %v698
        %v2926 = vmul.f32 %v2912, %v698
        %v2927 = vmul.f32 %v2918, %v698
        %v2928 = vmul.f32 %v2924, %v698
        %v2929 = vmul.f32 %v2893, %v2893
        %v2930 = vmul.f32 %v2894, %v2894
        %v2931 = vmul.f32 %v2895, %v2895
        %v2932 = vmul.f32 %v2896, %v2896
        %v2933 = vsub.f32 %v2925, %v2929
        %v2934 = vsub.f32 %v2926, %v2930
        %v2935 = vsub.f32 %v2927, %v2931
        %v2936 = vsub.f32 %v2928, %v2932
        %v2937 = vmax.f32 %v2933, 0.0
        %v2938 = vmax.f32 %v2934, 0.0
        %v2939 = vmax.f32 %v2935, 0.0
        %v2940 = vmax.f32 %v2936, 0.0
        %v2941 = vadd.f32 %v2937, 1e-05
        %v2942 = vadd.f32 %v2938, 1e-05
        %v2943 = vadd.f32 %v2939, 1e-05
        %v2944 = vadd.f32 %v2940, 1e-05
        %v2945 = vrsqrt.pop %v2941
        %v2946 = vrsqrt.pop %v2942
        %v2947 = vrsqrt.pop %v2943
        %v2948 = vrsqrt.pop %v2944
        %v2953 = vcombine.low %v2945, %v2946
        %v2955 = vunpack.c.l.s4 1966171168
        %v2956 = vunpack.c.0.s8 %v2955
        %v2957 = vlaneseq
        %v2958 = vshrl.u32 %v2957, 7
        %v2959 = vsub.s32 %v2956, %v2958
        %v2960 = vrot.slane %v2953, %v2959
        %v2962 = vunpack.c.l.s4 1966171168
        %v2963 = vunpack.c.0.s8 %v2962
        %v2964 = vlaneseq
        %v2965 = vshrl.u32 %v2964, 7
        %v2966 = vsub.s32 %v2963, %v2965
        %v2967 = vrot.slane %v2960, %v2966
        %v2968 = vcombine.low %v2947, %v2948
        %v2970 = vunpack.c.l.s4 1966171168
        %v2971 = vunpack.c.0.s8 %v2970
        %v2972 = vlaneseq
        %v2973 = vshrl.u32 %v2972, 7
        %v2974 = vsub.s32 %v2971, %v2973
        %v2975 = vrot.slane %v2968, %v2974
        %v2977 = vunpack.c.l.s4 1966171168
        %v2978 = vunpack.c.0.s8 %v2977
        %v2979 = vlaneseq
        %v2980 = vshrl.u32 %v2979, 7
        %v2981 = vsub.s32 %v2978, %v2980
        %v2982 = vrot.slane %v2975, %v2981
        %v2985 = vmul.f32 %v2866, %v2967
        %v2986 = vmul.f32 %v2866, %v2982
        %v2989 = vlaneseq
        %v2990 = vshrl.u32 %v2989, 7
        %v2991 = vsub.s32 0, %v2990
        %v2992 = vrot.slane %v2985, %v2991
        %v2993 = vlaneseq
        %v2994 = vshrl.u32 %v2993, 7
        %v2995 = vsub.s32 1, %v2994
        %v2996 = vrot.slane %v2985, %v2995
        %v2997 = vlaneseq
        %v2998 = vshrl.u32 %v2997, 7
        %v2999 = vsub.s32 0, %v2998
        %v3000 = vrot.slane %v2986, %v2999
        %v3001 = vlaneseq
        %v3002 = vshrl.u32 %v3001, 7
        %v3003 = vsub.s32 1, %v3002
        %v3004 = vrot.slane %v2986, %v3003
        %v3009 = vmul.f32 %v2893, %v2992
        %v3010 = vmul.f32 %v2894, %v2996
        %v3011 = vmul.f32 %v2895, %v3000
        %v3012 = vmul.f32 %v2896, %v3004
        %v3017 = vcombine.low %v3009, %v3010
        %v3019 = vunpack.c.l.s4 1966171168
        %v3020 = vunpack.c.0.s8 %v3019
        %v3021 = vlaneseq
        %v3022 = vshrl.u32 %v3021, 7
        %v3023 = vsub.s32 %v3020, %v3022
        %v3024 = vrot.slane %v3017, %v3023
        %v3026 = vunpack.c.l.s4 1966171168
        %v3027 = vunpack.c.0.s8 %v3026
        %v3028 = vlaneseq
        %v3029 = vshrl.u32 %v3028, 7
        %v3030 = vsub.s32 %v3027, %v3029
        %v3031 = vrot.slane %v3024, %v3030
        %v3032 = vcombine.low %v3011, %v3012
        %v3034 = vunpack.c.l.s4 1966171168
        %v3035 = vunpack.c.0.s8 %v3034
        %v3036 = vlaneseq
        %v3037 = vshrl.u32 %v3036, 7
        %v3038 = vsub.s32 %v3035, %v3037
        %v3039 = vrot.slane %v3032, %v3038
        %v3041 = vunpack.c.l.s4 1966171168
        %v3042 = vunpack.c.0.s8 %v3041
        %v3043 = vlaneseq
        %v3044 = vshrl.u32 %v3043, 7
        %v3045 = vsub.s32 %v3042, %v3044
        %v3046 = vrot.slane %v3039, %v3045
        %v3049 = vsub.f32 %v2868, %v3031
        %v3050 = vsub.f32 %v2868, %v3046
        %v3051 = vmul.f32 %v2857, %v2992
        %v3052 = vmul.f32 %v2859, %v2996
        %v3053 = vmul.f32 %v2861, %v3000
        %v3054 = vmul.f32 %v2863, %v3004
        %v3057 = vlaneseq
        %v3058 = vshrl.u32 %v3057, 7
        %v3059 = vsub.s32 0, %v3058
        %v3060 = vrot.slane %v3049, %v3059
        %v3061 = vlaneseq
        %v3062 = vshrl.u32 %v3061, 7
        %v3063 = vsub.s32 1, %v3062
        %v3064 = vrot.slane %v3049, %v3063
        %v3065 = vlaneseq
        %v3066 = vshrl.u32 %v3065, 7
        %v3067 = vsub.s32 0, %v3066
        %v3068 = vrot.slane %v3050, %v3067
        %v3069 = vlaneseq
        %v3070 = vshrl.u32 %v3069, 7
        %v3071 = vsub.s32 1, %v3070
        %v3072 = vrot.slane %v3050, %v3071
        %v3077 = vadd.f32 %v3051, %v3060
        %v3078 = vadd.f32 %v3052, %v3064
        %v3079 = vadd.f32 %v3053, %v3068
        %v3080 = vadd.f32 %v3054, %v3072
        %v3081 = vmax.f32 %v3077, 0.0
        %v3082 = vmax.f32 %v3078, 0.0
        %v3083 = vmax.f32 %v3079, 0.0
        %v3084 = vmax.f32 %v3080, 0.0
        %v3085 = vpack.c.bf16 %v3083, %v3081
        %v3086 = vpack.c.bf16 %v3084, %v3082
        %v3087 = vld [vmem:[%s5] sm:$0xf]
        %v3088 = vld [vmem:[%s5 + $0x4] sm:$0xf]
        %v3089 = vld [vmem:[%s5 + $0x8] sm:$0xf]
        %v3090 = vld [vmem:[%s5 + $0xc] sm:$0xf]
        %v3091 = vld [vmem:[%s5 + $0x10] sm:$0xf]
        %v3092 = vld [vmem:[%s5 + $0x14] sm:$0xf]
        %v3093 = vld [vmem:[%s5 + $0x18] sm:$0xf]
        %v3094 = vld [vmem:[%s5 + $0x1c] sm:$0xf]
        %v3095 = vld [vmem:[%s5 + $0x20] sm:$0xf]
        %v3096 = vld [vmem:[%s5 + $0x24] sm:$0xf]
        %v3097 = vld [vmem:[%s5 + $0x28] sm:$0xf]
        %v3098 = vld [vmem:[%s5 + $0x2c] sm:$0xf]
        %v3099 = vld [vmem:[%s5 + $0x30] sm:$0xf]
        %v3100 = vld [vmem:[%s5 + $0x34] sm:$0xf]
        %v3101 = vld [vmem:[%s5 + $0x38] sm:$0xf]
        %v3102 = vld [vmem:[%s5 + $0x3c] sm:$0xf]
        %v3103 = vld [vmem:[%s5 + $0x40] sm:$0xf]
        %v3104 = vld [vmem:[%s5 + $0x44] sm:$0xf]
        %v3105 = vld [vmem:[%s5 + $0x48] sm:$0xf]
        %v3106 = vld [vmem:[%s5 + $0x4c] sm:$0xf]
        %v3107 = vld [vmem:[%s5 + $0x50] sm:$0xf]
        %v3108 = vld [vmem:[%s5 + $0x54] sm:$0xf]
        %v3109 = vld [vmem:[%s5 + $0x58] sm:$0xf]
        %v3110 = vld [vmem:[%s5 + $0x5c] sm:$0xf]
        %v3111 = vld [vmem:[%s5 + $0x60] sm:$0xf]
        %v3112 = vld [vmem:[%s5 + $0x64] sm:$0xf]
        %v3113 = vld [vmem:[%s5 + $0x68] sm:$0xf]
        %v3114 = vld [vmem:[%s5 + $0x6c] sm:$0xf]
        %v3115 = vld [vmem:[%s5 + $0x70] sm:$0xf]
        %v3116 = vld [vmem:[%s5 + $0x74] sm:$0xf]
        %v3117 = vld [vmem:[%s5 + $0x78] sm:$0xf]
        %v3118 = vld [vmem:[%s5 + $0x7c] sm:$0xf]
        %v3151 = vunpack.c.l.b16 %v3087
        %v3152 = vunpack.c.l.b16 %v3088
        %v3153 = vunpack.c.l.b16 %v3089
        %v3154 = vunpack.c.l.b16 %v3090
        %v3155 = vunpack.c.l.b16 %v3091
        %v3156 = vunpack.c.l.b16 %v3092
        %v3157 = vunpack.c.l.b16 %v3093
        %v3158 = vunpack.c.l.b16 %v3094
        %v3159 = vunpack.c.l.b16 %v3095
        %v3160 = vunpack.c.l.b16 %v3096
        %v3161 = vunpack.c.l.b16 %v3097
        %v3162 = vunpack.c.l.b16 %v3098
        %v3163 = vunpack.c.l.b16 %v3099
        %v3164 = vunpack.c.l.b16 %v3100
        %v3165 = vunpack.c.l.b16 %v3101
        %v3166 = vunpack.c.l.b16 %v3102
        %v3167 = vunpack.c.l.b16 %v3103
        %v3168 = vunpack.c.l.b16 %v3104
        %v3169 = vunpack.c.l.b16 %v3105
        %v3170 = vunpack.c.l.b16 %v3106
        %v3171 = vunpack.c.l.b16 %v3107
        %v3172 = vunpack.c.l.b16 %v3108
        %v3173 = vunpack.c.l.b16 %v3109
        %v3174 = vunpack.c.l.b16 %v3110
        %v3175 = vunpack.c.l.b16 %v3111
        %v3176 = vunpack.c.l.b16 %v3112
        %v3177 = vunpack.c.l.b16 %v3113
        %v3178 = vunpack.c.l.b16 %v3114
        %v3179 = vunpack.c.l.b16 %v3115
        %v3180 = vunpack.c.l.b16 %v3116
        %v3181 = vunpack.c.l.b16 %v3117
        %v3182 = vunpack.c.l.b16 %v3118
        %v3183 = vpack.c.b16 %v3152, %v3151
        %v3184 = vpack.c.b16 %v3154, %v3153
        %v3185 = vpack.c.b16 %v3156, %v3155
        %v3186 = vpack.c.b16 %v3158, %v3157
        %v3187 = vpack.c.b16 %v3160, %v3159
        %v3188 = vpack.c.b16 %v3162, %v3161
        %v3189 = vpack.c.b16 %v3164, %v3163
        %v3190 = vpack.c.b16 %v3166, %v3165
        %v3191 = vpack.c.b16 %v3168, %v3167
        %v3192 = vpack.c.b16 %v3170, %v3169
        %v3193 = vpack.c.b16 %v3172, %v3171
        %v3194 = vpack.c.b16 %v3174, %v3173
        %v3195 = vpack.c.b16 %v3176, %v3175
        %v3196 = vpack.c.b16 %v3178, %v3177
        %v3197 = vpack.c.b16 %v3180, %v3179
        %v3198 = vpack.c.b16 %v3182, %v3181
        %3215 = vmatprep.subr.bf16.mxu0 0
        %3216 = vmatpush1.bf16.msra.mxu0 %v3183
        %3217 = vmatprep.subr.bf16.mxu0 0
        %3218 = vmatpush1.bf16.msra.mxu0 %v3184
        %3219 = vmatprep.subr.bf16.mxu0 0
        %3220 = vmatpush1.bf16.msra.mxu0 %v3185
        %3221 = vmatprep.subr.bf16.mxu0 0
        %3222 = vmatpush1.bf16.msra.mxu0 %v3186
        %3223 = vmatprep.subr.bf16.mxu0 0
        %3224 = vmatpush1.bf16.msra.mxu0 %v3187
        %3225 = vmatprep.subr.bf16.mxu0 0
        %3226 = vmatpush1.bf16.msra.mxu0 %v3188
        %3227 = vmatprep.subr.bf16.mxu0 0
        %3228 = vmatpush1.bf16.msra.mxu0 %v3189
        %3229 = vmatprep.subr.bf16.mxu0 0
        %3230 = vmatpush1.bf16.msra.mxu0 %v3190
        %3231 = vmatprep.subr.bf16.mxu0 0
        %3232 = vmatpush1.bf16.msra.mxu0 %v3191
        %3233 = vmatprep.subr.bf16.mxu0 0
        %3234 = vmatpush1.bf16.msra.mxu0 %v3192
        %3235 = vmatprep.subr.bf16.mxu0 0
        %3236 = vmatpush1.bf16.msra.mxu0 %v3193
        %3237 = vmatprep.subr.bf16.mxu0 0
        %3238 = vmatpush1.bf16.msra.mxu0 %v3194
        %3239 = vmatprep.subr.bf16.mxu0 0
        %3240 = vmatpush1.bf16.msra.mxu0 %v3195
        %3241 = vmatprep.subr.bf16.mxu0 0
        %3242 = vmatpush1.bf16.msra.mxu0 %v3196
        %3243 = vmatprep.subr.bf16.mxu0 0
        %3244 = vmatpush1.bf16.msra.mxu0 %v3197
        %3245 = vmatprep.subr.bf16.mxu0 0
        %3246 = vmatpush1.bf16.msra.mxu0 %v3198
        %3247 = vmatprep.mubr.bf16.mxu0 %v3086
        %3248 = vmatmul.mubr.bf16.gmra.mrb[0].mxu0 %v3085
        %v3249 = vpop.f32.mrb[0].mxu0
        %v3250 = vadd.f32 0.0, %v3249
        %v3251 = vpop.f32.mrb[0].mxu0
        %v3252 = vpop.f32.mrb[0].mxu0
        %v3253 = vadd.f32 0.0, %v3252
        %v3254 = vpop.f32.mrb[0].mxu0
        %3255 = vdwg.mxu0
        %v3256 = vld [vmem:[#allocation10 + $0x6] ss:$0 sm:$0xff]
        %v3257 = vld [vmem:[#allocation10 + $0x7] ss:$0 sm:$0xff]
        %v3258 = vrot.slane %v3250, 4
        %v3259 = vadd.f32 %v3250, %v3258
        %v3260 = vrot.slane %v3259, 2
        %v3261 = vadd.f32 %v3259, %v3260
        %v3262 = vrot.slane %v3261, 1
        %v3263 = vadd.f32 %v3261, %v3262
        %v3264 = vrot.slane %v3253, 4
        %v3265 = vadd.f32 %v3253, %v3264
        %v3266 = vrot.slane %v3265, 2
        %v3267 = vadd.f32 %v3265, %v3266
        %v3268 = vrot.slane %v3267, 1
        %v3269 = vadd.f32 %v3267, %v3268
        %v3270 = vmul.f32 %v3263, %v698
        %v3271 = vmul.f32 %v3269, %v698
        %v3272 = vmul.f32 %v3250, %v3250
        %v3273 = vmul.f32 %v3253, %v3253
        %v3274 = vrot.slane %v3272, 4
        %v3275 = vadd.f32 %v3272, %v3274
        %v3276 = vrot.slane %v3275, 2
        %v3277 = vadd.f32 %v3275, %v3276
        %v3278 = vrot.slane %v3277, 1
        %v3279 = vadd.f32 %v3277, %v3278
        %v3280 = vrot.slane %v3273, 4
        %v3281 = vadd.f32 %v3273, %v3280
        %v3282 = vrot.slane %v3281, 2
        %v3283 = vadd.f32 %v3281, %v3282
        %v3284 = vrot.slane %v3283, 1
        %v3285 = vadd.f32 %v3283, %v3284
        %v3286 = vmul.f32 %v3279, %v698
        %v3287 = vmul.f32 %v3285, %v698
        %v3288 = vmul.f32 %v3270, %v3270
        %v3289 = vmul.f32 %v3271, %v3271
        %v3290 = vsub.f32 %v3286, %v3288
        %v3291 = vsub.f32 %v3287, %v3289
        %v3292 = vmax.f32 %v3290, 0.0
        %v3293 = vmax.f32 %v3291, 0.0
        %v3294 = vadd.f32 %v3292, 1e-05
        %v3295 = vadd.f32 %v3293, 1e-05
        %v3296 = vrsqrt.pop %v3294
        %v3297 = vrsqrt.pop %v3295
        %v3298 = vmul.f32 %v3256, %v3296
        %v3299 = vmul.f32 %v3256, %v3297
        %v3300 = vmul.f32 %v3270, %v3298
        %v3301 = vmul.f32 %v3271, %v3299
        %v3302 = vsub.f32 %v3257, %v3300
        %v3303 = vsub.f32 %v3257, %v3301
        %v3304 = vmul.f32 %v3250, %v3298
        %v3305 = vmul.f32 %v3253, %v3299
        %v3306 = vadd.f32 %v3304, %v3302
        %v3307 = vadd.f32 %v3305, %v3303
        %v3308 = vmax.f32 %v3306, 0.0
        %v3309 = vmax.f32 %v3307, 0.0
        %v3310 = vpack.c.bf16 %v3309, %v3308
        %v3311 = vld [vmem:[#allocation7] sm:$0xf]
        %v3312 = vld [vmem:[#allocation7 + $0x4] sm:$0xf]
        %v3313 = vld [vmem:[#allocation7 + $0x8] sm:$0xf]
        %v3314 = vld [vmem:[#allocation7 + $0xc] sm:$0xf]
        %v3315 = vld [vmem:[#allocation7 + $0x10] sm:$0xf]
        %v3316 = vld [vmem:[#allocation7 + $0x14] sm:$0xf]
        %v3317 = vld [vmem:[#allocation7 + $0x18] sm:$0xf]
        %v3318 = vld [vmem:[#allocation7 + $0x1c] sm:$0xf]
        %v3319 = vld [vmem:[#allocation7 + $0x20] sm:$0xf]
        %v3320 = vld [vmem:[#allocation7 + $0x24] sm:$0xf]
        %v3321 = vld [vmem:[#allocation7 + $0x28] sm:$0xf]
        %v3322 = vld [vmem:[#allocation7 + $0x2c] sm:$0xf]
        %v3323 = vld [vmem:[#allocation7 + $0x30] sm:$0xf]
        %v3324 = vld [vmem:[#allocation7 + $0x34] sm:$0xf]
        %v3325 = vld [vmem:[#allocation7 + $0x38] sm:$0xf]
        %v3326 = vld [vmem:[#allocation7 + $0x3c] sm:$0xf]
        %v3327 = vld [vmem:[%s492] sm:$0xf]
        %v3328 = vld [vmem:[%s492 + $0x4] sm:$0xf]
        %v3329 = vld [vmem:[%s7] sm:$0x7]
        %v3332 = vunpack.c.l.b16 %v3327
        %v3333 = vunpack.c.l.b16 %v3328
        %v3334 = vpack.c.b16 %v3333, %v3332
        %vm3335 = vcmask 48128
        %v3337 = vsel %vm3335, %v3334, 0
        %vm3339 = vcmask 1042432
        %v3341 = vsel %vm3339, %v3329, 0
        %3343 = vmatprep.subr.bf16.mxu0 0
        %3344 = vmatpush1.bf16.msra.mxu0 %v3341
        %3345 = vmatprep.subr.bf16.mxu0 0
        %3346 = vmatpush1.bf16.msra.mxu0 0
        %3347 = vmatprep.subr.bf16.mxu0 0
        %3348 = vmatpush1.bf16.msra.mxu0 0
        %3349 = vmatprep.subr.bf16.mxu0 0
        %3350 = vmatpush1.bf16.msra.mxu0 0
        %3351 = vmatprep.subr.bf16.mxu0 0
        %3352 = vmatpush1.bf16.msra.mxu0 0
        %3353 = vmatprep.subr.bf16.mxu0 0
        %3354 = vmatpush1.bf16.msra.mxu0 0
        %3355 = vmatprep.subr.bf16.mxu0 0
        %3356 = vmatpush1.bf16.msra.mxu0 0
        %3357 = vmatprep.subr.bf16.mxu0 0
        %3358 = vmatpush1.bf16.msra.mxu0 0
        %3359 = vmatprep.subr.bf16.mxu0 0
        %3360 = vmatpush1.bf16.msra.mxu0 0
        %3361 = vmatprep.subr.bf16.mxu0 0
        %3362 = vmatpush1.bf16.msra.mxu0 0
        %3363 = vmatprep.subr.bf16.mxu0 0
        %3364 = vmatpush1.bf16.msra.mxu0 0
        %3365 = vmatprep.subr.bf16.mxu0 0
        %3366 = vmatpush1.bf16.msra.mxu0 0
        %3367 = vmatprep.subr.bf16.mxu0 0
        %3368 = vmatpush1.bf16.msra.mxu0 0
        %3369 = vmatprep.subr.bf16.mxu0 0
        %3370 = vmatpush1.bf16.msra.mxu0 0
        %3371 = vmatprep.subr.bf16.mxu0 0
        %3372 = vmatpush1.bf16.msra.mxu0 0
        %3373 = vmatprep.subr.bf16.mxu0 0
        %3374 = vmatpush1.bf16.msra.mxu0 0
        %3375 = vmatprep.mubr.bf16.mxu0 0
        %3376 = vmatmul.mubr.bf16.gmra.mrb[0].mxu0 %v3337
        %v3377 = vpop.f32.mrb[0].mxu0
        %v3378 = vadd.f32 0.0, %v3377
        %v3379 = vpop.f32.mrb[0].mxu0
        %v3380 = vpop.f32.mrb[0].mxu0
        %v3381 = vadd.f32 0.0, %v3380
        %v3382 = vpop.f32.mrb[0].mxu0
        %3383 = vdwg.mxu0
        %v3400 = vunpack.c.l.b16 %v3311
        %v3401 = vunpack.c.l.b16 %v3312
        %v3402 = vunpack.c.l.b16 %v3313
        %v3403 = vunpack.c.l.b16 %v3314
        %v3404 = vunpack.c.l.b16 %v3315
        %v3405 = vunpack.c.l.b16 %v3316
        %v3406 = vunpack.c.l.b16 %v3317
        %v3407 = vunpack.c.l.b16 %v3318
        %v3408 = vunpack.c.l.b16 %v3319
        %v3409 = vunpack.c.l.b16 %v3320
        %v3410 = vunpack.c.l.b16 %v3321
        %v3411 = vunpack.c.l.b16 %v3322
        %v3412 = vunpack.c.l.b16 %v3323
        %v3413 = vunpack.c.l.b16 %v3324
        %v3414 = vunpack.c.l.b16 %v3325
        %v3415 = vunpack.c.l.b16 %v3326
        %v3416 = vpack.c.b16 %v3401, %v3400
        %v3417 = vpack.c.b16 %v3403, %v3402
        %v3418 = vpack.c.b16 %v3405, %v3404
        %v3419 = vpack.c.b16 %v3407, %v3406
        %v3420 = vpack.c.b16 %v3409, %v3408
        %v3421 = vpack.c.b16 %v3411, %v3410
        %v3422 = vpack.c.b16 %v3413, %v3412
        %v3423 = vpack.c.b16 %v3415, %v3414
        %3432 = vmatprep.subr.bf16.mxu0 0
        %3433 = vmatpush1.bf16.msra.mxu0 %v3416
        %3434 = vmatprep.subr.bf16.mxu0 0
        %3435 = vmatpush1.bf16.msra.mxu0 %v3417
        %3436 = vmatprep.subr.bf16.mxu0 0
        %3437 = vmatpush1.bf16.msra.mxu0 %v3418
        %3438 = vmatprep.subr.bf16.mxu0 0
        %3439 = vmatpush1.bf16.msra.mxu0 %v3419
        %3440 = vmatprep.subr.bf16.mxu0 0
        %3441 = vmatpush1.bf16.msra.mxu0 %v3420
        %3442 = vmatprep.subr.bf16.mxu0 0
        %3443 = vmatpush1.bf16.msra.mxu0 %v3421
        %3444 = vmatprep.subr.bf16.mxu0 0
        %3445 = vmatpush1.bf16.msra.mxu0 %v3422
        %3446 = vmatprep.subr.bf16.mxu0 0
        %3447 = vmatpush1.bf16.msra.mxu0 %v3423
        %3448 = vmatprep.subr.bf16.mxu0 0
        %3449 = vmatpush1.bf16.msra.mxu0 0
        %3450 = vmatprep.subr.bf16.mxu0 0
        %3451 = vmatpush1.bf16.msra.mxu0 0
        %3452 = vmatprep.subr.bf16.mxu0 0
        %3453 = vmatpush1.bf16.msra.mxu0 0
        %3454 = vmatprep.subr.bf16.mxu0 0
        %3455 = vmatpush1.bf16.msra.mxu0 0
        %3456 = vmatprep.subr.bf16.mxu0 0
        %3457 = vmatpush1.bf16.msra.mxu0 0
        %3458 = vmatprep.subr.bf16.mxu0 0
        %3459 = vmatpush1.bf16.msra.mxu0 0
        %3460 = vmatprep.subr.bf16.mxu0 0
        %3461 = vmatpush1.bf16.msra.mxu0 0
        %3462 = vmatprep.subr.bf16.mxu0 0
        %3463 = vmatpush1.bf16.msra.mxu0 0
        %3464 = vmatprep.mubr.bf16.mxu0 0
        %3465 = vmatmul.mubr.bf16.gmra.mrb[0].mxu0 %v3310
        %v3466 = vpop.f32.mrb[0].mxu0
        %v3467 = vadd.f32 %v3378, %v3466
        %v3468 = vpop.f32.mrb[0].mxu0
        %v3469 = vpop.f32.mrb[0].mxu0
        %v3470 = vadd.f32 %v3381, %v3469
        %v3471 = vpop.f32.mrb[0].mxu0
        %3472 = vdwg.mxu0
        %v3473 = vld [vmem:[#allocation10 + $0x20] ss:$0 sm:$0xff]
        %v3474 = vld [vmem:[#allocation10 + $0x21] ss:$0 sm:$0xff]
        %v3475 = vrot.slane %v3467, 4
        %v3476 = vadd.f32 %v3467, %v3475
        %v3477 = vrot.slane %v3476, 2
        %v3478 = vadd.f32 %v3476, %v3477
        %v3479 = vrot.slane %v3478, 1
        %v3480 = vadd.f32 %v3478, %v3479
        %v3481 = vrot.slane %v3470, 4
        %v3482 = vadd.f32 %v3470, %v3481
        %v3483 = vrot.slane %v3482, 2
        %v3484 = vadd.f32 %v3482, %v3483
        %v3485 = vrot.slane %v3484, 1
        %v3486 = vadd.f32 %v3484, %v3485
        %v3487 = vmul.f32 %v3480, %v698
        %v3488 = vmul.f32 %v3486, %v698
        %v3489 = vmul.f32 %v3467, %v3467
        %v3490 = vmul.f32 %v3470, %v3470
        %v3491 = vrot.slane %v3489, 4
        %v3492 = vadd.f32 %v3489, %v3491
        %v3493 = vrot.slane %v3492, 2
        %v3494 = vadd.f32 %v3492, %v3493
        %v3495 = vrot.slane %v3494, 1
        %v3496 = vadd.f32 %v3494, %v3495
        %v3497 = vrot.slane %v3490, 4
        %v3498 = vadd.f32 %v3490, %v3497
        %v3499 = vrot.slane %v3498, 2
        %v3500 = vadd.f32 %v3498, %v3499
        %v3501 = vrot.slane %v3500, 1
        %v3502 = vadd.f32 %v3500, %v3501
        %v3503 = vmul.f32 %v3496, %v698
        %v3504 = vmul.f32 %v3502, %v698
        %v3505 = vmul.f32 %v3487, %v3487
        %v3506 = vmul.f32 %v3488, %v3488
        %v3507 = vsub.f32 %v3503, %v3505
        %v3508 = vsub.f32 %v3504, %v3506
        %v3509 = vmax.f32 %v3507, 0.0
        %v3510 = vmax.f32 %v3508, 0.0
        %v3511 = vadd.f32 %v3509, 1e-05
        %v3512 = vadd.f32 %v3510, 1e-05
        %v3513 = vrsqrt.pop %v3511
        %v3514 = vrsqrt.pop %v3512
        %v3515 = vmul.f32 %v3473, %v3513
        %v3516 = vmul.f32 %v3473, %v3514
        %v3517 = vmul.f32 %v3487, %v3515
        %v3518 = vmul.f32 %v3488, %v3516
        %v3519 = vsub.f32 %v3474, %v3517
        %v3520 = vsub.f32 %v3474, %v3518
        %v3521 = vmul.f32 %v3467, %v3515
        %v3522 = vmul.f32 %v3470, %v3516
        %v3523 = vadd.f32 %v3521, %v3519
        %v3524 = vadd.f32 %v3522, %v3520
        %v3525 = vmax.f32 %v3523, 0.0
        %v3526 = vmax.f32 %v3524, 0.0
        %v3527 = vpack.c.bf16 %v3526, %v3525
        %v3528 = vld [vmem:[#allocation9] sm:$0xf]
        %v3529 = vld [vmem:[#allocation9 + $0x4] sm:$0xf]
        %v3530 = vld [vmem:[#allocation9 + $0x8] sm:$0xf]
        %v3531 = vld [vmem:[#allocation9 + $0xc] sm:$0xf]
        %v3532 = vld [vmem:[#allocation9 + $0x10] sm:$0xf]
        %v3533 = vld [vmem:[#allocation9 + $0x14] sm:$0xf]
        %v3534 = vld [vmem:[#allocation9 + $0x18] sm:$0xf]
        %v3535 = vld [vmem:[#allocation9 + $0x1c] sm:$0xf]
        %v3536 = vld [vmem:[#allocation9 + $0x20] sm:$0xf]
        %v3537 = vld [vmem:[#allocation9 + $0x24] sm:$0xf]
        %v3538 = vld [vmem:[#allocation9 + $0x28] sm:$0xf]
        %v3539 = vld [vmem:[#allocation9 + $0x2c] sm:$0xf]
        %v3540 = vld [vmem:[#allocation9 + $0x30] sm:$0xf]
        %v3541 = vld [vmem:[#allocation9 + $0x34] sm:$0xf]
        %v3542 = vld [vmem:[#allocation9 + $0x38] sm:$0xf]
        %v3543 = vld [vmem:[#allocation9 + $0x3c] sm:$0xf]
        %v3560 = vunpack.c.l.b16 %v3528
        %v3561 = vunpack.c.l.b16 %v3529
        %v3562 = vunpack.c.l.b16 %v3530
        %v3563 = vunpack.c.l.b16 %v3531
        %v3564 = vunpack.c.l.b16 %v3532
        %v3565 = vunpack.c.l.b16 %v3533
        %v3566 = vunpack.c.l.b16 %v3534
        %v3567 = vunpack.c.l.b16 %v3535
        %v3568 = vunpack.c.l.b16 %v3536
        %v3569 = vunpack.c.l.b16 %v3537
        %v3570 = vunpack.c.l.b16 %v3538
        %v3571 = vunpack.c.l.b16 %v3539
        %v3572 = vunpack.c.l.b16 %v3540
        %v3573 = vunpack.c.l.b16 %v3541
        %v3574 = vunpack.c.l.b16 %v3542
        %v3575 = vunpack.c.l.b16 %v3543
        %v3576 = vpack.c.b16 %v3561, %v3560
        %v3577 = vpack.c.b16 %v3563, %v3562
        %v3578 = vpack.c.b16 %v3565, %v3564
        %v3579 = vpack.c.b16 %v3567, %v3566
        %v3580 = vpack.c.b16 %v3569, %v3568
        %v3581 = vpack.c.b16 %v3571, %v3570
        %v3582 = vpack.c.b16 %v3573, %v3572
        %v3583 = vpack.c.b16 %v3575, %v3574
        %3592 = vmatprep.subr.bf16.mxu0 0
        %3593 = vmatpush1.bf16.msra.mxu0 %v3576
        %3594 = vmatprep.subr.bf16.mxu0 0
        %3595 = vmatpush1.bf16.msra.mxu0 %v3577
        %3596 = vmatprep.subr.bf16.mxu0 0
        %3597 = vmatpush1.bf16.msra.mxu0 %v3578
        %3598 = vmatprep.subr.bf16.mxu0 0
        %3599 = vmatpush1.bf16.msra.mxu0 %v3579
        %3600 = vmatprep.subr.bf16.mxu0 0
        %3601 = vmatpush1.bf16.msra.mxu0 %v3580
        %3602 = vmatprep.subr.bf16.mxu0 0
        %3603 = vmatpush1.bf16.msra.mxu0 %v3581
        %3604 = vmatprep.subr.bf16.mxu0 0
        %3605 = vmatpush1.bf16.msra.mxu0 %v3582
        %3606 = vmatprep.subr.bf16.mxu0 0
        %3607 = vmatpush1.bf16.msra.mxu0 %v3583
        %3608 = vmatprep.subr.bf16.mxu0 0
        %3609 = vmatpush1.bf16.msra.mxu0 0
        %3610 = vmatprep.subr.bf16.mxu0 0
        %3611 = vmatpush1.bf16.msra.mxu0 0
        %3612 = vmatprep.subr.bf16.mxu0 0
        %3613 = vmatpush1.bf16.msra.mxu0 0
        %3614 = vmatprep.subr.bf16.mxu0 0
        %3615 = vmatpush1.bf16.msra.mxu0 0
        %3616 = vmatprep.subr.bf16.mxu0 0
        %3617 = vmatpush1.bf16.msra.mxu0 0
        %3618 = vmatprep.subr.bf16.mxu0 0
        %3619 = vmatpush1.bf16.msra.mxu0 0
        %3620 = vmatprep.subr.bf16.mxu0 0
        %3621 = vmatpush1.bf16.msra.mxu0 0
        %3622 = vmatprep.subr.bf16.mxu0 0
        %3623 = vmatpush1.bf16.msra.mxu0 0
        %3624 = vmatprep.mubr.bf16.mxu0 0
        %3625 = vmatmul.mubr.bf16.gmra.mrb[0].mxu0 %v3527
        %v3626 = vpop.f32.mrb[0].mxu0
        %v3627 = vadd.f32 0.0, %v3626
        %v3628 = vpop.f32.mrb[0].mxu0
        %v3629 = vpop.f32.mrb[0].mxu0
        %v3630 = vadd.f32 0.0, %v3629
        %v3631 = vpop.f32.mrb[0].mxu0
        %3632 = vdwg.mxu0
        %v3633 = vld [vmem:[#allocation10 + $0x22] ss:$0 sm:$0xff]
        %v3634 = vld [vmem:[#allocation10 + $0x23] ss:$0 sm:$0xff]
        %v3635 = vrot.slane %v3627, 4
        %v3636 = vadd.f32 %v3627, %v3635
        %v3637 = vrot.slane %v3636, 2
        %v3638 = vadd.f32 %v3636, %v3637
        %v3639 = vrot.slane %v3638, 1
        %v3640 = vadd.f32 %v3638, %v3639
        %v3641 = vrot.slane %v3630, 4
        %v3642 = vadd.f32 %v3630, %v3641
        %v3643 = vrot.slane %v3642, 2
        %v3644 = vadd.f32 %v3642, %v3643
        %v3645 = vrot.slane %v3644, 1
        %v3646 = vadd.f32 %v3644, %v3645
        %v3647 = vmul.f32 %v3640, %v698
        %v3648 = vmul.f32 %v3646, %v698
        %v3649 = vmul.f32 %v3627, %v3627
        %v3650 = vmul.f32 %v3630, %v3630
        %v3651 = vrot.slane %v3649, 4
        %v3652 = vadd.f32 %v3649, %v3651
        %v3653 = vrot.slane %v3652, 2
        %v3654 = vadd.f32 %v3652, %v3653
        %v3655 = vrot.slane %v3654, 1
        %v3656 = vadd.f32 %v3654, %v3655
        %v3657 = vrot.slane %v3650, 4
        %v3658 = vadd.f32 %v3650, %v3657
        %v3659 = vrot.slane %v3658, 2
        %v3660 = vadd.f32 %v3658, %v3659
        %v3661 = vrot.slane %v3660, 1
        %v3662 = vadd.f32 %v3660, %v3661
        %v3663 = vmul.f32 %v3656, %v698
        %v3664 = vmul.f32 %v3662, %v698
        %v3665 = vmul.f32 %v3647, %v3647
        %v3666 = vmul.f32 %v3648, %v3648
        %v3667 = vsub.f32 %v3663, %v3665
        %v3668 = vsub.f32 %v3664, %v3666
        %v3669 = vmax.f32 %v3667, 0.0
        %v3670 = vmax.f32 %v3668, 0.0
        %v3671 = vadd.f32 %v3669, 1e-05
        %v3672 = vadd.f32 %v3670, 1e-05
        %v3673 = vrsqrt.pop %v3671
        %v3674 = vrsqrt.pop %v3672
        %v3675 = vmul.f32 %v3633, %v3673
        %v3676 = vmul.f32 %v3633, %v3674
        %v3677 = vmul.f32 %v3647, %v3675
        %v3678 = vmul.f32 %v3648, %v3676
        %v3679 = vsub.f32 %v3634, %v3677
        %v3680 = vsub.f32 %v3634, %v3678
        %v3681 = vmul.f32 %v3627, %v3675
        %v3682 = vmul.f32 %v3630, %v3676
        %v3683 = vadd.f32 %v3681, %v3679
        %v3684 = vadd.f32 %v3682, %v3680
        %v3685 = vmax.f32 %v3683, 0.0
        %v3686 = vmax.f32 %v3684, 0.0
        %v3687 = vpack.c.bf16 %v3686, %v3685
        %v3688 = vld [vmem:[%s9] sm:$0xf]
        %v3689 = vld [vmem:[%s9 + $0x4] sm:$0xf]
        %v3690 = vld [vmem:[%s9 + $0x8] sm:$0xf]
        %v3691 = vld [vmem:[%s9 + $0xc] sm:$0xf]
        %v3692 = vld [vmem:[%s9 + $0x10] sm:$0xf]
        %v3693 = vld [vmem:[%s9 + $0x14] sm:$0xf]
        %v3694 = vld [vmem:[%s9 + $0x18] sm:$0xf]
        %v3695 = vld [vmem:[%s9 + $0x1c] sm:$0xf]
        %v3696 = vld [vmem:[%s9 + $0x20] sm:$0xf]
        %v3697 = vld [vmem:[%s9 + $0x24] sm:$0xf]
        %v3698 = vld [vmem:[%s9 + $0x28] sm:$0xf]
        %v3699 = vld [vmem:[%s9 + $0x2c] sm:$0xf]
        %v3700 = vld [vmem:[%s9 + $0x30] sm:$0xf]
        %v3701 = vld [vmem:[%s9 + $0x34] sm:$0xf]
        %v3702 = vld [vmem:[%s9 + $0x38] sm:$0xf]
        %v3703 = vld [vmem:[%s9 + $0x3c] sm:$0xf]
        %v3704 = vld [vmem:[#allocation10 + $0x24] ss:$0 sm:$0xff]
        %v3721 = vunpack.c.l.b16 %v3688
        %v3722 = vunpack.c.l.b16 %v3689
        %v3723 = vunpack.c.l.b16 %v3690
        %v3724 = vunpack.c.l.b16 %v3691
        %v3725 = vunpack.c.l.b16 %v3692
        %v3726 = vunpack.c.l.b16 %v3693
        %v3727 = vunpack.c.l.b16 %v3694
        %v3728 = vunpack.c.l.b16 %v3695
        %v3729 = vunpack.c.l.b16 %v3696
        %v3730 = vunpack.c.l.b16 %v3697
        %v3731 = vunpack.c.l.b16 %v3698
        %v3732 = vunpack.c.l.b16 %v3699
        %v3733 = vunpack.c.l.b16 %v3700
        %v3734 = vunpack.c.l.b16 %v3701
        %v3735 = vunpack.c.l.b16 %v3702
        %v3736 = vunpack.c.l.b16 %v3703
        %v3737 = vpack.c.b16 %v3722, %v3721
        %v3738 = vpack.c.b16 %v3724, %v3723
        %v3739 = vpack.c.b16 %v3726, %v3725
        %v3740 = vpack.c.b16 %v3728, %v3727
        %v3741 = vpack.c.b16 %v3730, %v3729
        %v3742 = vpack.c.b16 %v3732, %v3731
        %v3743 = vpack.c.b16 %v3734, %v3733
        %v3744 = vpack.c.b16 %v3736, %v3735
        %3753 = vmatprep.subr.bf16.mxu0 0
        %3754 = vmatpush1.bf16.msra.mxu0 %v3737
        %3755 = vmatprep.subr.bf16.mxu0 0
        %3756 = vmatpush1.bf16.msra.mxu0 %v3738
        %3757 = vmatprep.subr.bf16.mxu0 0
        %3758 = vmatpush1.bf16.msra.mxu0 %v3739
        %3759 = vmatprep.subr.bf16.mxu0 0
        %3760 = vmatpush1.bf16.msra.mxu0 %v3740
        %3761 = vmatprep.subr.bf16.mxu0 0
        %3762 = vmatpush1.bf16.msra.mxu0 %v3741
        %3763 = vmatprep.subr.bf16.mxu0 0
        %3764 = vmatpush1.bf16.msra.mxu0 %v3742
        %3765 = vmatprep.subr.bf16.mxu0 0
        %3766 = vmatpush1.bf16.msra.mxu0 %v3743
        %3767 = vmatprep.subr.bf16.mxu0 0
        %3768 = vmatpush1.bf16.msra.mxu0 %v3744
        %3769 = vmatprep.subr.bf16.mxu0 0
        %3770 = vmatpush1.bf16.msra.mxu0 0
        %3771 = vmatprep.subr.bf16.mxu0 0
        %3772 = vmatpush1.bf16.msra.mxu0 0
        %3773 = vmatprep.subr.bf16.mxu0 0
        %3774 = vmatpush1.bf16.msra.mxu0 0
        %3775 = vmatprep.subr.bf16.mxu0 0
        %3776 = vmatpush1.bf16.msra.mxu0 0
        %3777 = vmatprep.subr.bf16.mxu0 0
        %3778 = vmatpush1.bf16.msra.mxu0 0
        %3779 = vmatprep.subr.bf16.mxu0 0
        %3780 = vmatpush1.bf16.msra.mxu0 0
        %3781 = vmatprep.subr.bf16.mxu0 0
        %3782 = vmatpush1.bf16.msra.mxu0 0
        %3783 = vmatprep.subr.bf16.mxu0 0
        %3784 = vmatpush1.bf16.msra.mxu0 0
        %3785 = vmatprep.mubr.bf16.mxu0 0
        %3786 = vmatmul.mubr.bf16.gmra.mrb[0].mxu0 %v3687
        %v3787 = vpop.f32.mrb[0].mxu0
        %v3788 = vadd.f32 %v3704, %v3787
        %v3789 = vpop.f32.mrb[0].mxu0
        %v3790 = vpop.f32.mrb[0].mxu0
        %v3791 = vadd.f32 %v3704, %v3790
        %v3792 = vpop.f32.mrb[0].mxu0
        %3793 = vdwg.mxu0
        %v3794 = vsub.f32 0.0, %v3788
        %v3795 = vsub.f32 0.0, %v3791
        %v3796 = vmul.f32 %v3794, 1.442695
        %v3797 = vpow.pop %v3796
        %v3798 = vmul.f32 %v3795, 1.442695
        %v3799 = vpow.pop %v3798
        %v3800 = vadd.f32 %v3797, 1.0
        %v3801 = vadd.f32 %v3799, 1.0
        %v3802 = vrcp.pop %v3800
        %v3803 = vmul.f32 1.0, %v3802
        %v3804 = vrcp.pop %v3801
        %v3805 = vmul.f32 1.0, %v3804
        %v3806 = vsub.f32 1.0, %v3803
        %v3807 = vsub.f32 1.0, %v3805
        %3810 = vrot.lane.b32.xlu0 %v3806, 1
        %v3811 = vpop.permute.xlu0 %3810
        %3812 = vrot.lane.b32.xlu0 %v3807, 1
        %v3813 = vpop.permute.xlu0 %3812
        %vm3816 = vcmask 7168
        %v3817 = vsel %vm3816, %v3803, %v3811
        %v3818 = vsel %vm3816, %v3805, %v3813
        %vm3819 = vcmask 15360
        %3820 = vst.msk [vmem:[%s498] sm:$0xff] %vm3819, %v3817
        %3821 = vst.msk [vmem:[%s498 + $0x8] sm:$0xff] %vm3819, %v3818
        %s3822 = smul.u32 2, %s26
        %p3823 = scmp.lt.s32.totalorder %s3822, 3
        %s3824 = scalar_select %p3823, %s3822, 3
        %s3825 = smul.addr %s3824, 8
        %s3826 = scalar_lea.vmem %s11, %s3825
        // Predicated region
        $region89: #{tpu_custom_call.1} parent=63 // pred_check
          %p3827 = pneg %p285
        $region90: #{tpu_custom_call.1} parent=63 // pred_check_branch
          %3829 = sbr.rel (%p3827) target = $region92
        $region91: #{tpu_custom_call.1} parent=63 // pred_region
          %s3830 = smul.u32 2, %s26
        $region92: #{tpu_custom_call.1} parent=63 // pred_fallthru
          _
      $region64: #{tpu_custom_call.1} parent=5 // pred_fallthru
        _
      %p3831 = scmp.le.s32.totalorder 2, %s21
      // Predicated region
      $region93: #{tpu_custom_call.1} parent=5 // pred_check
        %p3832 = pneg %p3831
      $region94: #{tpu_custom_call.1} parent=5 // pred_check_branch
        %3834 = sbr.rel (%p3832) target = $region96
      $region95: #{tpu_custom_call.1} parent=5 // pred_region
        %s3835 = ssub.s32 %s21, 2
        // Predicated region
        $region97: #{tpu_custom_call.1} parent=95 // pred_check
          %p3836 = pneg %p291
        $region98: #{tpu_custom_call.1} parent=95 // pred_check_branch
          %3838 = sbr.rel (%p3836) target = $region100
        $region99: #{tpu_custom_call.1} parent=95 // pred_region
          %s3839 = smul.u32 2, %s27
          %p3840 = scmp.lt.s32.totalorder %s3839, 3
          %s3841 = scalar_select %p3840, %s3839, 3
          %s3842 = smul.addr %s3841, 8
          %s3843 = scalar_lea.vmem %s11, %s3842
        $region100: #{tpu_custom_call.1} parent=95 // pred_fallthru
          _
      $region96: #{tpu_custom_call.1} parent=5 // pred_fallthru
        _
    $region6: #{tpu_custom_call.1} parent=1 // loop_footer
      %s25 = sadd.s32 1, %s21
    $region7: #{tpu_custom_call.1} parent=1 // loop_footer_branch
      %20 = sbr.rel target = $region3
    $region8: #{tpu_custom_call.1} parent=1 // loop_exit
      _
    %3844 = vsyncpa [#allocation3], 1
    %s3845 = scalar_lea.sflag [#allocation3], 1
    %3846 = vsyncpa %s3845, 1
    %3847 = vsyncpa [#allocation5], 1
    %3848 = vsyncpa [#allocation8], 1
    %3849 = vsyncpa [#allocation11], 1

</llo_original>
